<compile_context>
chip_gen: v6e
topology: v6e:2x2x1
jax: 0.10.0
libtpu: 0.0.40
codegen_flags: <defaults>
</compile_context>

<pallas_src>
import jax
import jax.numpy as jnp
from jax.experimental import pallas as pl
from jax.experimental.pallas import tpu as pltpu  # noqa: F401  (TPU backend namespace)

# ---------------- small synthetic configuration ----------------
B = 2            # batch
T = 8            # max sequence length (modaverse_cfgs.max_length stand-in)
H = 32           # LLM hidden size
NH = 4           # attention heads
DH = H // NH
F = 64           # MLP intermediate size
V = 64           # vocab size (after added modality flag tokens)
H_IB = 16        # imagebind hidden size
TARGET_PADDING = -100   # self.target_padding == HF ignore_index
MEDIA_POS = 2           # [bos, <media>, MEDIA_EMBED, </media>, text...] from tokenize()
RMS_EPS = 1e-6          # HF LlamaConfig default rms_norm_eps


def _rmsnorm(v, w):
    var = jnp.mean(v * v, axis=-1, keepdims=True)
    return v * jax.lax.rsqrt(var + RMS_EPS) * w          # w: (1, H) broadcasts


# ---------------- fused kernel: proj splice + mini-LLM block + head + loss/acc ------
def _modaverse_kernel(emb_ref, media_ref, mask_ref, tgt_ref,
                      wproj_ref, bproj_ref,
                      ln1_ref, wq_ref, wk_ref, wv_ref, wo_ref,
                      ln2_ref, wg_ref, wu_ref, wd_ref, lnf_ref,
                      wlm_ref, out_ref):
    BT = B * T

    # ---- self.linear_proj (imagebind hidden -> LLM hidden) + media-embed splice ----
    media = (jnp.dot(media_ref[...], wproj_ref[...],
                     preferred_element_type=jnp.float32) + bproj_ref[...])   # (B, H)
    t_pos = jax.lax.broadcasted_iota(jnp.int32, (B, T, H), 1)
    x3 = jnp.where(t_pos == MEDIA_POS, media[:, None, :], emb_ref[...])      # (B, T, H)

    # shared iotas: reused by the causal mask, the shift (s==t+1) mask and accuracy.
    t_iota = jax.lax.broadcasted_iota(jnp.int32, (T, T), 0)   # query / prediction pos
    s_iota = jax.lax.broadcasted_iota(jnp.int32, (T, T), 1)   # key / label pos

    mask = mask_ref[...]                      # (B, T) float: 1.0 valid, 0.0 padding
    labels = tgt_ref[...]                     # (B, T) int32

    # ---- mini Llama-style decoder block (stand-in for self.LLM) ----
    # Flatten (B,T,H) -> (B*T,H): T == 8 == sublane tile so the reshape is
    # layout-preserving; all projections become single 2-D MXU matmuls.
    x2 = x3.reshape(BT, H)
    h1 = _rmsnorm(x2, ln1_ref[...])
    q = jnp.dot(h1, wq_ref[...], preferred_element_type=jnp.float32)
    k = jnp.dot(h1, wk_ref[...], preferred_element_type=jnp.float32)
    v = jnp.dot(h1, wv_ref[...], preferred_element_type=jnp.float32)
    # TODO(synk): rotary position embeddings of the real LLaMA are omitted in this
    # mini-LLM stand-in.
    q3 = q.reshape(B, T, H)
    k3 = k.reshape(B, T, H)
    v3 = v.reshape(B, T, H)

    causal = (s_iota <= t_iota)[None, :, :]                  # (1, T, T)
    key_ok = (mask > 0.5)[:, None, :]                        # (B, 1, T)
    allowed = jnp.logical_and(causal, key_ok)                # (B, T, T)
    inv_sqrt_dh = 1.0 / (DH ** 0.5)

    wo = wo_ref[...]
    attn2 = jnp.zeros((BT, H), jnp.float32)
    # TODO(synk): with DH=8 (sub-lane-tile heads) a fully head-batched dot_general
    # requires a lane<->sublane relayout; at real head_dim (128) batch heads into a
    # single contraction instead of this unrolled NH=4 loop.
    for n in range(NH):
        lo, hi = n * DH, (n + 1) * DH
        s = jnp.einsum('btd,bsd->bts', q3[:, :, lo:hi], k3[:, :, lo:hi],
                       preferred_element_type=jnp.float32) * inv_sqrt_dh
        s = jnp.where(allowed, s, -1e9)
        p = jnp.exp(s - jnp.max(s, axis=-1, keepdims=True))
        l = jnp.sum(p, axis=-1, keepdims=True)
        p = p * pl.reciprocal(l, approx=True)                # EUP slot, no VPU divide
        ctx = jnp.einsum('bts,bsd->btd', p, v3[:, :, lo:hi],
                         preferred_element_type=jnp.float32)  # (B, T, DH)
        # fold W_o per head -> no lane-shuffling concat of 8-wide head slices
        attn2 = attn2 + jnp.dot(ctx.reshape(BT, DH), wo[lo:hi, :],
                                preferred_element_type=jnp.float32)
    x2 = x2 + attn2

    # ---- SwiGLU MLP ----
    h2 = _rmsnorm(x2, ln2_ref[...])
    g = jnp.dot(h2, wg_ref[...], preferred_element_type=jnp.float32)
    u = jnp.dot(h2, wu_ref[...], preferred_element_type=jnp.float32)
    mlp = jnp.dot(g * jax.nn.sigmoid(g) * u, wd_ref[...],
                  preferred_element_type=jnp.float32)
    x2 = x2 + mlp
    hfin = _rmsnorm(x2, lnf_ref[...])

    # ---- LM head + HF shifted CE loss + ModaVerse accuracy (full extent, no slices) --
    # TODO(synk): at real H/V sizes cast MXU operands to bf16 on v6e/v7x, tile the
    # (H,V) head weight with a parallel grid (2 TCs on v7x) and re-derive tiling for
    # v7x's 64 MiB VMEM; kept f32 single-block at these toy sizes.
    logits = jnp.dot(hfin, wlm_ref[...], preferred_element_type=jnp.float32)  # (BT, V)
    logits3 = logits.reshape(B, T, V)

    v_iota = jax.lax.broadcasted_iota(jnp.int32, (B, T, V), 2)
    maxl = jnp.max(logits3, axis=-1, keepdims=True)                           # (B, T, 1)
    lse = maxl[..., 0] + jnp.log(jnp.sum(jnp.exp(logits3 - maxl), axis=-1))   # (B, T)

    # G[b, t, s] = logits[b, t, labels[b, s]]  (one-hot matmul instead of a gather)
    onehot = (v_iota == labels[:, :, None]).astype(jnp.float32)               # (B, T, V)
    gathered = jnp.einsum('btv,bsv->bts', logits3, onehot,
                          preferred_element_type=jnp.float32)                 # (B, T, T)

    lbl_valid = (labels != TARGET_PADDING)[:, None, :]     # (B, 1, T) over label pos s
    pair_next = (s_iota == t_iota + 1)[None, :, :]         # s == t + 1 (the "shift")

    # HF causal-LM loss: mean over labels s>=1, label != ignore_index of
    #   lse(logits[t]) - logits[t, labels[s]]  with t = s - 1.
    pm_loss = jnp.logical_and(pair_next, lbl_valid)
    pm_loss_f = pm_loss.astype(jnp.float32)
    loss_sum = jnp.sum((lse[:, :, None] - gathered) * pm_loss_f)
    loss_cnt = jnp.sum(pm_loss_f)

    # accuracy exactly as ModaVerse.forward:
    #   predicts = argmax(logits, -1)[:, 1:-1]; labels = targets[:, 2:]
    pred = jnp.min(jnp.where(logits3 >= maxl, v_iota, V), axis=-1)            # (B, T)
    pm_acc = jnp.logical_and(pm_loss, (t_iota >= 1)[None, :, :])
    match = jnp.logical_and(pred[:, :, None] == labels[:, None, :], pm_acc)
    acc_sum = jnp.sum(match.astype(jnp.float32))
    valid_sum = jnp.sum(pm_acc.astype(jnp.float32))

    # pack the four metric scalars into one lane-dense (1, 128) output store
    lane = jax.lax.broadcasted_iota(jnp.int32, (1, 128), 1)
    out_ref[...] = (jnp.where(lane == 0, loss_sum, 0.0)
                    + jnp.where(lane == 1, loss_cnt, 0.0)
                    + jnp.where(lane == 2, acc_sum, 0.0)
                    + jnp.where(lane == 3, valid_sum, 0.0))


# ---------------- ModaVerse.forward (loss, acc) ----------------
@jax.jit
def modaverse_forward(inputs_embeds, media_feats, attn_mask, targets,
                      params, w_proj, b_proj, w_lm):
    metrics = pl.pallas_call(
        _modaverse_kernel,
        out_shape=jax.ShapeDtypeStruct((1, 128), jnp.float32),
    )(inputs_embeds, media_feats, attn_mask, targets,
      w_proj, b_proj,
      params['ln1'], params['wq'], params['wk'], params['wv'], params['wo'],
      params['ln2'], params['wg'], params['wu'], params['wd'], params['lnf'],
      w_lm)
    loss = metrics[0, 0] / jnp.maximum(metrics[0, 1], 1.0)
    acc = metrics[0, 2] / (metrics[0, 3] + 1.0)   # matches PyTorch: valid.sum() + 1
    return loss, acc


if __name__ == "__main__":
    key = jax.random.PRNGKey(0)
    keys = jax.random.split(key, 12)

    def init(k, shape, scale=0.02):
        return (scale * jax.random.normal(k, shape)).astype(jnp.float32)

    # deterministic synthetic parameters (shapes implied by the module's __init__)
    embed_table = init(keys[0], (V, H))                 # LLM.resize_token_embeddings
    params = dict(
        ln1=jnp.ones((1, H), jnp.float32),
        ln2=jnp.ones((1, H), jnp.float32),
        lnf=jnp.ones((1, H), jnp.float32),
        wq=init(keys[1], (H, H)), wk=init(keys[2], (H, H)),
        wv=init(keys[3], (H, H)), wo=init(keys[4], (H, H)),
        wg=init(keys[5], (H, F)), wu=init(keys[6], (H, F)), wd=init(keys[7], (F, H)),
    )
    w_lm = init(keys[8], (H, V))                        # LM head
    w_proj = init(keys[9], (H_IB, H))                   # self.linear_proj weight
    b_proj = jnp.zeros((1, H), jnp.float32)             # self.linear_proj bias

    # synthetic ImageBind features (the frozen ImageBind encoder itself is external)
    media_feats = init(keys[10], (B, H_IB), 1.0)

    # token ids mirroring tokenize(): [bos, <media>, MEDIA_EMBED, </media>, text..., caption..., stop]
    BOS, MBOS, MEOS, PAD, STOP = 1, 60, 61, 2, 62
    tok = jnp.array(
        [[BOS, MBOS, 0, MEOS, 7, 11, 13, STOP],          # full-length sample
         [BOS, MBOS, 0, MEOS, 17, STOP, PAD, PAD]],      # shorter sample, pad-token padded
        jnp.int32)
    inputs_embeds = jnp.take(embed_table, tok, axis=0)   # host-side embed_tokens lookup

    attn_mask = jnp.array([[1, 1, 1, 1, 1, 1, 1, 1],
                           [1, 1, 1, 1, 1, 1, 0, 0]], jnp.float32)
    P = TARGET_PADDING
    targets = jnp.array([[P, P, P, P, P, 11, 13, STOP],
                         [P, P, P, P, 17, STOP, P, P]], jnp.int32)

    loss, acc = modaverse_forward(inputs_embeds, media_feats, attn_mask, targets,
                                  params, w_proj, b_proj, w_lm)
    jax.block_until_ready((loss, acc))
    print("KERNEL_OK")
</pallas_src>

<mosaic_0001>
module attributes {stable_mosaic.version = 11 : i64} {
  func.func @_modaverse_kernel(%arg0: memref<2x8x32xf32, #tpu.memory_space<vmem>>, %arg1: memref<2x16xf32, #tpu.memory_space<vmem>>, %arg2: memref<2x8xf32, #tpu.memory_space<vmem>>, %arg3: memref<2x8xi32, #tpu.memory_space<vmem>>, %arg4: memref<16x32xf32, #tpu.memory_space<vmem>>, %arg5: memref<1x32xf32, #tpu.memory_space<vmem>>, %arg6: memref<1x32xf32, #tpu.memory_space<vmem>>, %arg7: memref<32x32xf32, #tpu.memory_space<vmem>>, %arg8: memref<32x32xf32, #tpu.memory_space<vmem>>, %arg9: memref<32x32xf32, #tpu.memory_space<vmem>>, %arg10: memref<32x32xf32, #tpu.memory_space<vmem>>, %arg11: memref<1x32xf32, #tpu.memory_space<vmem>>, %arg12: memref<32x64xf32, #tpu.memory_space<vmem>>, %arg13: memref<32x64xf32, #tpu.memory_space<vmem>>, %arg14: memref<64x32xf32, #tpu.memory_space<vmem>>, %arg15: memref<1x32xf32, #tpu.memory_space<vmem>>, %arg16: memref<32x64xf32, #tpu.memory_space<vmem>>, %arg17: memref<1x128xf32, #tpu.memory_space<vmem>>) attributes {dimension_semantics = [], scalar_prefetch = 0 : i64, scratch_operands = 0 : i64, tpu.core_type = #tpu.core_type<tc>} {
    %c0 = arith.constant 0 : index
    %c0_0 = arith.constant 0 : index
    %0 = vector.load %arg1[%c0, %c0_0] : memref<2x16xf32, #tpu.memory_space<vmem>>, vector<2x16xf32>
    %c0_1 = arith.constant 0 : index
    %c0_2 = arith.constant 0 : index
    %1 = vector.load %arg4[%c0_1, %c0_2] : memref<16x32xf32, #tpu.memory_space<vmem>>, vector<16x32xf32>
    %cst = arith.constant dense<0.000000e+00> : vector<2x32xf32>
    %2 = tpu.matmul %0, %1, %cst {dimension_numbers = #tpu.dot_dimension_numbers<[1], [0], [0], [1], [0, 0, 1, 1], [], []>} : vector<2x16xf32>, vector<16x32xf32>, vector<2x32xf32> -> vector<2x32xf32>
    %c0_3 = arith.constant 0 : index
    %c0_4 = arith.constant 0 : index
    %3 = vector.load %arg5[%c0_3, %c0_4] : memref<1x32xf32, #tpu.memory_space<vmem>>, vector<1x32xf32>
    %4 = vector.broadcast %3 : vector<1x32xf32> to vector<2x32xf32>
    %5 = arith.addf %2, %4 : vector<2x32xf32>
    %6 = tpu.iota {dimensions = array<i32: 1>} : vector<2x8x32xi32>
    %c2_i32 = arith.constant 2 : i32
    %7 = vector.broadcast %c2_i32 : i32 to vector<2x8x32xi32>
    %8 = arith.cmpi eq, %6, %7 : vector<2x8x32xi32>
    %9 = vector.shape_cast %5 : vector<2x32xf32> to vector<2x1x32xf32>
    %c0_5 = arith.constant 0 : index
    %c0_6 = arith.constant 0 : index
    %c0_7 = arith.constant 0 : index
    %10 = vector.load %arg0[%c0_5, %c0_6, %c0_7] : memref<2x8x32xf32, #tpu.memory_space<vmem>>, vector<2x8x32xf32>
    %11 = vector.shape_cast %9 : vector<2x1x32xf32> to vector<2x1x32xf32>
    %12 = vector.broadcast %11 : vector<2x1x32xf32> to vector<2x8x32xf32>
    %13 = arith.select %8, %12, %10 : vector<2x8x32xi1>, vector<2x8x32xf32>
    %14 = tpu.iota {dimensions = array<i32: 0>} : vector<8x8xi32>
    %15 = tpu.iota {dimensions = array<i32: 1>} : vector<8x8xi32>
    %c0_8 = arith.constant 0 : index
    %c0_9 = arith.constant 0 : index
    %16 = vector.load %arg2[%c0_8, %c0_9] : memref<2x8xf32, #tpu.memory_space<vmem>>, vector<2x8xf32>
    %c0_10 = arith.constant 0 : index
    %c0_11 = arith.constant 0 : index
    %17 = vector.load %arg3[%c0_10, %c0_11] : memref<2x8xi32, #tpu.memory_space<vmem>>, vector<2x8xi32>
    %18 = vector.shape_cast %13 : vector<2x8x32xf32> to vector<16x32xf32>
    %c0_12 = arith.constant 0 : index
    %c0_13 = arith.constant 0 : index
    %19 = vector.load %arg6[%c0_12, %c0_13] : memref<1x32xf32, #tpu.memory_space<vmem>>, vector<1x32xf32>
    %20 = arith.mulf %18, %18 : vector<16x32xf32>
    %cst_14 = arith.constant dense<0.000000e+00> : vector<16xf32>
    %21 = vector.multi_reduction <add>, %20, %cst_14 [1] : vector<16x32xf32> to vector<16xf32>
    %22 = vector.shape_cast %21 : vector<16xf32> to vector<16x1xf32>
    %cst_15 = arith.constant 3.200000e+01 : f32
    %23 = vector.broadcast %cst_15 : f32 to vector<16x1xf32>
    %24 = arith.divf %22, %23 : vector<16x1xf32>
    %cst_16 = arith.constant 9.99999997E-7 : f32
    %25 = vector.broadcast %cst_16 : f32 to vector<16x1xf32>
    %26 = arith.addf %24, %25 : vector<16x1xf32>
    %27 = math.rsqrt %26 : vector<16x1xf32>
    %28 = vector.broadcast %27 : vector<16x1xf32> to vector<16x32xf32>
    %29 = arith.mulf %18, %28 : vector<16x32xf32>
    %30 = vector.broadcast %19 : vector<1x32xf32> to vector<16x32xf32>
    %31 = arith.mulf %29, %30 : vector<16x32xf32>
    %c0_17 = arith.constant 0 : index
    %c0_18 = arith.constant 0 : index
    %32 = vector.load %arg7[%c0_17, %c0_18] : memref<32x32xf32, #tpu.memory_space<vmem>>, vector<32x32xf32>
    %cst_19 = arith.constant dense<0.000000e+00> : vector<16x32xf32>
    %33 = tpu.matmul %31, %32, %cst_19 {dimension_numbers = #tpu.dot_dimension_numbers<[1], [0], [0], [1], [0, 0, 1, 1], [], []>} : vector<16x32xf32>, vector<32x32xf32>, vector<16x32xf32> -> vector<16x32xf32>
    %c0_20 = arith.constant 0 : index
    %c0_21 = arith.constant 0 : index
    %34 = vector.load %arg8[%c0_20, %c0_21] : memref<32x32xf32, #tpu.memory_space<vmem>>, vector<32x32xf32>
    %cst_22 = arith.constant dense<0.000000e+00> : vector<16x32xf32>
    %35 = tpu.matmul %31, %34, %cst_22 {dimension_numbers = #tpu.dot_dimension_numbers<[1], [0], [0], [1], [0, 0, 1, 1], [], []>} : vector<16x32xf32>, vector<32x32xf32>, vector<16x32xf32> -> vector<16x32xf32>
    %c0_23 = arith.constant 0 : index
    %c0_24 = arith.constant 0 : index
    %36 = vector.load %arg9[%c0_23, %c0_24] : memref<32x32xf32, #tpu.memory_space<vmem>>, vector<32x32xf32>
    %cst_25 = arith.constant dense<0.000000e+00> : vector<16x32xf32>
    %37 = tpu.matmul %31, %36, %cst_25 {dimension_numbers = #tpu.dot_dimension_numbers<[1], [0], [0], [1], [0, 0, 1, 1], [], []>} : vector<16x32xf32>, vector<32x32xf32>, vector<16x32xf32> -> vector<16x32xf32>
    %38 = vector.shape_cast %33 : vector<16x32xf32> to vector<2x8x32xf32>
    %39 = vector.shape_cast %35 : vector<16x32xf32> to vector<2x8x32xf32>
    %40 = vector.shape_cast %37 : vector<16x32xf32> to vector<2x8x32xf32>
    %41 = arith.cmpi sle, %15, %14 : vector<8x8xi32>
    %42 = vector.shape_cast %41 : vector<8x8xi1> to vector<1x8x8xi1>
    %cst_26 = arith.constant 5.000000e-01 : f32
    %43 = vector.broadcast %cst_26 : f32 to vector<2x8xf32>
    %44 = arith.cmpf ogt, %16, %43 : vector<2x8xf32>
    %45 = vector.shape_cast %44 : vector<2x8xi1> to vector<2x1x8xi1>
    %46 = vector.broadcast %42 : vector<1x8x8xi1> to vector<2x8x8xi1>
    %47 = vector.broadcast %45 : vector<2x1x8xi1> to vector<2x8x8xi1>
    %48 = arith.andi %46, %47 : vector<2x8x8xi1>
    %c0_27 = arith.constant 0 : index
    %c0_28 = arith.constant 0 : index
    %49 = vector.load %arg10[%c0_27, %c0_28] : memref<32x32xf32, #tpu.memory_space<vmem>>, vector<32x32xf32>
    %cst_29 = arith.constant 0.000000e+00 : f32
    %50 = vector.broadcast %cst_29 : f32 to vector<16x32xf32>
    %51 = vector.extract_strided_slice %38 {offsets = [0, 0, 0], sizes = [2, 8, 8], strides = [1, 1, 1]} : vector<2x8x32xf32> to vector<2x8x8xf32>
    %52 = vector.extract_strided_slice %39 {offsets = [0, 0, 0], sizes = [2, 8, 8], strides = [1, 1, 1]} : vector<2x8x32xf32> to vector<2x8x8xf32>
    "tpu.trace_start"() <{level = 10 : i32, message = "btd,bsd->bts"}> : () -> ()
    %cst_30 = arith.constant dense<0.000000e+00> : vector<2x8x8xf32>
    %53 = tpu.matmul %51, %52, %cst_30 {dimension_numbers = #tpu.dot_dimension_numbers<[2], [2], [1], [1], [0, 0, 0, 1, 1, 1], [0], [0]>} : vector<2x8x8xf32>, vector<2x8x8xf32>, vector<2x8x8xf32> -> vector<2x8x8xf32>
    "tpu.trace_stop"() : () -> ()
    %cst_31 = arith.constant 0.353553385 : f32
    %54 = vector.broadcast %cst_31 : f32 to vector<2x8x8xf32>
    %55 = arith.mulf %53, %54 : vector<2x8x8xf32>
    %cst_32 = arith.constant -1.000000e+09 : f32
    %56 = vector.broadcast %cst_32 : f32 to vector<2x8x8xf32>
    %57 = arith.select %48, %55, %56 : vector<2x8x8xi1>, vector<2x8x8xf32>
    %cst_33 = arith.constant dense<0xFF800000> : vector<2x8xf32>
    %58 = vector.multi_reduction <maximumf>, %57, %cst_33 [2] : vector<2x8x8xf32> to vector<2x8xf32>
    %59 = vector.shape_cast %58 : vector<2x8xf32> to vector<2x8x1xf32>
    %60 = vector.broadcast %59 : vector<2x8x1xf32> to vector<2x8x8xf32>
    %61 = arith.subf %57, %60 : vector<2x8x8xf32>
    %62 = math.exp %61 : vector<2x8x8xf32>
    %cst_34 = arith.constant dense<0.000000e+00> : vector<2x8xf32>
    %63 = vector.multi_reduction <add>, %62, %cst_34 [2] : vector<2x8x8xf32> to vector<2x8xf32>
    %64 = vector.shape_cast %63 : vector<2x8xf32> to vector<2x8x1xf32>
    %65 = tpu.reciprocal %64 {approx = true} : vector<2x8x1xf32> -> vector<2x8x1xf32>
    %66 = vector.broadcast %65 : vector<2x8x1xf32> to vector<2x8x8xf32>
    %67 = arith.mulf %62, %66 : vector<2x8x8xf32>
    %68 = vector.extract_strided_slice %40 {offsets = [0, 0, 0], sizes = [2, 8, 8], strides = [1, 1, 1]} : vector<2x8x32xf32> to vector<2x8x8xf32>
    "tpu.trace_start"() <{level = 10 : i32, message = "bts,bsd->btd"}> : () -> ()
    %cst_35 = arith.constant dense<0.000000e+00> : vector<2x8x8xf32>
    %69 = tpu.matmul %67, %68, %cst_35 {dimension_numbers = #tpu.dot_dimension_numbers<[2], [1], [1], [2], [0, 0, 0, 1, 1, 2], [0], [0]>} : vector<2x8x8xf32>, vector<2x8x8xf32>, vector<2x8x8xf32> -> vector<2x8x8xf32>
    "tpu.trace_stop"() : () -> ()
    %70 = vector.shape_cast %69 : vector<2x8x8xf32> to vector<16x8xf32>
    %71 = vector.extract_strided_slice %49 {offsets = [0, 0], sizes = [8, 32], strides = [1, 1]} : vector<32x32xf32> to vector<8x32xf32>
    %cst_36 = arith.constant dense<0.000000e+00> : vector<16x32xf32>
    %72 = tpu.matmul %70, %71, %cst_36 {dimension_numbers = #tpu.dot_dimension_numbers<[1], [0], [0], [1], [0, 0, 1, 1], [], []>} : vector<16x8xf32>, vector<8x32xf32>, vector<16x32xf32> -> vector<16x32xf32>
    %73 = arith.addf %50, %72 : vector<16x32xf32>
    %74 = vector.extract_strided_slice %38 {offsets = [0, 0, 8], sizes = [2, 8, 8], strides = [1, 1, 1]} : vector<2x8x32xf32> to vector<2x8x8xf32>
    %75 = vector.extract_strided_slice %39 {offsets = [0, 0, 8], sizes = [2, 8, 8], strides = [1, 1, 1]} : vector<2x8x32xf32> to vector<2x8x8xf32>
    "tpu.trace_start"() <{level = 10 : i32, message = "btd,bsd->bts"}> : () -> ()
    %cst_37 = arith.constant dense<0.000000e+00> : vector<2x8x8xf32>
    %76 = tpu.matmul %74, %75, %cst_37 {dimension_numbers = #tpu.dot_dimension_numbers<[2], [2], [1], [1], [0, 0, 0, 1, 1, 1], [0], [0]>} : vector<2x8x8xf32>, vector<2x8x8xf32>, vector<2x8x8xf32> -> vector<2x8x8xf32>
    "tpu.trace_stop"() : () -> ()
    %cst_38 = arith.constant 0.353553385 : f32
    %77 = vector.broadcast %cst_38 : f32 to vector<2x8x8xf32>
    %78 = arith.mulf %76, %77 : vector<2x8x8xf32>
    %cst_39 = arith.constant -1.000000e+09 : f32
    %79 = vector.broadcast %cst_39 : f32 to vector<2x8x8xf32>
    %80 = arith.select %48, %78, %79 : vector<2x8x8xi1>, vector<2x8x8xf32>
    %cst_40 = arith.constant dense<0xFF800000> : vector<2x8xf32>
    %81 = vector.multi_reduction <maximumf>, %80, %cst_40 [2] : vector<2x8x8xf32> to vector<2x8xf32>
    %82 = vector.shape_cast %81 : vector<2x8xf32> to vector<2x8x1xf32>
    %83 = vector.broadcast %82 : vector<2x8x1xf32> to vector<2x8x8xf32>
    %84 = arith.subf %80, %83 : vector<2x8x8xf32>
    %85 = math.exp %84 : vector<2x8x8xf32>
    %cst_41 = arith.constant dense<0.000000e+00> : vector<2x8xf32>
    %86 = vector.multi_reduction <add>, %85, %cst_41 [2] : vector<2x8x8xf32> to vector<2x8xf32>
    %87 = vector.shape_cast %86 : vector<2x8xf32> to vector<2x8x1xf32>
    %88 = tpu.reciprocal %87 {approx = true} : vector<2x8x1xf32> -> vector<2x8x1xf32>
    %89 = vector.broadcast %88 : vector<2x8x1xf32> to vector<2x8x8xf32>
    %90 = arith.mulf %85, %89 : vector<2x8x8xf32>
    %91 = vector.extract_strided_slice %40 {offsets = [0, 0, 8], sizes = [2, 8, 8], strides = [1, 1, 1]} : vector<2x8x32xf32> to vector<2x8x8xf32>
    "tpu.trace_start"() <{level = 10 : i32, message = "bts,bsd->btd"}> : () -> ()
    %cst_42 = arith.constant dense<0.000000e+00> : vector<2x8x8xf32>
    %92 = tpu.matmul %90, %91, %cst_42 {dimension_numbers = #tpu.dot_dimension_numbers<[2], [1], [1], [2], [0, 0, 0, 1, 1, 2], [0], [0]>} : vector<2x8x8xf32>, vector<2x8x8xf32>, vector<2x8x8xf32> -> vector<2x8x8xf32>
    "tpu.trace_stop"() : () -> ()
    %93 = vector.shape_cast %92 : vector<2x8x8xf32> to vector<16x8xf32>
    %94 = vector.extract_strided_slice %49 {offsets = [8, 0], sizes = [8, 32], strides = [1, 1]} : vector<32x32xf32> to vector<8x32xf32>
    %cst_43 = arith.constant dense<0.000000e+00> : vector<16x32xf32>
    %95 = tpu.matmul %93, %94, %cst_43 {dimension_numbers = #tpu.dot_dimension_numbers<[1], [0], [0], [1], [0, 0, 1, 1], [], []>} : vector<16x8xf32>, vector<8x32xf32>, vector<16x32xf32> -> vector<16x32xf32>
    %96 = arith.addf %73, %95 : vector<16x32xf32>
    %97 = vector.extract_strided_slice %38 {offsets = [0, 0, 16], sizes = [2, 8, 8], strides = [1, 1, 1]} : vector<2x8x32xf32> to vector<2x8x8xf32>
    %98 = vector.extract_strided_slice %39 {offsets = [0, 0, 16], sizes = [2, 8, 8], strides = [1, 1, 1]} : vector<2x8x32xf32> to vector<2x8x8xf32>
    "tpu.trace_start"() <{level = 10 : i32, message = "btd,bsd->bts"}> : () -> ()
    %cst_44 = arith.constant dense<0.000000e+00> : vector<2x8x8xf32>
    %99 = tpu.matmul %97, %98, %cst_44 {dimension_numbers = #tpu.dot_dimension_numbers<[2], [2], [1], [1], [0, 0, 0, 1, 1, 1], [0], [0]>} : vector<2x8x8xf32>, vector<2x8x8xf32>, vector<2x8x8xf32> -> vector<2x8x8xf32>
    "tpu.trace_stop"() : () -> ()
    %cst_45 = arith.constant 0.353553385 : f32
    %100 = vector.broadcast %cst_45 : f32 to vector<2x8x8xf32>
    %101 = arith.mulf %99, %100 : vector<2x8x8xf32>
    %cst_46 = arith.constant -1.000000e+09 : f32
    %102 = vector.broadcast %cst_46 : f32 to vector<2x8x8xf32>
    %103 = arith.select %48, %101, %102 : vector<2x8x8xi1>, vector<2x8x8xf32>
    %cst_47 = arith.constant dense<0xFF800000> : vector<2x8xf32>
    %104 = vector.multi_reduction <maximumf>, %103, %cst_47 [2] : vector<2x8x8xf32> to vector<2x8xf32>
    %105 = vector.shape_cast %104 : vector<2x8xf32> to vector<2x8x1xf32>
    %106 = vector.broadcast %105 : vector<2x8x1xf32> to vector<2x8x8xf32>
    %107 = arith.subf %103, %106 : vector<2x8x8xf32>
    %108 = math.exp %107 : vector<2x8x8xf32>
    %cst_48 = arith.constant dense<0.000000e+00> : vector<2x8xf32>
    %109 = vector.multi_reduction <add>, %108, %cst_48 [2] : vector<2x8x8xf32> to vector<2x8xf32>
    %110 = vector.shape_cast %109 : vector<2x8xf32> to vector<2x8x1xf32>
    %111 = tpu.reciprocal %110 {approx = true} : vector<2x8x1xf32> -> vector<2x8x1xf32>
    %112 = vector.broadcast %111 : vector<2x8x1xf32> to vector<2x8x8xf32>
    %113 = arith.mulf %108, %112 : vector<2x8x8xf32>
    %114 = vector.extract_strided_slice %40 {offsets = [0, 0, 16], sizes = [2, 8, 8], strides = [1, 1, 1]} : vector<2x8x32xf32> to vector<2x8x8xf32>
    "tpu.trace_start"() <{level = 10 : i32, message = "bts,bsd->btd"}> : () -> ()
    %cst_49 = arith.constant dense<0.000000e+00> : vector<2x8x8xf32>
    %115 = tpu.matmul %113, %114, %cst_49 {dimension_numbers = #tpu.dot_dimension_numbers<[2], [1], [1], [2], [0, 0, 0, 1, 1, 2], [0], [0]>} : vector<2x8x8xf32>, vector<2x8x8xf32>, vector<2x8x8xf32> -> vector<2x8x8xf32>
    "tpu.trace_stop"() : () -> ()
    %116 = vector.shape_cast %115 : vector<2x8x8xf32> to vector<16x8xf32>
    %117 = vector.extract_strided_slice %49 {offsets = [16, 0], sizes = [8, 32], strides = [1, 1]} : vector<32x32xf32> to vector<8x32xf32>
    %cst_50 = arith.constant dense<0.000000e+00> : vector<16x32xf32>
    %118 = tpu.matmul %116, %117, %cst_50 {dimension_numbers = #tpu.dot_dimension_numbers<[1], [0], [0], [1], [0, 0, 1, 1], [], []>} : vector<16x8xf32>, vector<8x32xf32>, vector<16x32xf32> -> vector<16x32xf32>
    %119 = arith.addf %96, %118 : vector<16x32xf32>
    %120 = vector.extract_strided_slice %38 {offsets = [0, 0, 24], sizes = [2, 8, 8], strides = [1, 1, 1]} : vector<2x8x32xf32> to vector<2x8x8xf32>
    %121 = vector.extract_strided_slice %39 {offsets = [0, 0, 24], sizes = [2, 8, 8], strides = [1, 1, 1]} : vector<2x8x32xf32> to vector<2x8x8xf32>
    "tpu.trace_start"() <{level = 10 : i32, message = "btd,bsd->bts"}> : () -> ()
    %cst_51 = arith.constant dense<0.000000e+00> : vector<2x8x8xf32>
    %122 = tpu.matmul %120, %121, %cst_51 {dimension_numbers = #tpu.dot_dimension_numbers<[2], [2], [1], [1], [0, 0, 0, 1, 1, 1], [0], [0]>} : vector<2x8x8xf32>, vector<2x8x8xf32>, vector<2x8x8xf32> -> vector<2x8x8xf32>
    "tpu.trace_stop"() : () -> ()
    %cst_52 = arith.constant 0.353553385 : f32
    %123 = vector.broadcast %cst_52 : f32 to vector<2x8x8xf32>
    %124 = arith.mulf %122, %123 : vector<2x8x8xf32>
    %cst_53 = arith.constant -1.000000e+09 : f32
    %125 = vector.broadcast %cst_53 : f32 to vector<2x8x8xf32>
    %126 = arith.select %48, %124, %125 : vector<2x8x8xi1>, vector<2x8x8xf32>
    %cst_54 = arith.constant dense<0xFF800000> : vector<2x8xf32>
    %127 = vector.multi_reduction <maximumf>, %126, %cst_54 [2] : vector<2x8x8xf32> to vector<2x8xf32>
    %128 = vector.shape_cast %127 : vector<2x8xf32> to vector<2x8x1xf32>
    %129 = vector.broadcast %128 : vector<2x8x1xf32> to vector<2x8x8xf32>
    %130 = arith.subf %126, %129 : vector<2x8x8xf32>
    %131 = math.exp %130 : vector<2x8x8xf32>
    %cst_55 = arith.constant dense<0.000000e+00> : vector<2x8xf32>
    %132 = vector.multi_reduction <add>, %131, %cst_55 [2] : vector<2x8x8xf32> to vector<2x8xf32>
    %133 = vector.shape_cast %132 : vector<2x8xf32> to vector<2x8x1xf32>
    %134 = tpu.reciprocal %133 {approx = true} : vector<2x8x1xf32> -> vector<2x8x1xf32>
    %135 = vector.broadcast %134 : vector<2x8x1xf32> to vector<2x8x8xf32>
    %136 = arith.mulf %131, %135 : vector<2x8x8xf32>
    %137 = vector.extract_strided_slice %40 {offsets = [0, 0, 24], sizes = [2, 8, 8], strides = [1, 1, 1]} : vector<2x8x32xf32> to vector<2x8x8xf32>
    "tpu.trace_start"() <{level = 10 : i32, message = "bts,bsd->btd"}> : () -> ()
    %cst_56 = arith.constant dense<0.000000e+00> : vector<2x8x8xf32>
    %138 = tpu.matmul %136, %137, %cst_56 {dimension_numbers = #tpu.dot_dimension_numbers<[2], [1], [1], [2], [0, 0, 0, 1, 1, 2], [0], [0]>} : vector<2x8x8xf32>, vector<2x8x8xf32>, vector<2x8x8xf32> -> vector<2x8x8xf32>
    "tpu.trace_stop"() : () -> ()
    %139 = vector.shape_cast %138 : vector<2x8x8xf32> to vector<16x8xf32>
    %140 = vector.extract_strided_slice %49 {offsets = [24, 0], sizes = [8, 32], strides = [1, 1]} : vector<32x32xf32> to vector<8x32xf32>
    %cst_57 = arith.constant dense<0.000000e+00> : vector<16x32xf32>
    %141 = tpu.matmul %139, %140, %cst_57 {dimension_numbers = #tpu.dot_dimension_numbers<[1], [0], [0], [1], [0, 0, 1, 1], [], []>} : vector<16x8xf32>, vector<8x32xf32>, vector<16x32xf32> -> vector<16x32xf32>
    %142 = arith.addf %119, %141 : vector<16x32xf32>
    %143 = arith.addf %18, %142 : vector<16x32xf32>
    %c0_58 = arith.constant 0 : index
    %c0_59 = arith.constant 0 : index
    %144 = vector.load %arg11[%c0_58, %c0_59] : memref<1x32xf32, #tpu.memory_space<vmem>>, vector<1x32xf32>
    %145 = arith.mulf %143, %143 : vector<16x32xf32>
    %cst_60 = arith.constant dense<0.000000e+00> : vector<16xf32>
    %146 = vector.multi_reduction <add>, %145, %cst_60 [1] : vector<16x32xf32> to vector<16xf32>
    %147 = vector.shape_cast %146 : vector<16xf32> to vector<16x1xf32>
    %cst_61 = arith.constant 3.200000e+01 : f32
    %148 = vector.broadcast %cst_61 : f32 to vector<16x1xf32>
    %149 = arith.divf %147, %148 : vector<16x1xf32>
    %cst_62 = arith.constant 9.99999997E-7 : f32
    %150 = vector.broadcast %cst_62 : f32 to vector<16x1xf32>
    %151 = arith.addf %149, %150 : vector<16x1xf32>
    %152 = math.rsqrt %151 : vector<16x1xf32>
    %153 = vector.broadcast %152 : vector<16x1xf32> to vector<16x32xf32>
    %154 = arith.mulf %143, %153 : vector<16x32xf32>
    %155 = vector.broadcast %144 : vector<1x32xf32> to vector<16x32xf32>
    %156 = arith.mulf %154, %155 : vector<16x32xf32>
    %c0_63 = arith.constant 0 : index
    %c0_64 = arith.constant 0 : index
    %157 = vector.load %arg12[%c0_63, %c0_64] : memref<32x64xf32, #tpu.memory_space<vmem>>, vector<32x64xf32>
    %cst_65 = arith.constant dense<0.000000e+00> : vector<16x64xf32>
    %158 = tpu.matmul %156, %157, %cst_65 {dimension_numbers = #tpu.dot_dimension_numbers<[1], [0], [0], [1], [0, 0, 1, 1], [], []>} : vector<16x32xf32>, vector<32x64xf32>, vector<16x64xf32> -> vector<16x64xf32>
    %c0_66 = arith.constant 0 : index
    %c0_67 = arith.constant 0 : index
    %159 = vector.load %arg13[%c0_66, %c0_67] : memref<32x64xf32, #tpu.memory_space<vmem>>, vector<32x64xf32>
    %cst_68 = arith.constant dense<0.000000e+00> : vector<16x64xf32>
    %160 = tpu.matmul %156, %159, %cst_68 {dimension_numbers = #tpu.dot_dimension_numbers<[1], [0], [0], [1], [0, 0, 1, 1], [], []>} : vector<16x32xf32>, vector<32x64xf32>, vector<16x64xf32> -> vector<16x64xf32>
    %161 = arith.negf %158 : vector<16x64xf32>
    %162 = math.exp %161 : vector<16x64xf32>
    %cst_69 = arith.constant 1.000000e+00 : f32
    %163 = vector.broadcast %cst_69 : f32 to vector<16x64xf32>
    %164 = arith.addf %163, %162 : vector<16x64xf32>
    %165 = arith.divf %163, %164 : vector<16x64xf32>
    %166 = arith.mulf %158, %165 : vector<16x64xf32>
    %167 = arith.mulf %166, %160 : vector<16x64xf32>
    %c0_70 = arith.constant 0 : index
    %c0_71 = arith.constant 0 : index
    %168 = vector.load %arg14[%c0_70, %c0_71] : memref<64x32xf32, #tpu.memory_space<vmem>>, vector<64x32xf32>
    %cst_72 = arith.constant dense<0.000000e+00> : vector<16x32xf32>
    %169 = tpu.matmul %167, %168, %cst_72 {dimension_numbers = #tpu.dot_dimension_numbers<[1], [0], [0], [1], [0, 0, 1, 1], [], []>} : vector<16x64xf32>, vector<64x32xf32>, vector<16x32xf32> -> vector<16x32xf32>
    %170 = arith.addf %143, %169 : vector<16x32xf32>
    %c0_73 = arith.constant 0 : index
    %c0_74 = arith.constant 0 : index
    %171 = vector.load %arg15[%c0_73, %c0_74] : memref<1x32xf32, #tpu.memory_space<vmem>>, vector<1x32xf32>
    %172 = arith.mulf %170, %170 : vector<16x32xf32>
    %cst_75 = arith.constant dense<0.000000e+00> : vector<16xf32>
    %173 = vector.multi_reduction <add>, %172, %cst_75 [1] : vector<16x32xf32> to vector<16xf32>
    %174 = vector.shape_cast %173 : vector<16xf32> to vector<16x1xf32>
    %cst_76 = arith.constant 3.200000e+01 : f32
    %175 = vector.broadcast %cst_76 : f32 to vector<16x1xf32>
    %176 = arith.divf %174, %175 : vector<16x1xf32>
    %cst_77 = arith.constant 9.99999997E-7 : f32
    %177 = vector.broadcast %cst_77 : f32 to vector<16x1xf32>
    %178 = arith.addf %176, %177 : vector<16x1xf32>
    %179 = math.rsqrt %178 : vector<16x1xf32>
    %180 = vector.broadcast %179 : vector<16x1xf32> to vector<16x32xf32>
    %181 = arith.mulf %170, %180 : vector<16x32xf32>
    %182 = vector.broadcast %171 : vector<1x32xf32> to vector<16x32xf32>
    %183 = arith.mulf %181, %182 : vector<16x32xf32>
    %c0_78 = arith.constant 0 : index
    %c0_79 = arith.constant 0 : index
    %184 = vector.load %arg16[%c0_78, %c0_79] : memref<32x64xf32, #tpu.memory_space<vmem>>, vector<32x64xf32>
    %cst_80 = arith.constant dense<0.000000e+00> : vector<16x64xf32>
    %185 = tpu.matmul %183, %184, %cst_80 {dimension_numbers = #tpu.dot_dimension_numbers<[1], [0], [0], [1], [0, 0, 1, 1], [], []>} : vector<16x32xf32>, vector<32x64xf32>, vector<16x64xf32> -> vector<16x64xf32>
    %186 = vector.shape_cast %185 : vector<16x64xf32> to vector<2x8x64xf32>
    %187 = tpu.iota {dimensions = array<i32: 2>} : vector<2x8x64xi32>
    %cst_81 = arith.constant dense<0xFF800000> : vector<2x8xf32>
    %188 = vector.multi_reduction <maximumf>, %186, %cst_81 [2] : vector<2x8x64xf32> to vector<2x8xf32>
    %189 = vector.shape_cast %188 : vector<2x8xf32> to vector<2x8x1xf32>
    %190 = vector.shape_cast %189 : vector<2x8x1xf32> to vector<2x8xf32>
    %191 = vector.broadcast %189 : vector<2x8x1xf32> to vector<2x8x64xf32>
    %192 = arith.subf %186, %191 : vector<2x8x64xf32>
    %193 = math.exp %192 : vector<2x8x64xf32>
    %cst_82 = arith.constant dense<0.000000e+00> : vector<2x8xf32>
    %194 = vector.multi_reduction <add>, %193, %cst_82 [2] : vector<2x8x64xf32> to vector<2x8xf32>
    %195 = math.log %194 : vector<2x8xf32>
    %196 = arith.addf %190, %195 : vector<2x8xf32>
    %197 = vector.shape_cast %17 : vector<2x8xi32> to vector<2x8x1xi32>
    %198 = vector.broadcast %197 : vector<2x8x1xi32> to vector<2x8x64xi32>
    %199 = arith.cmpi eq, %187, %198 : vector<2x8x64xi32>
    %200 = arith.extui %199 : vector<2x8x64xi1> to vector<2x8x64xi32>
    %201 = arith.sitofp %200 : vector<2x8x64xi32> to vector<2x8x64xf32>
    "tpu.trace_start"() <{level = 10 : i32, message = "btv,bsv->bts"}> : () -> ()
    %cst_83 = arith.constant dense<0.000000e+00> : vector<2x8x8xf32>
    %202 = tpu.matmul %186, %201, %cst_83 {dimension_numbers = #tpu.dot_dimension_numbers<[2], [2], [1], [1], [0, 0, 0, 1, 1, 1], [0], [0]>} : vector<2x8x64xf32>, vector<2x8x64xf32>, vector<2x8x8xf32> -> vector<2x8x8xf32>
    %c-100_i32 = arith.constant -100 : i32
    "tpu.trace_stop"() : () -> ()
    %203 = vector.broadcast %c-100_i32 : i32 to vector<2x8xi32>
    %204 = arith.cmpi ne, %17, %203 : vector<2x8xi32>
    %205 = vector.shape_cast %204 : vector<2x8xi1> to vector<2x1x8xi1>
    %c1_i32 = arith.constant 1 : i32
    %206 = vector.broadcast %c1_i32 : i32 to vector<8x8xi32>
    %207 = arith.addi %14, %206 : vector<8x8xi32>
    %208 = arith.cmpi eq, %15, %207 : vector<8x8xi32>
    %209 = vector.shape_cast %208 : vector<8x8xi1> to vector<1x8x8xi1>
    %210 = vector.broadcast %209 : vector<1x8x8xi1> to vector<2x8x8xi1>
    %211 = vector.broadcast %205 : vector<2x1x8xi1> to vector<2x8x8xi1>
    %212 = arith.andi %210, %211 : vector<2x8x8xi1>
    %213 = arith.extui %212 : vector<2x8x8xi1> to vector<2x8x8xi32>
    %214 = arith.sitofp %213 : vector<2x8x8xi32> to vector<2x8x8xf32>
    %215 = vector.shape_cast %196 : vector<2x8xf32> to vector<2x8x1xf32>
    %216 = vector.broadcast %215 : vector<2x8x1xf32> to vector<2x8x8xf32>
    %217 = arith.subf %216, %202 : vector<2x8x8xf32>
    %218 = arith.mulf %217, %214 : vector<2x8x8xf32>
    %219 = vector.shape_cast %218 : vector<2x8x8xf32> to vector<1x2x8x8xf32>
    %cst_84 = arith.constant dense<0.000000e+00> : vector<1xf32>
    %220 = vector.multi_reduction <add>, %219, %cst_84 [1, 2, 3] : vector<1x2x8x8xf32> to vector<1xf32>
    %221 = vector.shape_cast %220 : vector<1xf32> to vector<1x1x1x1xf32>
    %222 = vector.extract %221[0, 0, 0, 0] : f32 from vector<1x1x1x1xf32>
    %223 = vector.shape_cast %214 : vector<2x8x8xf32> to vector<1x2x8x8xf32>
    %cst_85 = arith.constant dense<0.000000e+00> : vector<1xf32>
    %224 = vector.multi_reduction <add>, %223, %cst_85 [1, 2, 3] : vector<1x2x8x8xf32> to vector<1xf32>
    %225 = vector.shape_cast %224 : vector<1xf32> to vector<1x1x1x1xf32>
    %226 = vector.extract %225[0, 0, 0, 0] : f32 from vector<1x1x1x1xf32>
    %227 = vector.broadcast %189 : vector<2x8x1xf32> to vector<2x8x64xf32>
    %228 = arith.cmpf oge, %186, %227 : vector<2x8x64xf32>
    %c64_i32 = arith.constant 64 : i32
    %229 = vector.broadcast %c64_i32 : i32 to vector<2x8x64xi32>
    %230 = arith.select %228, %187, %229 : vector<2x8x64xi1>, vector<2x8x64xi32>
    %cst_86 = arith.constant dense<2147483647> : vector<2x8xi32>
    %231 = vector.multi_reduction <minsi>, %230, %cst_86 [2] : vector<2x8x64xi32> to vector<2x8xi32>
    %c1_i32_87 = arith.constant 1 : i32
    %232 = vector.broadcast %c1_i32_87 : i32 to vector<8x8xi32>
    %233 = arith.cmpi sge, %14, %232 : vector<8x8xi32>
    %234 = vector.shape_cast %233 : vector<8x8xi1> to vector<1x8x8xi1>
    %235 = vector.broadcast %234 : vector<1x8x8xi1> to vector<2x8x8xi1>
    %236 = arith.andi %212, %235 : vector<2x8x8xi1>
    %237 = vector.shape_cast %231 : vector<2x8xi32> to vector<2x8x1xi32>
    %238 = vector.shape_cast %17 : vector<2x8xi32> to vector<2x1x8xi32>
    %239 = vector.broadcast %237 : vector<2x8x1xi32> to vector<2x8x8xi32>
    %240 = vector.broadcast %238 : vector<2x1x8xi32> to vector<2x8x8xi32>
    %241 = arith.cmpi eq, %239, %240 : vector<2x8x8xi32>
    %242 = arith.andi %241, %236 : vector<2x8x8xi1>
    %243 = arith.extui %242 : vector<2x8x8xi1> to vector<2x8x8xi32>
    %244 = arith.sitofp %243 : vector<2x8x8xi32> to vector<2x8x8xf32>
    %245 = vector.shape_cast %244 : vector<2x8x8xf32> to vector<1x2x8x8xf32>
    %cst_88 = arith.constant dense<0.000000e+00> : vector<1xf32>
    %246 = vector.multi_reduction <add>, %245, %cst_88 [1, 2, 3] : vector<1x2x8x8xf32> to vector<1xf32>
    %247 = vector.shape_cast %246 : vector<1xf32> to vector<1x1x1x1xf32>
    %248 = vector.extract %247[0, 0, 0, 0] : f32 from vector<1x1x1x1xf32>
    %249 = arith.extui %236 : vector<2x8x8xi1> to vector<2x8x8xi32>
    %250 = arith.sitofp %249 : vector<2x8x8xi32> to vector<2x8x8xf32>
    %251 = vector.shape_cast %250 : vector<2x8x8xf32> to vector<1x2x8x8xf32>
    %cst_89 = arith.constant dense<0.000000e+00> : vector<1xf32>
    %252 = vector.multi_reduction <add>, %251, %cst_89 [1, 2, 3] : vector<1x2x8x8xf32> to vector<1xf32>
    %253 = vector.shape_cast %252 : vector<1xf32> to vector<1x1x1x1xf32>
    %254 = vector.extract %253[0, 0, 0, 0] : f32 from vector<1x1x1x1xf32>
    %255 = tpu.iota {dimensions = array<i32: 1>} : vector<1x128xi32>
    %c0_i32 = arith.constant 0 : i32
    %256 = vector.broadcast %c0_i32 : i32 to vector<1x128xi32>
    %257 = arith.cmpi eq, %255, %256 : vector<1x128xi32>
    %cst_90 = arith.constant 0.000000e+00 : f32
    %258 = vector.broadcast %222 : f32 to vector<1x128xf32>
    %259 = vector.broadcast %cst_90 : f32 to vector<1x128xf32>
    %260 = arith.select %257, %258, %259 : vector<1x128xi1>, vector<1x128xf32>
    %c1_i32_91 = arith.constant 1 : i32
    %261 = vector.broadcast %c1_i32_91 : i32 to vector<1x128xi32>
    %262 = arith.cmpi eq, %255, %261 : vector<1x128xi32>
    %cst_92 = arith.constant 0.000000e+00 : f32
    %263 = vector.broadcast %226 : f32 to vector<1x128xf32>
    %264 = vector.broadcast %cst_92 : f32 to vector<1x128xf32>
    %265 = arith.select %262, %263, %264 : vector<1x128xi1>, vector<1x128xf32>
    %266 = arith.addf %260, %265 : vector<1x128xf32>
    %c2_i32_93 = arith.constant 2 : i32
    %267 = vector.broadcast %c2_i32_93 : i32 to vector<1x128xi32>
    %268 = arith.cmpi eq, %255, %267 : vector<1x128xi32>
    %cst_94 = arith.constant 0.000000e+00 : f32
    %269 = vector.broadcast %248 : f32 to vector<1x128xf32>
    %270 = vector.broadcast %cst_94 : f32 to vector<1x128xf32>
    %271 = arith.select %268, %269, %270 : vector<1x128xi1>, vector<1x128xf32>
    %272 = arith.addf %266, %271 : vector<1x128xf32>
    %c3_i32 = arith.constant 3 : i32
    %273 = vector.broadcast %c3_i32 : i32 to vector<1x128xi32>
    %274 = arith.cmpi eq, %255, %273 : vector<1x128xi32>
    %cst_95 = arith.constant 0.000000e+00 : f32
    %275 = vector.broadcast %254 : f32 to vector<1x128xf32>
    %276 = vector.broadcast %cst_95 : f32 to vector<1x128xf32>
    %277 = arith.select %274, %275, %276 : vector<1x128xi1>, vector<1x128xf32>
    %278 = arith.addf %272, %277 : vector<1x128xf32>
    %c0_96 = arith.constant 0 : index
    %c0_97 = arith.constant 0 : index
    %279 = vector.load %arg17[%c0_96, %c0_97] : memref<1x128xf32, #tpu.memory_space<vmem>>, vector<1x128xf32>
    tpu.vector_store %arg17[%c0_96, %c0_97], %278 {strides = array<i32>} : memref<1x128xf32, #tpu.memory_space<vmem>>, vector<1x128xf32>,
    return
  }
}

</mosaic_0001>

<llo_original>
// kernel: modaverse_forward.1
$region0: #{modaverse_forward.1}
  #allocation0 [shape = 'u32[]', space=smem, size = 0x4, offset = 0x4, fixed_abs, tag = 'smem constant byte address 0x4 - core index']
  #allocation1 [shape = 'u32[144,128]{1,0:T(1,128)}', space=vmem, size = 0x12000, scoped, tag = 'internal scratch']
  %s0 = inlined_call_operand.hbm [shape: f32[2,8,32], index: 0, kind: input, shape index: {}]
  %s1 = inlined_call_operand.hbm [shape: f32[2,16], index: 1, kind: input, shape index: {}]
  %s2 = inlined_call_operand.hbm [shape: f32[2,8], index: 2, kind: input, shape index: {}]
  %s3 = inlined_call_operand.hbm [shape: s32[2,8], index: 3, kind: input, shape index: {}]
  %s4 = inlined_call_operand.vmem [shape: f32[16,32], index: 4, kind: input, shape index: {}]
  %s5 = inlined_call_operand.vmem [shape: f32[1,32], index: 5, kind: input, shape index: {}]
  %s6 = inlined_call_operand.hbm [shape: f32[1,32], index: 6, kind: input, shape index: {}]
  %s7 = inlined_call_operand.vmem [shape: f32[32,32], index: 7, kind: input, shape index: {}]
  %s8 = inlined_call_operand.vmem [shape: f32[32,32], index: 8, kind: input, shape index: {}]
  %s9 = inlined_call_operand.vmem [shape: f32[32,32], index: 9, kind: input, shape index: {}]
  %s10 = inlined_call_operand.hbm [shape: f32[32,32], index: 10, kind: input, shape index: {}]
  %s11 = inlined_call_operand.hbm [shape: f32[1,32], index: 11, kind: input, shape index: {}]
  %s12 = inlined_call_operand.hbm [shape: f32[32,64], index: 12, kind: input, shape index: {}]
  %s13 = inlined_call_operand.hbm [shape: f32[32,64], index: 13, kind: input, shape index: {}]
  %s14 = inlined_call_operand.vmem [shape: f32[64,32], index: 14, kind: input, shape index: {}]
  %s15 = inlined_call_operand.hbm [shape: f32[1,32], index: 15, kind: input, shape index: {}]
  %s16 = inlined_call_operand.hbm [shape: f32[32,64], index: 16, kind: input, shape index: {}]
  %s17 = inlined_call_operand.vmem [shape: f32[1,128], index: 17, kind: output, shape index: {}]
  %s18 = sld [smem:[#allocation0]]
  $region122: #{modaverse_forward.1} parent=0
    _
  %s20 = ssub.s32 1, %s18
  %s21 = scalar_select 0, %s20, %s18
  $region1: #{modaverse_forward.1} parent=0
    #allocation2 [shape = 'u8[8192]{0}', space=vmem, size = 0x2000, scoped, tag = 'input window, operand 0, single buffered']
    #allocation3 [shape = 's32[1]{0}', space=sflag, size = 0x4, scoped, tag = 'scoped memory for modaverse_forward.1']
    #allocation4 [shape = 'u8[1024]{0}', space=vmem, size = 0x400, scoped, tag = 'input window, operand 1, single buffered']
    #allocation5 [shape = 's32[1]{0}', space=sflag, size = 0x4, scoped, tag = 'scoped memory for modaverse_forward.1']
    #allocation6 [shape = 'u8[1024]{0}', space=vmem, size = 0x400, scoped, tag = 'input window, operand 2, single buffered']
    #allocation7 [shape = 'u8[1024]{0}', space=vmem, size = 0x400, scoped, tag = 'input window, operand 3, single buffered']
    #allocation8 [shape = 's32[1]{0}', space=sflag, size = 0x4, scoped, tag = 'scoped memory for modaverse_forward.1']
    #allocation9 [shape = 'u8[512]{0}', space=vmem, size = 0x400, scoped, tag = 'input window, operand 6, single buffered']
    #allocation10 [shape = 'u8[16384]{0}', space=vmem, size = 0x4000, scoped, tag = 'input window, operand 10, single buffered']
    #allocation11 [shape = 's32[1]{0}', space=sflag, size = 0x4, scoped, tag = 'scoped memory for modaverse_forward.1']
    #allocation12 [shape = 'u8[512]{0}', space=vmem, size = 0x400, scoped, tag = 'input window, operand 11, single buffered']
    #allocation13 [shape = 'u8[16384]{0}', space=vmem, size = 0x4000, scoped, tag = 'input window, operand 12, single buffered']
    #allocation14 [shape = 's32[1]{0}', space=sflag, size = 0x4, scoped, tag = 'scoped memory for modaverse_forward.1']
    #allocation15 [shape = 'u8[16384]{0}', space=vmem, size = 0x4000, scoped, tag = 'input window, operand 13, single buffered']
    #allocation16 [shape = 'u8[512]{0}', space=vmem, size = 0x400, scoped, tag = 'input window, operand 15, single buffered']
    #allocation17 [shape = 's32[1]{0}', space=sflag, size = 0x4, scoped, tag = 'scoped memory for modaverse_forward.1']
    #allocation18 [shape = 'u8[16384]{0}', space=vmem, size = 0x4000, scoped, tag = 'input window, operand 16, single buffered']
    %22 = vsyncpa [#allocation3], 0
    %23 = vsyncpa [#allocation5], 0
    %24 = vsyncpa [#allocation8], 0
    %25 = vsyncpa [#allocation11], 0
    %26 = vsyncpa [#allocation14], 0
    %27 = vsyncpa [#allocation17], 0
    // Predicated region
    $region2: #{modaverse_forward.1} parent=1 // pred_check
      _
    $region3: #{modaverse_forward.1} parent=1 // pred_check_branch
      %29 = sbr.rel (0) target = $region5
    $region4: #{modaverse_forward.1} parent=1 // pred_region
      %s31 = ssub.s32 256, 256
      %32 = vsyncadd [#allocation3], %s31
      %s33 = sshll.u32 [#allocation2], 4
      %s34 = int_to_ptr.vmem [resolvable:$true] %s33
      %39 = dma.hbm_to_vmem [thread:$0]  %s0, 256, %s34, [#allocation3], 128, 128, 8
    $region5: #{modaverse_forward.1} parent=1 // pred_fallthru
      _
    // Predicated region
    $region6: #{modaverse_forward.1} parent=1 // pred_check
      _
    $region7: #{modaverse_forward.1} parent=1 // pred_check_branch
      %41 = sbr.rel (0) target = $region9
    $region8: #{modaverse_forward.1} parent=1 // pred_region
      %s43 = ssub.s32 32, 32
      %44 = vsyncadd [#allocation5], %s43
      %s46 = sshll.u32 [#allocation4], 4
      %s47 = int_to_ptr.vmem [resolvable:$true] %s46
      %49 = dma.hbm_to_vmem [thread:$0]  %s1, 32, %s47, [#allocation5]
    $region9: #{modaverse_forward.1} parent=1 // pred_fallthru
      _
    // Predicated region
    $region10: #{modaverse_forward.1} parent=1 // pred_check
      _
    $region11: #{modaverse_forward.1} parent=1 // pred_check_branch
      %51 = sbr.rel (0) target = $region13
    $region12: #{modaverse_forward.1} parent=1 // pred_region
      %s53 = ssub.s32 32, 32
      %54 = vsyncadd [#allocation5], %s53
      %s56 = sshll.u32 [#allocation6], 4
      %s57 = int_to_ptr.vmem [resolvable:$true] %s56
      %59 = dma.hbm_to_vmem [thread:$0]  %s2, 32, %s57, [#allocation5]
    $region13: #{modaverse_forward.1} parent=1 // pred_fallthru
      _
    // Predicated region
    $region14: #{modaverse_forward.1} parent=1 // pred_check
      _
    $region15: #{modaverse_forward.1} parent=1 // pred_check_branch
      %61 = sbr.rel (0) target = $region17
    $region16: #{modaverse_forward.1} parent=1 // pred_region
      %s63 = ssub.s32 32, 32
      %64 = vsyncadd [#allocation8], %s63
      %s66 = sshll.u32 [#allocation7], 4
      %s67 = int_to_ptr.vmem [resolvable:$true] %s66
      %69 = dma.hbm_to_vmem [thread:$0]  %s3, 32, %s67, [#allocation8]
    $region17: #{modaverse_forward.1} parent=1 // pred_fallthru
      _
    // Predicated region
    $region18: #{modaverse_forward.1} parent=1 // pred_check
      _
    $region19: #{modaverse_forward.1} parent=1 // pred_check_branch
      %71 = sbr.rel (0) target = $region21
    $region20: #{modaverse_forward.1} parent=1 // pred_region
      _
    $region21: #{modaverse_forward.1} parent=1 // pred_fallthru
      _
    // Predicated region
    $region22: #{modaverse_forward.1} parent=1 // pred_check
      _
    $region23: #{modaverse_forward.1} parent=1 // pred_check_branch
      %73 = sbr.rel (0) target = $region25
    $region24: #{modaverse_forward.1} parent=1 // pred_region
      _
    $region25: #{modaverse_forward.1} parent=1 // pred_fallthru
      _
    // Predicated region
    $region26: #{modaverse_forward.1} parent=1 // pred_check
      _
    $region27: #{modaverse_forward.1} parent=1 // pred_check_branch
      %75 = sbr.rel (0) target = $region29
    $region28: #{modaverse_forward.1} parent=1 // pred_region
      %s77 = ssub.s32 16, 16
      %78 = vsyncadd [#allocation8], %s77
      %s80 = sshll.u32 [#allocation9], 4
      %s81 = int_to_ptr.vmem [resolvable:$true] %s80
      %83 = dma.hbm_to_vmem [thread:$0]  %s6, 16, %s81, [#allocation8]
    $region29: #{modaverse_forward.1} parent=1 // pred_fallthru
      _
    // Predicated region
    $region30: #{modaverse_forward.1} parent=1 // pred_check
      _
    $region31: #{modaverse_forward.1} parent=1 // pred_check_branch
      %85 = sbr.rel (0) target = $region33
    $region32: #{modaverse_forward.1} parent=1 // pred_region
      _
    $region33: #{modaverse_forward.1} parent=1 // pred_fallthru
      _
    // Predicated region
    $region34: #{modaverse_forward.1} parent=1 // pred_check
      _
    $region35: #{modaverse_forward.1} parent=1 // pred_check_branch
      %87 = sbr.rel (0) target = $region37
    $region36: #{modaverse_forward.1} parent=1 // pred_region
      _
    $region37: #{modaverse_forward.1} parent=1 // pred_fallthru
      _
    // Predicated region
    $region38: #{modaverse_forward.1} parent=1 // pred_check
      _
    $region39: #{modaverse_forward.1} parent=1 // pred_check_branch
      %89 = sbr.rel (0) target = $region41
    $region40: #{modaverse_forward.1} parent=1 // pred_region
      _
    $region41: #{modaverse_forward.1} parent=1 // pred_fallthru
      _
    // Predicated region
    $region42: #{modaverse_forward.1} parent=1 // pred_check
      _
    $region43: #{modaverse_forward.1} parent=1 // pred_check_branch
      %91 = sbr.rel (0) target = $region45
    $region44: #{modaverse_forward.1} parent=1 // pred_region
      %s93 = ssub.s32 512, 512
      %94 = vsyncadd [#allocation11], %s93
      %s95 = sshll.u32 [#allocation10], 4
      %s96 = int_to_ptr.vmem [resolvable:$true] %s95
      %101 = dma.hbm_to_vmem [thread:$0]  %s10, 512, %s96, [#allocation11], 128, 128, 8
    $region45: #{modaverse_forward.1} parent=1 // pred_fallthru
      _
    // Predicated region
    $region46: #{modaverse_forward.1} parent=1 // pred_check
      _
    $region47: #{modaverse_forward.1} parent=1 // pred_check_branch
      %103 = sbr.rel (0) target = $region49
    $region48: #{modaverse_forward.1} parent=1 // pred_region
      %s105 = ssub.s32 16, 16
      %106 = vsyncadd [#allocation11], %s105
      %s108 = sshll.u32 [#allocation12], 4
      %s109 = int_to_ptr.vmem [resolvable:$true] %s108
      %111 = dma.hbm_to_vmem [thread:$0]  %s11, 16, %s109, [#allocation11]
    $region49: #{modaverse_forward.1} parent=1 // pred_fallthru
      _
    // Predicated region
    $region50: #{modaverse_forward.1} parent=1 // pred_check
      _
    $region51: #{modaverse_forward.1} parent=1 // pred_check_branch
      %113 = sbr.rel (0) target = $region53
    $region52: #{modaverse_forward.1} parent=1 // pred_region
      %s115 = ssub.s32 512, 512
      %116 = vsyncadd [#allocation14], %s115
      %s117 = sshll.u32 [#allocation13], 4
      %s118 = int_to_ptr.vmem [resolvable:$true] %s117
      %123 = dma.hbm_to_vmem [thread:$0]  %s12, 512, %s118, [#allocation14], 128, 128, 8
    $region53: #{modaverse_forward.1} parent=1 // pred_fallthru
      _
    // Predicated region
    $region54: #{modaverse_forward.1} parent=1 // pred_check
      _
    $region55: #{modaverse_forward.1} parent=1 // pred_check_branch
      %125 = sbr.rel (0) target = $region57
    $region56: #{modaverse_forward.1} parent=1 // pred_region
      %s127 = ssub.s32 512, 512
      %128 = vsyncadd [#allocation14], %s127
      %s129 = sshll.u32 [#allocation15], 4
      %s130 = int_to_ptr.vmem [resolvable:$true] %s129
      %135 = dma.hbm_to_vmem [thread:$0]  %s13, 512, %s130, [#allocation14], 128, 128, 8
    $region57: #{modaverse_forward.1} parent=1 // pred_fallthru
      _
    // Predicated region
    $region58: #{modaverse_forward.1} parent=1 // pred_check
      _
    $region59: #{modaverse_forward.1} parent=1 // pred_check_branch
      %137 = sbr.rel (0) target = $region61
    $region60: #{modaverse_forward.1} parent=1 // pred_region
      _
    $region61: #{modaverse_forward.1} parent=1 // pred_fallthru
      _
    // Predicated region
    $region62: #{modaverse_forward.1} parent=1 // pred_check
      _
    $region63: #{modaverse_forward.1} parent=1 // pred_check_branch
      %139 = sbr.rel (0) target = $region65
    $region64: #{modaverse_forward.1} parent=1 // pred_region
      %s141 = ssub.s32 16, 16
      %142 = vsyncadd [#allocation17], %s141
      %s144 = sshll.u32 [#allocation16], 4
      %s145 = int_to_ptr.vmem [resolvable:$true] %s144
      %147 = dma.hbm_to_vmem [thread:$0]  %s15, 16, %s145, [#allocation17]
    $region65: #{modaverse_forward.1} parent=1 // pred_fallthru
      _
    // Predicated region
    $region66: #{modaverse_forward.1} parent=1 // pred_check
      _
    $region67: #{modaverse_forward.1} parent=1 // pred_check_branch
      %149 = sbr.rel (0) target = $region69
    $region68: #{modaverse_forward.1} parent=1 // pred_region
      %s151 = ssub.s32 512, 512
      %152 = vsyncadd [#allocation17], %s151
      %s153 = sshll.u32 [#allocation18], 4
      %s154 = int_to_ptr.vmem [resolvable:$true] %s153
      %159 = dma.hbm_to_vmem [thread:$0]  %s16, 512, %s154, [#allocation17], 128, 128, 8
    $region69: #{modaverse_forward.1} parent=1 // pred_fallthru
      _
    // Predicated region
    $region70: #{modaverse_forward.1} parent=1 // pred_check
      _
    $region71: #{modaverse_forward.1} parent=1 // pred_check_branch
      %161 = sbr.rel (0) target = $region73
    $region72: #{modaverse_forward.1} parent=1 // pred_region
      %162 = dma.done [#allocation3], 256
    $region73: #{modaverse_forward.1} parent=1 // pred_fallthru
      _
    // Predicated region
    $region74: #{modaverse_forward.1} parent=1 // pred_check
      _
    $region75: #{modaverse_forward.1} parent=1 // pred_check_branch
      %164 = sbr.rel (0) target = $region77
    $region76: #{modaverse_forward.1} parent=1 // pred_region
      %165 = dma.done [#allocation5], 32
    $region77: #{modaverse_forward.1} parent=1 // pred_fallthru
      _
    // Predicated region
    $region78: #{modaverse_forward.1} parent=1 // pred_check
      _
    $region79: #{modaverse_forward.1} parent=1 // pred_check_branch
      %167 = sbr.rel (0) target = $region81
    $region80: #{modaverse_forward.1} parent=1 // pred_region
      %168 = dma.done [#allocation5], 32
    $region81: #{modaverse_forward.1} parent=1 // pred_fallthru
      _
    // Predicated region
    $region82: #{modaverse_forward.1} parent=1 // pred_check
      _
    $region83: #{modaverse_forward.1} parent=1 // pred_check_branch
      %170 = sbr.rel (0) target = $region85
    $region84: #{modaverse_forward.1} parent=1 // pred_region
      %171 = dma.done [#allocation8], 32
    $region85: #{modaverse_forward.1} parent=1 // pred_fallthru
      _
    // Predicated region
    $region86: #{modaverse_forward.1} parent=1 // pred_check
      _
    $region87: #{modaverse_forward.1} parent=1 // pred_check_branch
      %173 = sbr.rel (0) target = $region89
    $region88: #{modaverse_forward.1} parent=1 // pred_region
      %174 = dma.done [#allocation8], 16
    $region89: #{modaverse_forward.1} parent=1 // pred_fallthru
      _
    // Predicated region
    $region90: #{modaverse_forward.1} parent=1 // pred_check
      _
    $region91: #{modaverse_forward.1} parent=1 // pred_check_branch
      %176 = sbr.rel (0) target = $region93
    $region92: #{modaverse_forward.1} parent=1 // pred_region
      %177 = dma.done [#allocation11], 512
    $region93: #{modaverse_forward.1} parent=1 // pred_fallthru
      _
    // Predicated region
    $region94: #{modaverse_forward.1} parent=1 // pred_check
      _
    $region95: #{modaverse_forward.1} parent=1 // pred_check_branch
      %179 = sbr.rel (0) target = $region97
    $region96: #{modaverse_forward.1} parent=1 // pred_region
      %180 = dma.done [#allocation11], 16
    $region97: #{modaverse_forward.1} parent=1 // pred_fallthru
      _
    // Predicated region
    $region98: #{modaverse_forward.1} parent=1 // pred_check
      _
    $region99: #{modaverse_forward.1} parent=1 // pred_check_branch
      %182 = sbr.rel (0) target = $region101
    $region100: #{modaverse_forward.1} parent=1 // pred_region
      %183 = dma.done [#allocation14], 512
    $region101: #{modaverse_forward.1} parent=1 // pred_fallthru
      _
    // Predicated region
    $region102: #{modaverse_forward.1} parent=1 // pred_check
      _
    $region103: #{modaverse_forward.1} parent=1 // pred_check_branch
      %185 = sbr.rel (0) target = $region105
    $region104: #{modaverse_forward.1} parent=1 // pred_region
      %186 = dma.done [#allocation14], 512
    $region105: #{modaverse_forward.1} parent=1 // pred_fallthru
      _
    // Predicated region
    $region106: #{modaverse_forward.1} parent=1 // pred_check
      _
    $region107: #{modaverse_forward.1} parent=1 // pred_check_branch
      %188 = sbr.rel (0) target = $region109
    $region108: #{modaverse_forward.1} parent=1 // pred_region
      %189 = dma.done [#allocation17], 16
    $region109: #{modaverse_forward.1} parent=1 // pred_fallthru
      _
    // Predicated region
    $region110: #{modaverse_forward.1} parent=1 // pred_check
      _
    $region111: #{modaverse_forward.1} parent=1 // pred_check_branch
      %191 = sbr.rel (0) target = $region113
    $region112: #{modaverse_forward.1} parent=1 // pred_region
      %192 = dma.done [#allocation17], 512
    $region113: #{modaverse_forward.1} parent=1 // pred_fallthru
      _
    %v193 = vld [vmem:[#allocation4] sm:$0x3]
    %v194 = vld [vmem:[%s4] sm:$0xff]
    %v195 = vld [vmem:[%s4 + $0x8] sm:$0xff]
    %v196 = vld [vmem:[%s5] sm:$0x1]
    %v198 = vlaneseq
    %v199 = vshrl.u32 %v198, 7
    %v200 = vsub.s32 0, %v199
    %v201 = vrot.slane %v196, %v200
    %vm203 = vcmask 130048
    %v205 = vsel %vm203, %v193, 0
    %207 = vmatprep.subr.mxu0 0.0
    %208 = vmatpush1.msra.mxu0 0.0
    %209 = vmatprep.subr.mxu0 0.0
    %210 = vmatpush1.msra.mxu0 0.0
    %211 = vmatprep.subr.mxu0 0.0
    %212 = vmatpush1.msra.mxu0 0.0
    %213 = vmatprep.subr.mxu0 0.0
    %214 = vmatpush1.msra.mxu0 0.0
    %215 = vmatprep.subr.mxu0 0.0
    %216 = vmatpush1.msra.mxu0 0.0
    %217 = vmatprep.subr.mxu0 0.0
    %218 = vmatpush1.msra.mxu0 0.0
    %219 = vmatprep.subr.mxu0 0.0
    %220 = vmatpush1.msra.mxu0 0.0
    %221 = vmatprep.subr.mxu0 0.0
    %222 = vmatpush1.msra.mxu0 0.0
    %223 = vmatprep.subr.mxu0 0.0
    %224 = vmatpush1.msra.mxu0 0.0
    %225 = vmatprep.subr.mxu0 0.0
    %226 = vmatpush1.msra.mxu0 0.0
    %227 = vmatprep.subr.mxu0 0.0
    %228 = vmatpush1.msra.mxu0 0.0
    %229 = vmatprep.subr.mxu0 0.0
    %230 = vmatpush1.msra.mxu0 0.0
    %231 = vmatprep.subr.mxu0 0.0
    %232 = vmatpush1.msra.mxu0 0.0
    %233 = vmatprep.subr.mxu0 0.0
    %234 = vmatpush1.msra.mxu0 0.0
    %235 = vmatprep.subr.mxu0 0.0
    %236 = vmatpush1.msra.mxu0 %v195
    %237 = vmatprep.subr.mxu0 0.0
    %238 = vmatpush1.msra.mxu0 %v194
    %239 = vmatprep.subr.mxu0 0.0
    %240 = vmatpush2.msra.mxu0 0.0
    %241 = vmatprep.subr.mxu0 0.0
    %242 = vmatpush2.msra.mxu0 0.0
    %243 = vmatprep.subr.mxu0 0.0
    %244 = vmatpush2.msra.mxu0 0.0
    %245 = vmatprep.subr.mxu0 0.0
    %246 = vmatpush2.msra.mxu0 0.0
    %247 = vmatprep.subr.mxu0 0.0
    %248 = vmatpush2.msra.mxu0 0.0
    %249 = vmatprep.subr.mxu0 0.0
    %250 = vmatpush2.msra.mxu0 0.0
    %251 = vmatprep.subr.mxu0 0.0
    %252 = vmatpush2.msra.mxu0 0.0
    %253 = vmatprep.subr.mxu0 0.0
    %254 = vmatpush2.msra.mxu0 0.0
    %255 = vmatprep.subr.mxu0 0.0
    %256 = vmatpush2.msra.mxu0 0.0
    %257 = vmatprep.subr.mxu0 0.0
    %258 = vmatpush2.msra.mxu0 0.0
    %259 = vmatprep.subr.mxu0 0.0
    %260 = vmatpush2.msra.mxu0 0.0
    %261 = vmatprep.subr.mxu0 0.0
    %262 = vmatpush2.msra.mxu0 0.0
    %263 = vmatprep.subr.mxu0 0.0
    %264 = vmatpush2.msra.mxu0 0.0
    %265 = vmatprep.subr.mxu0 0.0
    %266 = vmatpush2.msra.mxu0 0.0
    %267 = vmatprep.subr.mxu0 0.0
    %268 = vmatpush2.msra.mxu0 0.0
    %269 = vmatprep.subr.mxu0 0.0
    %270 = vmatpush2.msra.mxu0 0.0
    %271 = vmatprep.mubr.f32.mxu0 0.0
    %272 = vmatmul.mubr.f32.gmra.mxu0 %v205
    %v273 = vpop.f32.mrf.mxu0
    %v274 = vadd.f32 %v201, %v273
    %v275 = vpop.f32.mrf.mxu0
    %276 = vdwg.mxu0
    %v277 = vlaneseq
    %v278 = vshrl.u32 %v277, 7
    %vm279 = vcmp.eq.s32.totalorder %v278, 2
    %v282 = vunpack.c.l.s4 1966171168
    %v283 = vunpack.c.0.s8 %v282
    %v284 = vlaneseq
    %v285 = vshrl.u32 %v284, 7
    %v286 = vsub.s32 %v283, %v285
    %v287 = vrot.slane %v274, %v286
    %v288 = vcombine.high %v287, %v287
    %v290 = vunpack.c.l.s4 1966171168
    %v291 = vunpack.c.0.s8 %v290
    %v292 = vlaneseq
    %v293 = vshrl.u32 %v292, 7
    %v294 = vsub.s32 %v291, %v293
    %v295 = vrot.slane %v287, %v294
    %v297 = vunpack.c.l.s4 1966171168
    %v298 = vunpack.c.0.s8 %v297
    %v299 = vlaneseq
    %v300 = vshrl.u32 %v299, 7
    %v301 = vsub.s32 %v298, %v300
    %v302 = vrot.slane %v288, %v301
    %v303 = vld [vmem:[#allocation2] sm:$0xff]
    %v304 = vld [vmem:[#allocation2 + $0x8] sm:$0xff]
    %v305 = vlaneseq
    %v306 = vshrl.u32 %v305, 7
    %v307 = vsub.s32 0, %v306
    %v308 = vrot.slane %v295, %v307
    %v309 = vlaneseq
    %v310 = vshrl.u32 %v309, 7
    %v311 = vsub.s32 0, %v310
    %v312 = vrot.slane %v302, %v311
    %v315 = vsel %vm279, %v308, %v303
    %v316 = vsel %vm279, %v312, %v304
    %v317 = vlaneseq
    %v318 = vand.u32 %v317, 127
    %v319 = vld [vmem:[#allocation6] sm:$0x3]
    %v320 = vld [vmem:[#allocation7] sm:$0x3]
    %v321 = vld [vmem:[#allocation9] sm:$0x1]
    %v322 = vmul.f32 %v315, %v315
    %v323 = vmul.f32 %v316, %v316
    %vm324 = vcmask 261120
    %v325 = vsel %vm324, %v322, 0.0
    %326 = vadd.xlane.f32.xlu0 %v325
    %v327 = vpop.xlane.xlu0 %326
    %v328 = vsel %vm324, %v323, 0.0
    %329 = vadd.xlane.f32.xlu0 %v328
    %v330 = vpop.xlane.xlu0 %329
    %v331 = vrcp.pop 32.0
    %v332 = vmul.f32 %v327, %v331
    %v333 = vmul.f32 %v330, %v331
    %v334 = vadd.f32 %v332, 1e-06
    %v335 = vadd.f32 %v333, 1e-06
    %v336 = vrsqrt.pop %v334
    %v337 = vrsqrt.pop %v335
    %v338 = vmul.f32 %v315, %v336
    %v339 = vmul.f32 %v316, %v337
    %v341 = vlaneseq
    %v342 = vshrl.u32 %v341, 7
    %v343 = vsub.s32 0, %v342
    %v344 = vrot.slane %v321, %v343
    %v346 = vmul.f32 %v338, %v344
    %v347 = vmul.f32 %v339, %v344
    %v348 = vld [vmem:[%s7] sm:$0xff]
    %v349 = vld [vmem:[%s7 + $0x8] sm:$0xff]
    %v350 = vld [vmem:[%s7 + $0x10] sm:$0xff]
    %v351 = vld [vmem:[%s7 + $0x18] sm:$0xff]
    %v353 = vsel %vm324, %v346, 0
    %v356 = vsel %vm324, %v347, 0
    %358 = vmatprep.subr.mxu0 0.0
    %359 = vmatpush1.msra.mxu0 0.0
    %360 = vmatprep.subr.mxu0 0.0
    %361 = vmatpush1.msra.mxu0 0.0
    %362 = vmatprep.subr.mxu0 0.0
    %363 = vmatpush1.msra.mxu0 0.0
    %364 = vmatprep.subr.mxu0 0.0
    %365 = vmatpush1.msra.mxu0 0.0
    %366 = vmatprep.subr.mxu0 0.0
    %367 = vmatpush1.msra.mxu0 0.0
    %368 = vmatprep.subr.mxu0 0.0
    %369 = vmatpush1.msra.mxu0 0.0
    %370 = vmatprep.subr.mxu0 0.0
    %371 = vmatpush1.msra.mxu0 0.0
    %372 = vmatprep.subr.mxu0 0.0
    %373 = vmatpush1.msra.mxu0 0.0
    %374 = vmatprep.subr.mxu0 0.0
    %375 = vmatpush1.msra.mxu0 0.0
    %376 = vmatprep.subr.mxu0 0.0
    %377 = vmatpush1.msra.mxu0 0.0
    %378 = vmatprep.subr.mxu0 0.0
    %379 = vmatpush1.msra.mxu0 0.0
    %380 = vmatprep.subr.mxu0 0.0
    %381 = vmatpush1.msra.mxu0 0.0
    %382 = vmatprep.subr.mxu0 0.0
    %383 = vmatpush1.msra.mxu0 %v351
    %384 = vmatprep.subr.mxu0 0.0
    %385 = vmatpush1.msra.mxu0 %v350
    %386 = vmatprep.subr.mxu0 0.0
    %387 = vmatpush1.msra.mxu0 %v349
    %388 = vmatprep.subr.mxu0 0.0
    %389 = vmatpush1.msra.mxu0 %v348
    %390 = vmatprep.subr.mxu0 0.0
    %391 = vmatpush2.msra.mxu0 0.0
    %392 = vmatprep.subr.mxu0 0.0
    %393 = vmatpush2.msra.mxu0 0.0
    %394 = vmatprep.subr.mxu0 0.0
    %395 = vmatpush2.msra.mxu0 0.0
    %396 = vmatprep.subr.mxu0 0.0
    %397 = vmatpush2.msra.mxu0 0.0
    %398 = vmatprep.subr.mxu0 0.0
    %399 = vmatpush2.msra.mxu0 0.0
    %400 = vmatprep.subr.mxu0 0.0
    %401 = vmatpush2.msra.mxu0 0.0
    %402 = vmatprep.subr.mxu0 0.0
    %403 = vmatpush2.msra.mxu0 0.0
    %404 = vmatprep.subr.mxu0 0.0
    %405 = vmatpush2.msra.mxu0 0.0
    %406 = vmatprep.subr.mxu0 0.0
    %407 = vmatpush2.msra.mxu0 0.0
    %408 = vmatprep.subr.mxu0 0.0
    %409 = vmatpush2.msra.mxu0 0.0
    %410 = vmatprep.subr.mxu0 0.0
    %411 = vmatpush2.msra.mxu0 0.0
    %412 = vmatprep.subr.mxu0 0.0
    %413 = vmatpush2.msra.mxu0 0.0
    %414 = vmatprep.subr.mxu0 0.0
    %415 = vmatpush2.msra.mxu0 0.0
    %416 = vmatprep.subr.mxu0 0.0
    %417 = vmatpush2.msra.mxu0 0.0
    %418 = vmatprep.subr.mxu0 0.0
    %419 = vmatpush2.msra.mxu0 0.0
    %420 = vmatprep.subr.mxu0 0.0
    %421 = vmatpush2.msra.mxu0 0.0
    %422 = vmatprep.mubr.f32.mxu0 0.0
    %423 = vmatmul.mubr.f32.gmra.mxu0 %v353
    %v424 = vpop.f32.mrf.mxu0
    %v425 = vadd.f32 0.0, %v424
    %v426 = vpop.f32.mrf.mxu0
    %427 = vmatprep.mubr.f32.mxu0 0.0
    %428 = vmatmul.mubr.f32.gmra.mxu0 %v356
    %v429 = vpop.f32.mrf.mxu0
    %v430 = vadd.f32 0.0, %v429
    %v431 = vpop.f32.mrf.mxu0
    %432 = vdwg.mxu0
    %v433 = vld [vmem:[%s8] sm:$0xff]
    %v434 = vld [vmem:[%s8 + $0x8] sm:$0xff]
    %v435 = vld [vmem:[%s8 + $0x10] sm:$0xff]
    %v436 = vld [vmem:[%s8 + $0x18] sm:$0xff]
    %437 = vmatprep.subr.mxu0 0.0
    %438 = vmatpush1.msra.mxu0 0.0
    %439 = vmatprep.subr.mxu0 0.0
    %440 = vmatpush1.msra.mxu0 0.0
    %441 = vmatprep.subr.mxu0 0.0
    %442 = vmatpush1.msra.mxu0 0.0
    %443 = vmatprep.subr.mxu0 0.0
    %444 = vmatpush1.msra.mxu0 0.0
    %445 = vmatprep.subr.mxu0 0.0
    %446 = vmatpush1.msra.mxu0 0.0
    %447 = vmatprep.subr.mxu0 0.0
    %448 = vmatpush1.msra.mxu0 0.0
    %449 = vmatprep.subr.mxu0 0.0
    %450 = vmatpush1.msra.mxu0 0.0
    %451 = vmatprep.subr.mxu0 0.0
    %452 = vmatpush1.msra.mxu0 0.0
    %453 = vmatprep.subr.mxu0 0.0
    %454 = vmatpush1.msra.mxu0 0.0
    %455 = vmatprep.subr.mxu0 0.0
    %456 = vmatpush1.msra.mxu0 0.0
    %457 = vmatprep.subr.mxu0 0.0
    %458 = vmatpush1.msra.mxu0 0.0
    %459 = vmatprep.subr.mxu0 0.0
    %460 = vmatpush1.msra.mxu0 0.0
    %461 = vmatprep.subr.mxu0 0.0
    %462 = vmatpush1.msra.mxu0 %v436
    %463 = vmatprep.subr.mxu0 0.0
    %464 = vmatpush1.msra.mxu0 %v435
    %465 = vmatprep.subr.mxu0 0.0
    %466 = vmatpush1.msra.mxu0 %v434
    %467 = vmatprep.subr.mxu0 0.0
    %468 = vmatpush1.msra.mxu0 %v433
    %469 = vmatprep.subr.mxu0 0.0
    %470 = vmatpush2.msra.mxu0 0.0
    %471 = vmatprep.subr.mxu0 0.0
    %472 = vmatpush2.msra.mxu0 0.0
    %473 = vmatprep.subr.mxu0 0.0
    %474 = vmatpush2.msra.mxu0 0.0
    %475 = vmatprep.subr.mxu0 0.0
    %476 = vmatpush2.msra.mxu0 0.0
    %477 = vmatprep.subr.mxu0 0.0
    %478 = vmatpush2.msra.mxu0 0.0
    %479 = vmatprep.subr.mxu0 0.0
    %480 = vmatpush2.msra.mxu0 0.0
    %481 = vmatprep.subr.mxu0 0.0
    %482 = vmatpush2.msra.mxu0 0.0
    %483 = vmatprep.subr.mxu0 0.0
    %484 = vmatpush2.msra.mxu0 0.0
    %485 = vmatprep.subr.mxu0 0.0
    %486 = vmatpush2.msra.mxu0 0.0
    %487 = vmatprep.subr.mxu0 0.0
    %488 = vmatpush2.msra.mxu0 0.0
    %489 = vmatprep.subr.mxu0 0.0
    %490 = vmatpush2.msra.mxu0 0.0
    %491 = vmatprep.subr.mxu0 0.0
    %492 = vmatpush2.msra.mxu0 0.0
    %493 = vmatprep.subr.mxu0 0.0
    %494 = vmatpush2.msra.mxu0 0.0
    %495 = vmatprep.subr.mxu0 0.0
    %496 = vmatpush2.msra.mxu0 0.0
    %497 = vmatprep.subr.mxu0 0.0
    %498 = vmatpush2.msra.mxu0 0.0
    %499 = vmatprep.subr.mxu0 0.0
    %500 = vmatpush2.msra.mxu0 0.0
    %501 = vmatprep.mubr.f32.mxu0 0.0
    %502 = vmatmul.mubr.f32.gmra.mxu0 %v353
    %v503 = vpop.f32.mrf.mxu0
    %v504 = vadd.f32 0.0, %v503
    %v505 = vpop.f32.mrf.mxu0
    %506 = vmatprep.mubr.f32.mxu0 0.0
    %507 = vmatmul.mubr.f32.gmra.mxu0 %v356
    %v508 = vpop.f32.mrf.mxu0
    %v509 = vadd.f32 0.0, %v508
    %v510 = vpop.f32.mrf.mxu0
    %511 = vdwg.mxu0
    %v512 = vld [vmem:[%s9] sm:$0xff]
    %v513 = vld [vmem:[%s9 + $0x8] sm:$0xff]
    %v514 = vld [vmem:[%s9 + $0x10] sm:$0xff]
    %v515 = vld [vmem:[%s9 + $0x18] sm:$0xff]
    %516 = vmatprep.subr.mxu0 0.0
    %517 = vmatpush1.msra.mxu0 0.0
    %518 = vmatprep.subr.mxu0 0.0
    %519 = vmatpush1.msra.mxu0 0.0
    %520 = vmatprep.subr.mxu0 0.0
    %521 = vmatpush1.msra.mxu0 0.0
    %522 = vmatprep.subr.mxu0 0.0
    %523 = vmatpush1.msra.mxu0 0.0
    %524 = vmatprep.subr.mxu0 0.0
    %525 = vmatpush1.msra.mxu0 0.0
    %526 = vmatprep.subr.mxu0 0.0
    %527 = vmatpush1.msra.mxu0 0.0
    %528 = vmatprep.subr.mxu0 0.0
    %529 = vmatpush1.msra.mxu0 0.0
    %530 = vmatprep.subr.mxu0 0.0
    %531 = vmatpush1.msra.mxu0 0.0
    %532 = vmatprep.subr.mxu0 0.0
    %533 = vmatpush1.msra.mxu0 0.0
    %534 = vmatprep.subr.mxu0 0.0
    %535 = vmatpush1.msra.mxu0 0.0
    %536 = vmatprep.subr.mxu0 0.0
    %537 = vmatpush1.msra.mxu0 0.0
    %538 = vmatprep.subr.mxu0 0.0
    %539 = vmatpush1.msra.mxu0 0.0
    %540 = vmatprep.subr.mxu0 0.0
    %541 = vmatpush1.msra.mxu0 %v515
    %542 = vmatprep.subr.mxu0 0.0
    %543 = vmatpush1.msra.mxu0 %v514
    %544 = vmatprep.subr.mxu0 0.0
    %545 = vmatpush1.msra.mxu0 %v513
    %546 = vmatprep.subr.mxu0 0.0
    %547 = vmatpush1.msra.mxu0 %v512
    %548 = vmatprep.subr.mxu0 0.0
    %549 = vmatpush2.msra.mxu0 0.0
    %550 = vmatprep.subr.mxu0 0.0
    %551 = vmatpush2.msra.mxu0 0.0
    %552 = vmatprep.subr.mxu0 0.0
    %553 = vmatpush2.msra.mxu0 0.0
    %554 = vmatprep.subr.mxu0 0.0
    %555 = vmatpush2.msra.mxu0 0.0
    %556 = vmatprep.subr.mxu0 0.0
    %557 = vmatpush2.msra.mxu0 0.0
    %558 = vmatprep.subr.mxu0 0.0
    %559 = vmatpush2.msra.mxu0 0.0
    %560 = vmatprep.subr.mxu0 0.0
    %561 = vmatpush2.msra.mxu0 0.0
    %562 = vmatprep.subr.mxu0 0.0
    %563 = vmatpush2.msra.mxu0 0.0
    %564 = vmatprep.subr.mxu0 0.0
    %565 = vmatpush2.msra.mxu0 0.0
    %566 = vmatprep.subr.mxu0 0.0
    %567 = vmatpush2.msra.mxu0 0.0
    %568 = vmatprep.subr.mxu0 0.0
    %569 = vmatpush2.msra.mxu0 0.0
    %570 = vmatprep.subr.mxu0 0.0
    %571 = vmatpush2.msra.mxu0 0.0
    %572 = vmatprep.subr.mxu0 0.0
    %573 = vmatpush2.msra.mxu0 0.0
    %574 = vmatprep.subr.mxu0 0.0
    %575 = vmatpush2.msra.mxu0 0.0
    %576 = vmatprep.subr.mxu0 0.0
    %577 = vmatpush2.msra.mxu0 0.0
    %578 = vmatprep.subr.mxu0 0.0
    %579 = vmatpush2.msra.mxu0 0.0
    %580 = vmatprep.mubr.f32.mxu0 0.0
    %581 = vmatmul.mubr.f32.gmra.mxu0 %v353
    %v582 = vpop.f32.mrf.mxu0
    %v583 = vadd.f32 0.0, %v582
    %v584 = vpop.f32.mrf.mxu0
    %585 = vmatprep.mubr.f32.mxu0 0.0
    %586 = vmatmul.mubr.f32.gmra.mxu0 %v356
    %v587 = vpop.f32.mrf.mxu0
    %v588 = vadd.f32 0.0, %v587
    %v589 = vpop.f32.mrf.mxu0
    %590 = vdwg.mxu0
    %vm591 = vcmp.le.s32.totalorder %v318, %v278
    %vm592 = vcmp.gt.f32.partialorder %v319, 0.5
    %v593 = vsel %vm592, 1, 0
    %v595 = vunpack.c.l.s4 1966171168
    %v596 = vunpack.c.0.s8 %v595
    %v597 = vlaneseq
    %v598 = vshrl.u32 %v597, 7
    %v599 = vsub.s32 %v596, %v598
    %v600 = vrot.slane %v593, %v599
    %v601 = vcombine.high %v600, %v600
    %v603 = vunpack.c.l.s4 1966171168
    %v604 = vunpack.c.0.s8 %v603
    %v605 = vlaneseq
    %v606 = vshrl.u32 %v605, 7
    %v607 = vsub.s32 %v604, %v606
    %v608 = vrot.slane %v600, %v607
    %v610 = vunpack.c.l.s4 1966171168
    %v611 = vunpack.c.0.s8 %v610
    %v612 = vlaneseq
    %v613 = vshrl.u32 %v612, 7
    %v614 = vsub.s32 %v611, %v613
    %v615 = vrot.slane %v601, %v614
    %vm616 = vcmp.ne.s32.totalorder %v608, 0
    %vm617 = vcmp.ne.s32.totalorder %v615, 0
    %v618 = vsel %vm591, 1, 0
    %vm619 = vcmp.eq.s32.totalorder %v618, 1
    %v620 = vsel %vm616, 1, 0
    %v621 = vsel %vm617, 1, 0
    %v622 = vlaneseq
    %v623 = vshrl.u32 %v622, 7
    %v624 = vsub.s32 0, %v623
    %v625 = vrot.slane %v620, %v624
    %v626 = vlaneseq
    %v627 = vshrl.u32 %v626, 7
    %v628 = vsub.s32 0, %v627
    %v629 = vrot.slane %v621, %v628
    %vm630 = vcmp.eq.s32.totalorder %v625, 1
    %vm631 = vcmp.eq.s32.totalorder %v629, 1
    %vm632 = vmand %vm619, %vm630
    %vm633 = vmand %vm619, %vm631
    %v634 = vld [vmem:[#allocation10] sm:$0xff]
    %v635 = vld [vmem:[#allocation10 + $0x8] sm:$0xff]
    %v636 = vld [vmem:[#allocation10 + $0x10] sm:$0xff]
    %v637 = vld [vmem:[#allocation10 + $0x18] sm:$0xff]
    %vm638 = vcmask 64512
    %v640 = vsel %vm638, %v425, 0
    %v643 = vsel %vm638, %v504, 0
    %645 = vmatprep.subr.mxu0 0.0
    %646 = vmatpush1.xpose.msra.mxu0 0.0
    %647 = vmatprep.subr.mxu0 0.0
    %648 = vmatpush1.xpose.msra.mxu0 0.0
    %649 = vmatprep.subr.mxu0 0.0
    %650 = vmatpush1.xpose.msra.mxu0 0.0
    %651 = vmatprep.subr.mxu0 0.0
    %652 = vmatpush1.xpose.msra.mxu0 0.0
    %653 = vmatprep.subr.mxu0 0.0
    %654 = vmatpush1.xpose.msra.mxu0 0.0
    %655 = vmatprep.subr.mxu0 0.0
    %656 = vmatpush1.xpose.msra.mxu0 0.0
    %657 = vmatprep.subr.mxu0 0.0
    %658 = vmatpush1.xpose.msra.mxu0 0.0
    %659 = vmatprep.subr.mxu0 0.0
    %660 = vmatpush1.xpose.msra.mxu0 0.0
    %661 = vmatprep.subr.mxu0 0.0
    %662 = vmatpush1.xpose.msra.mxu0 0.0
    %663 = vmatprep.subr.mxu0 0.0
    %664 = vmatpush1.xpose.msra.mxu0 0.0
    %665 = vmatprep.subr.mxu0 0.0
    %666 = vmatpush1.xpose.msra.mxu0 0.0
    %667 = vmatprep.subr.mxu0 0.0
    %668 = vmatpush1.xpose.msra.mxu0 0.0
    %669 = vmatprep.subr.mxu0 0.0
    %670 = vmatpush1.xpose.msra.mxu0 0.0
    %671 = vmatprep.subr.mxu0 0.0
    %672 = vmatpush1.xpose.msra.mxu0 0.0
    %673 = vmatprep.subr.mxu0 0.0
    %674 = vmatpush1.xpose.msra.mxu0 0.0
    %675 = vmatprep.subr.mxu0 0.0
    %676 = vmatpush1.xpose.msra.mxu0 %v643
    %677 = vmatprep.subr.mxu0 0.0
    %678 = vmatpush2.xpose.msra.mxu0 0.0
    %679 = vmatprep.subr.mxu0 0.0
    %680 = vmatpush2.xpose.msra.mxu0 0.0
    %681 = vmatprep.subr.mxu0 0.0
    %682 = vmatpush2.xpose.msra.mxu0 0.0
    %683 = vmatprep.subr.mxu0 0.0
    %684 = vmatpush2.xpose.msra.mxu0 0.0
    %685 = vmatprep.subr.mxu0 0.0
    %686 = vmatpush2.xpose.msra.mxu0 0.0
    %687 = vmatprep.subr.mxu0 0.0
    %688 = vmatpush2.xpose.msra.mxu0 0.0
    %689 = vmatprep.subr.mxu0 0.0
    %690 = vmatpush2.xpose.msra.mxu0 0.0
    %691 = vmatprep.subr.mxu0 0.0
    %692 = vmatpush2.xpose.msra.mxu0 0.0
    %693 = vmatprep.subr.mxu0 0.0
    %694 = vmatpush2.xpose.msra.mxu0 0.0
    %695 = vmatprep.subr.mxu0 0.0
    %696 = vmatpush2.xpose.msra.mxu0 0.0
    %697 = vmatprep.subr.mxu0 0.0
    %698 = vmatpush2.xpose.msra.mxu0 0.0
    %699 = vmatprep.subr.mxu0 0.0
    %700 = vmatpush2.xpose.msra.mxu0 0.0
    %701 = vmatprep.subr.mxu0 0.0
    %702 = vmatpush2.xpose.msra.mxu0 0.0
    %703 = vmatprep.subr.mxu0 0.0
    %704 = vmatpush2.xpose.msra.mxu0 0.0
    %705 = vmatprep.subr.mxu0 0.0
    %706 = vmatpush2.xpose.msra.mxu0 0.0
    %707 = vmatprep.subr.mxu0 0.0
    %708 = vmatpush2.xpose.msra.mxu0 0.0
    %709 = vmatprep.mubr.f32.mxu0 0.0
    %710 = vmatmul.mubr.f32.gmra.mxu0 %v640
    %v711 = vpop.f32.mrf.mxu0
    %v712 = vadd.f32 0.0, %v711
    %v713 = vpop.f32.mrf.mxu0
    %714 = vdwg.mxu0
    %v716 = vsel %vm638, %v430, 0
    %v719 = vsel %vm638, %v509, 0
    %721 = vmatprep.subr.mxu0 0.0
    %722 = vmatpush1.xpose.msra.mxu0 0.0
    %723 = vmatprep.subr.mxu0 0.0
    %724 = vmatpush1.xpose.msra.mxu0 0.0
    %725 = vmatprep.subr.mxu0 0.0
    %726 = vmatpush1.xpose.msra.mxu0 0.0
    %727 = vmatprep.subr.mxu0 0.0
    %728 = vmatpush1.xpose.msra.mxu0 0.0
    %729 = vmatprep.subr.mxu0 0.0
    %730 = vmatpush1.xpose.msra.mxu0 0.0
    %731 = vmatprep.subr.mxu0 0.0
    %732 = vmatpush1.xpose.msra.mxu0 0.0
    %733 = vmatprep.subr.mxu0 0.0
    %734 = vmatpush1.xpose.msra.mxu0 0.0
    %735 = vmatprep.subr.mxu0 0.0
    %736 = vmatpush1.xpose.msra.mxu0 0.0
    %737 = vmatprep.subr.mxu0 0.0
    %738 = vmatpush1.xpose.msra.mxu0 0.0
    %739 = vmatprep.subr.mxu0 0.0
    %740 = vmatpush1.xpose.msra.mxu0 0.0
    %741 = vmatprep.subr.mxu0 0.0
    %742 = vmatpush1.xpose.msra.mxu0 0.0
    %743 = vmatprep.subr.mxu0 0.0
    %744 = vmatpush1.xpose.msra.mxu0 0.0
    %745 = vmatprep.subr.mxu0 0.0
    %746 = vmatpush1.xpose.msra.mxu0 0.0
    %747 = vmatprep.subr.mxu0 0.0
    %748 = vmatpush1.xpose.msra.mxu0 0.0
    %749 = vmatprep.subr.mxu0 0.0
    %750 = vmatpush1.xpose.msra.mxu0 0.0
    %751 = vmatprep.subr.mxu0 0.0
    %752 = vmatpush1.xpose.msra.mxu0 %v719
    %753 = vmatprep.subr.mxu0 0.0
    %754 = vmatpush2.xpose.msra.mxu0 0.0
    %755 = vmatprep.subr.mxu0 0.0
    %756 = vmatpush2.xpose.msra.mxu0 0.0
    %757 = vmatprep.subr.mxu0 0.0
    %758 = vmatpush2.xpose.msra.mxu0 0.0
    %759 = vmatprep.subr.mxu0 0.0
    %760 = vmatpush2.xpose.msra.mxu0 0.0
    %761 = vmatprep.subr.mxu0 0.0
    %762 = vmatpush2.xpose.msra.mxu0 0.0
    %763 = vmatprep.subr.mxu0 0.0
    %764 = vmatpush2.xpose.msra.mxu0 0.0
    %765 = vmatprep.subr.mxu0 0.0
    %766 = vmatpush2.xpose.msra.mxu0 0.0
    %767 = vmatprep.subr.mxu0 0.0
    %768 = vmatpush2.xpose.msra.mxu0 0.0
    %769 = vmatprep.subr.mxu0 0.0
    %770 = vmatpush2.xpose.msra.mxu0 0.0
    %771 = vmatprep.subr.mxu0 0.0
    %772 = vmatpush2.xpose.msra.mxu0 0.0
    %773 = vmatprep.subr.mxu0 0.0
    %774 = vmatpush2.xpose.msra.mxu0 0.0
    %775 = vmatprep.subr.mxu0 0.0
    %776 = vmatpush2.xpose.msra.mxu0 0.0
    %777 = vmatprep.subr.mxu0 0.0
    %778 = vmatpush2.xpose.msra.mxu0 0.0
    %779 = vmatprep.subr.mxu0 0.0
    %780 = vmatpush2.xpose.msra.mxu0 0.0
    %781 = vmatprep.subr.mxu0 0.0
    %782 = vmatpush2.xpose.msra.mxu0 0.0
    %783 = vmatprep.subr.mxu0 0.0
    %784 = vmatpush2.xpose.msra.mxu0 0.0
    %785 = vmatprep.mubr.f32.mxu0 0.0
    %786 = vmatmul.mubr.f32.gmra.mxu0 %v716
    %v787 = vpop.f32.mrf.mxu0
    %v788 = vadd.f32 0.0, %v787
    %v789 = vpop.f32.mrf.mxu0
    %790 = vdwg.mxu0
    %v791 = vmul.f32 %v712, 0.35355338
    %v792 = vmul.f32 %v788, 0.35355338
    %v793 = vsel %vm632, %v791, -1e+09
    %v794 = vsel %vm633, %v792, -1e+09
    %v795 = vsel %vm638, %v793, -inf
    %796 = vmax.xlane.f32.xlu0 %v795
    %v797 = vpop.xlane.xlu0 %796
    %v798 = vsel %vm638, %v794, -inf
    %799 = vmax.xlane.f32.xlu0 %v798
    %v800 = vpop.xlane.xlu0 %799
    %v801 = vsub.f32 %v793, %v797
    %v802 = vsub.f32 %v794, %v800
    %v803 = vmul.f32 %v801, 1.442695
    %v804 = vpow.pop %v803
    %v805 = vmul.f32 %v802, 1.442695
    %v806 = vpow.pop %v805
    %v807 = vsel %vm638, %v804, 0.0
    %808 = vadd.xlane.f32.xlu0 %v807
    %v809 = vpop.xlane.xlu0 %808
    %v810 = vsel %vm638, %v806, 0.0
    %811 = vadd.xlane.f32.xlu0 %v810
    %v812 = vpop.xlane.xlu0 %811
    %v813 = vrcp.pop %v809
    %v814 = vrcp.pop %v812
    %v815 = vmul.f32 %v804, %v813
    %v816 = vmul.f32 %v806, %v814
    %v818 = vsel %vm638, %v815, 0
    %820 = vmatprep.subr.mxu0 0.0
    %821 = vmatpush1.msra.mxu0 0.0
    %822 = vmatprep.subr.mxu0 0.0
    %823 = vmatpush1.msra.mxu0 0.0
    %824 = vmatprep.subr.mxu0 0.0
    %825 = vmatpush1.msra.mxu0 0.0
    %826 = vmatprep.subr.mxu0 0.0
    %827 = vmatpush1.msra.mxu0 0.0
    %828 = vmatprep.subr.mxu0 0.0
    %829 = vmatpush1.msra.mxu0 0.0
    %830 = vmatprep.subr.mxu0 0.0
    %831 = vmatpush1.msra.mxu0 0.0
    %832 = vmatprep.subr.mxu0 0.0
    %833 = vmatpush1.msra.mxu0 0.0
    %834 = vmatprep.subr.mxu0 0.0
    %835 = vmatpush1.msra.mxu0 0.0
    %836 = vmatprep.subr.mxu0 0.0
    %837 = vmatpush1.msra.mxu0 0.0
    %838 = vmatprep.subr.mxu0 0.0
    %839 = vmatpush1.msra.mxu0 0.0
    %840 = vmatprep.subr.mxu0 0.0
    %841 = vmatpush1.msra.mxu0 0.0
    %842 = vmatprep.subr.mxu0 0.0
    %843 = vmatpush1.msra.mxu0 0.0
    %844 = vmatprep.subr.mxu0 0.0
    %845 = vmatpush1.msra.mxu0 0.0
    %846 = vmatprep.subr.mxu0 0.0
    %847 = vmatpush1.msra.mxu0 0.0
    %848 = vmatprep.subr.mxu0 0.0
    %849 = vmatpush1.msra.mxu0 0.0
    %850 = vmatprep.subr.mxu0 0.0
    %851 = vmatpush1.msra.mxu0 %v583
    %852 = vmatprep.subr.mxu0 0.0
    %853 = vmatpush2.msra.mxu0 0.0
    %854 = vmatprep.subr.mxu0 0.0
    %855 = vmatpush2.msra.mxu0 0.0
    %856 = vmatprep.subr.mxu0 0.0
    %857 = vmatpush2.msra.mxu0 0.0
    %858 = vmatprep.subr.mxu0 0.0
    %859 = vmatpush2.msra.mxu0 0.0
    %860 = vmatprep.subr.mxu0 0.0
    %861 = vmatpush2.msra.mxu0 0.0
    %862 = vmatprep.subr.mxu0 0.0
    %863 = vmatpush2.msra.mxu0 0.0
    %864 = vmatprep.subr.mxu0 0.0
    %865 = vmatpush2.msra.mxu0 0.0
    %866 = vmatprep.subr.mxu0 0.0
    %867 = vmatpush2.msra.mxu0 0.0
    %868 = vmatprep.subr.mxu0 0.0
    %869 = vmatpush2.msra.mxu0 0.0
    %870 = vmatprep.subr.mxu0 0.0
    %871 = vmatpush2.msra.mxu0 0.0
    %872 = vmatprep.subr.mxu0 0.0
    %873 = vmatpush2.msra.mxu0 0.0
    %874 = vmatprep.subr.mxu0 0.0
    %875 = vmatpush2.msra.mxu0 0.0
    %876 = vmatprep.subr.mxu0 0.0
    %877 = vmatpush2.msra.mxu0 0.0
    %878 = vmatprep.subr.mxu0 0.0
    %879 = vmatpush2.msra.mxu0 0.0
    %880 = vmatprep.subr.mxu0 0.0
    %881 = vmatpush2.msra.mxu0 0.0
    %882 = vmatprep.subr.mxu0 0.0
    %883 = vmatpush2.msra.mxu0 0.0
    %884 = vmatprep.mubr.f32.mxu0 0.0
    %885 = vmatmul.mubr.f32.gmra.mxu0 %v818
    %v886 = vpop.f32.mrf.mxu0
    %v887 = vadd.f32 0.0, %v886
    %v888 = vpop.f32.mrf.mxu0
    %889 = vdwg.mxu0
    %v891 = vsel %vm638, %v816, 0
    %893 = vmatprep.subr.mxu0 0.0
    %894 = vmatpush1.msra.mxu0 0.0
    %895 = vmatprep.subr.mxu0 0.0
    %896 = vmatpush1.msra.mxu0 0.0
    %897 = vmatprep.subr.mxu0 0.0
    %898 = vmatpush1.msra.mxu0 0.0
    %899 = vmatprep.subr.mxu0 0.0
    %900 = vmatpush1.msra.mxu0 0.0
    %901 = vmatprep.subr.mxu0 0.0
    %902 = vmatpush1.msra.mxu0 0.0
    %903 = vmatprep.subr.mxu0 0.0
    %904 = vmatpush1.msra.mxu0 0.0
    %905 = vmatprep.subr.mxu0 0.0
    %906 = vmatpush1.msra.mxu0 0.0
    %907 = vmatprep.subr.mxu0 0.0
    %908 = vmatpush1.msra.mxu0 0.0
    %909 = vmatprep.subr.mxu0 0.0
    %910 = vmatpush1.msra.mxu0 0.0
    %911 = vmatprep.subr.mxu0 0.0
    %912 = vmatpush1.msra.mxu0 0.0
    %913 = vmatprep.subr.mxu0 0.0
    %914 = vmatpush1.msra.mxu0 0.0
    %915 = vmatprep.subr.mxu0 0.0
    %916 = vmatpush1.msra.mxu0 0.0
    %917 = vmatprep.subr.mxu0 0.0
    %918 = vmatpush1.msra.mxu0 0.0
    %919 = vmatprep.subr.mxu0 0.0
    %920 = vmatpush1.msra.mxu0 0.0
    %921 = vmatprep.subr.mxu0 0.0
    %922 = vmatpush1.msra.mxu0 0.0
    %923 = vmatprep.subr.mxu0 0.0
    %924 = vmatpush1.msra.mxu0 %v588
    %925 = vmatprep.subr.mxu0 0.0
    %926 = vmatpush2.msra.mxu0 0.0
    %927 = vmatprep.subr.mxu0 0.0
    %928 = vmatpush2.msra.mxu0 0.0
    %929 = vmatprep.subr.mxu0 0.0
    %930 = vmatpush2.msra.mxu0 0.0
    %931 = vmatprep.subr.mxu0 0.0
    %932 = vmatpush2.msra.mxu0 0.0
    %933 = vmatprep.subr.mxu0 0.0
    %934 = vmatpush2.msra.mxu0 0.0
    %935 = vmatprep.subr.mxu0 0.0
    %936 = vmatpush2.msra.mxu0 0.0
    %937 = vmatprep.subr.mxu0 0.0
    %938 = vmatpush2.msra.mxu0 0.0
    %939 = vmatprep.subr.mxu0 0.0
    %940 = vmatpush2.msra.mxu0 0.0
    %941 = vmatprep.subr.mxu0 0.0
    %942 = vmatpush2.msra.mxu0 0.0
    %943 = vmatprep.subr.mxu0 0.0
    %944 = vmatpush2.msra.mxu0 0.0
    %945 = vmatprep.subr.mxu0 0.0
    %946 = vmatpush2.msra.mxu0 0.0
    %947 = vmatprep.subr.mxu0 0.0
    %948 = vmatpush2.msra.mxu0 0.0
    %949 = vmatprep.subr.mxu0 0.0
    %950 = vmatpush2.msra.mxu0 0.0
    %951 = vmatprep.subr.mxu0 0.0
    %952 = vmatpush2.msra.mxu0 0.0
    %953 = vmatprep.subr.mxu0 0.0
    %954 = vmatpush2.msra.mxu0 0.0
    %955 = vmatprep.subr.mxu0 0.0
    %956 = vmatpush2.msra.mxu0 0.0
    %957 = vmatprep.mubr.f32.mxu0 0.0
    %958 = vmatmul.mubr.f32.gmra.mxu0 %v891
    %v959 = vpop.f32.mrf.mxu0
    %v960 = vadd.f32 0.0, %v959
    %v961 = vpop.f32.mrf.mxu0
    %962 = vdwg.mxu0
    %963 = vrot.lane.b32.xlu0 %v425, 120
    %v964 = vpop.permute.xlu0 %963
    %965 = vrot.lane.b32.xlu0 %v504, 120
    %v966 = vpop.permute.xlu0 %965
    %v967 = vsel %vm638, %v964, 0
    %v969 = vsel %vm638, %v966, 0
    %971 = vmatprep.subr.mxu0 0.0
    %972 = vmatpush1.xpose.msra.mxu0 0.0
    %973 = vmatprep.subr.mxu0 0.0
    %974 = vmatpush1.xpose.msra.mxu0 0.0
    %975 = vmatprep.subr.mxu0 0.0
    %976 = vmatpush1.xpose.msra.mxu0 0.0
    %977 = vmatprep.subr.mxu0 0.0
    %978 = vmatpush1.xpose.msra.mxu0 0.0
    %979 = vmatprep.subr.mxu0 0.0
    %980 = vmatpush1.xpose.msra.mxu0 0.0
    %981 = vmatprep.subr.mxu0 0.0
    %982 = vmatpush1.xpose.msra.mxu0 0.0
    %983 = vmatprep.subr.mxu0 0.0
    %984 = vmatpush1.xpose.msra.mxu0 0.0
    %985 = vmatprep.subr.mxu0 0.0
    %986 = vmatpush1.xpose.msra.mxu0 0.0
    %987 = vmatprep.subr.mxu0 0.0
    %988 = vmatpush1.xpose.msra.mxu0 0.0
    %989 = vmatprep.subr.mxu0 0.0
    %990 = vmatpush1.xpose.msra.mxu0 0.0
    %991 = vmatprep.subr.mxu0 0.0
    %992 = vmatpush1.xpose.msra.mxu0 0.0
    %993 = vmatprep.subr.mxu0 0.0
    %994 = vmatpush1.xpose.msra.mxu0 0.0
    %995 = vmatprep.subr.mxu0 0.0
    %996 = vmatpush1.xpose.msra.mxu0 0.0
    %997 = vmatprep.subr.mxu0 0.0
    %998 = vmatpush1.xpose.msra.mxu0 0.0
    %999 = vmatprep.subr.mxu0 0.0
    %1000 = vmatpush1.xpose.msra.mxu0 0.0
    %1001 = vmatprep.subr.mxu0 0.0
    %1002 = vmatpush1.xpose.msra.mxu0 %v969
    %1003 = vmatprep.subr.mxu0 0.0
    %1004 = vmatpush2.xpose.msra.mxu0 0.0
    %1005 = vmatprep.subr.mxu0 0.0
    %1006 = vmatpush2.xpose.msra.mxu0 0.0
    %1007 = vmatprep.subr.mxu0 0.0
    %1008 = vmatpush2.xpose.msra.mxu0 0.0
    %1009 = vmatprep.subr.mxu0 0.0
    %1010 = vmatpush2.xpose.msra.mxu0 0.0
    %1011 = vmatprep.subr.mxu0 0.0
    %1012 = vmatpush2.xpose.msra.mxu0 0.0
    %1013 = vmatprep.subr.mxu0 0.0
    %1014 = vmatpush2.xpose.msra.mxu0 0.0
    %1015 = vmatprep.subr.mxu0 0.0
    %1016 = vmatpush2.xpose.msra.mxu0 0.0
    %1017 = vmatprep.subr.mxu0 0.0
    %1018 = vmatpush2.xpose.msra.mxu0 0.0
    %1019 = vmatprep.subr.mxu0 0.0
    %1020 = vmatpush2.xpose.msra.mxu0 0.0
    %1021 = vmatprep.subr.mxu0 0.0
    %1022 = vmatpush2.xpose.msra.mxu0 0.0
    %1023 = vmatprep.subr.mxu0 0.0
    %1024 = vmatpush2.xpose.msra.mxu0 0.0
    %1025 = vmatprep.subr.mxu0 0.0
    %1026 = vmatpush2.xpose.msra.mxu0 0.0
    %1027 = vmatprep.subr.mxu0 0.0
    %1028 = vmatpush2.xpose.msra.mxu0 0.0
    %1029 = vmatprep.subr.mxu0 0.0
    %1030 = vmatpush2.xpose.msra.mxu0 0.0
    %1031 = vmatprep.subr.mxu0 0.0
    %1032 = vmatpush2.xpose.msra.mxu0 0.0
    %1033 = vmatprep.subr.mxu0 0.0
    %1034 = vmatpush2.xpose.msra.mxu0 0.0
    %1035 = vmatprep.mubr.f32.mxu0 0.0
    %1036 = vmatmul.mubr.f32.gmra.mxu0 %v967
    %v1037 = vpop.f32.mrf.mxu0
    %v1038 = vadd.f32 0.0, %v1037
    %v1039 = vpop.f32.mrf.mxu0
    %1040 = vdwg.mxu0
    %1041 = vrot.lane.b32.xlu0 %v430, 120
    %v1042 = vpop.permute.xlu0 %1041
    %1043 = vrot.lane.b32.xlu0 %v509, 120
    %v1044 = vpop.permute.xlu0 %1043
    %v1045 = vsel %vm638, %v1042, 0
    %v1047 = vsel %vm638, %v1044, 0
    %1049 = vmatprep.subr.mxu0 0.0
    %1050 = vmatpush1.xpose.msra.mxu0 0.0
    %1051 = vmatprep.subr.mxu0 0.0
    %1052 = vmatpush1.xpose.msra.mxu0 0.0
    %1053 = vmatprep.subr.mxu0 0.0
    %1054 = vmatpush1.xpose.msra.mxu0 0.0
    %1055 = vmatprep.subr.mxu0 0.0
    %1056 = vmatpush1.xpose.msra.mxu0 0.0
    %1057 = vmatprep.subr.mxu0 0.0
    %1058 = vmatpush1.xpose.msra.mxu0 0.0
    %1059 = vmatprep.subr.mxu0 0.0
    %1060 = vmatpush1.xpose.msra.mxu0 0.0
    %1061 = vmatprep.subr.mxu0 0.0
    %1062 = vmatpush1.xpose.msra.mxu0 0.0
    %1063 = vmatprep.subr.mxu0 0.0
    %1064 = vmatpush1.xpose.msra.mxu0 0.0
    %1065 = vmatprep.subr.mxu0 0.0
    %1066 = vmatpush1.xpose.msra.mxu0 0.0
    %1067 = vmatprep.subr.mxu0 0.0
    %1068 = vmatpush1.xpose.msra.mxu0 0.0
    %1069 = vmatprep.subr.mxu0 0.0
    %1070 = vmatpush1.xpose.msra.mxu0 0.0
    %1071 = vmatprep.subr.mxu0 0.0
    %1072 = vmatpush1.xpose.msra.mxu0 0.0
    %1073 = vmatprep.subr.mxu0 0.0
    %1074 = vmatpush1.xpose.msra.mxu0 0.0
    %1075 = vmatprep.subr.mxu0 0.0
    %1076 = vmatpush1.xpose.msra.mxu0 0.0
    %1077 = vmatprep.subr.mxu0 0.0
    %1078 = vmatpush1.xpose.msra.mxu0 0.0
    %1079 = vmatprep.subr.mxu0 0.0
    %1080 = vmatpush1.xpose.msra.mxu0 %v1047
    %1081 = vmatprep.subr.mxu0 0.0
    %1082 = vmatpush2.xpose.msra.mxu0 0.0
    %1083 = vmatprep.subr.mxu0 0.0
    %1084 = vmatpush2.xpose.msra.mxu0 0.0
    %1085 = vmatprep.subr.mxu0 0.0
    %1086 = vmatpush2.xpose.msra.mxu0 0.0
    %1087 = vmatprep.subr.mxu0 0.0
    %1088 = vmatpush2.xpose.msra.mxu0 0.0
    %1089 = vmatprep.subr.mxu0 0.0
    %1090 = vmatpush2.xpose.msra.mxu0 0.0
    %1091 = vmatprep.subr.mxu0 0.0
    %1092 = vmatpush2.xpose.msra.mxu0 0.0
    %1093 = vmatprep.subr.mxu0 0.0
    %1094 = vmatpush2.xpose.msra.mxu0 0.0
    %1095 = vmatprep.subr.mxu0 0.0
    %1096 = vmatpush2.xpose.msra.mxu0 0.0
    %1097 = vmatprep.subr.mxu0 0.0
    %1098 = vmatpush2.xpose.msra.mxu0 0.0
    %1099 = vmatprep.subr.mxu0 0.0
    %1100 = vmatpush2.xpose.msra.mxu0 0.0
    %1101 = vmatprep.subr.mxu0 0.0
    %1102 = vmatpush2.xpose.msra.mxu0 0.0
    %1103 = vmatprep.subr.mxu0 0.0
    %1104 = vmatpush2.xpose.msra.mxu0 0.0
    %1105 = vmatprep.subr.mxu0 0.0
    %1106 = vmatpush2.xpose.msra.mxu0 0.0
    %1107 = vmatprep.subr.mxu0 0.0
    %1108 = vmatpush2.xpose.msra.mxu0 0.0
    %1109 = vmatprep.subr.mxu0 0.0
    %1110 = vmatpush2.xpose.msra.mxu0 0.0
    %1111 = vmatprep.subr.mxu0 0.0
    %1112 = vmatpush2.xpose.msra.mxu0 0.0
    %1113 = vmatprep.mubr.f32.mxu0 0.0
    %1114 = vmatmul.mubr.f32.gmra.mxu0 %v1045
    %v1115 = vpop.f32.mrf.mxu0
    %v1116 = vadd.f32 0.0, %v1115
    %v1117 = vpop.f32.mrf.mxu0
    %1118 = vdwg.mxu0
    %v1119 = vmul.f32 %v1038, 0.35355338
    %v1120 = vmul.f32 %v1116, 0.35355338
    %v1121 = vsel %vm632, %v1119, -1e+09
    %v1122 = vsel %vm633, %v1120, -1e+09
    %v1123 = vsel %vm638, %v1121, -inf
    %1124 = vmax.xlane.f32.xlu0 %v1123
    %v1125 = vpop.xlane.xlu0 %1124
    %v1126 = vsel %vm638, %v1122, -inf
    %1127 = vmax.xlane.f32.xlu0 %v1126
    %v1128 = vpop.xlane.xlu0 %1127
    %v1129 = vsub.f32 %v1121, %v1125
    %v1130 = vsub.f32 %v1122, %v1128
    %v1131 = vmul.f32 %v1129, 1.442695
    %v1132 = vpow.pop %v1131
    %v1133 = vmul.f32 %v1130, 1.442695
    %v1134 = vpow.pop %v1133
    %v1135 = vsel %vm638, %v1132, 0.0
    %1136 = vadd.xlane.f32.xlu0 %v1135
    %v1137 = vpop.xlane.xlu0 %1136
    %v1138 = vsel %vm638, %v1134, 0.0
    %1139 = vadd.xlane.f32.xlu0 %v1138
    %v1140 = vpop.xlane.xlu0 %1139
    %v1141 = vrcp.pop %v1137
    %v1142 = vrcp.pop %v1140
    %v1143 = vmul.f32 %v1132, %v1141
    %v1144 = vmul.f32 %v1134, %v1142
    %1146 = vrot.lane.b32.xlu0 %v583, 120
    %v1147 = vpop.permute.xlu0 %1146
    %v1150 = vsel %vm638, %v1143, 0
    %1152 = vmatprep.subr.mxu0 0.0
    %1153 = vmatpush1.msra.mxu0 0.0
    %1154 = vmatprep.subr.mxu0 0.0
    %1155 = vmatpush1.msra.mxu0 0.0
    %1156 = vmatprep.subr.mxu0 0.0
    %1157 = vmatpush1.msra.mxu0 0.0
    %1158 = vmatprep.subr.mxu0 0.0
    %1159 = vmatpush1.msra.mxu0 0.0
    %1160 = vmatprep.subr.mxu0 0.0
    %1161 = vmatpush1.msra.mxu0 0.0
    %1162 = vmatprep.subr.mxu0 0.0
    %1163 = vmatpush1.msra.mxu0 0.0
    %1164 = vmatprep.subr.mxu0 0.0
    %1165 = vmatpush1.msra.mxu0 0.0
    %1166 = vmatprep.subr.mxu0 0.0
    %1167 = vmatpush1.msra.mxu0 0.0
    %1168 = vmatprep.subr.mxu0 0.0
    %1169 = vmatpush1.msra.mxu0 0.0
    %1170 = vmatprep.subr.mxu0 0.0
    %1171 = vmatpush1.msra.mxu0 0.0
    %1172 = vmatprep.subr.mxu0 0.0
    %1173 = vmatpush1.msra.mxu0 0.0
    %1174 = vmatprep.subr.mxu0 0.0
    %1175 = vmatpush1.msra.mxu0 0.0
    %1176 = vmatprep.subr.mxu0 0.0
    %1177 = vmatpush1.msra.mxu0 0.0
    %1178 = vmatprep.subr.mxu0 0.0
    %1179 = vmatpush1.msra.mxu0 0.0
    %1180 = vmatprep.subr.mxu0 0.0
    %1181 = vmatpush1.msra.mxu0 0.0
    %1182 = vmatprep.subr.mxu0 0.0
    %1183 = vmatpush1.msra.mxu0 %v1147
    %1184 = vmatprep.subr.mxu0 0.0
    %1185 = vmatpush2.msra.mxu0 0.0
    %1186 = vmatprep.subr.mxu0 0.0
    %1187 = vmatpush2.msra.mxu0 0.0
    %1188 = vmatprep.subr.mxu0 0.0
    %1189 = vmatpush2.msra.mxu0 0.0
    %1190 = vmatprep.subr.mxu0 0.0
    %1191 = vmatpush2.msra.mxu0 0.0
    %1192 = vmatprep.subr.mxu0 0.0
    %1193 = vmatpush2.msra.mxu0 0.0
    %1194 = vmatprep.subr.mxu0 0.0
    %1195 = vmatpush2.msra.mxu0 0.0
    %1196 = vmatprep.subr.mxu0 0.0
    %1197 = vmatpush2.msra.mxu0 0.0
    %1198 = vmatprep.subr.mxu0 0.0
    %1199 = vmatpush2.msra.mxu0 0.0
    %1200 = vmatprep.subr.mxu0 0.0
    %1201 = vmatpush2.msra.mxu0 0.0
    %1202 = vmatprep.subr.mxu0 0.0
    %1203 = vmatpush2.msra.mxu0 0.0
    %1204 = vmatprep.subr.mxu0 0.0
    %1205 = vmatpush2.msra.mxu0 0.0
    %1206 = vmatprep.subr.mxu0 0.0
    %1207 = vmatpush2.msra.mxu0 0.0
    %1208 = vmatprep.subr.mxu0 0.0
    %1209 = vmatpush2.msra.mxu0 0.0
    %1210 = vmatprep.subr.mxu0 0.0
    %1211 = vmatpush2.msra.mxu0 0.0
    %1212 = vmatprep.subr.mxu0 0.0
    %1213 = vmatpush2.msra.mxu0 0.0
    %1214 = vmatprep.subr.mxu0 0.0
    %1215 = vmatpush2.msra.mxu0 0.0
    %1216 = vmatprep.mubr.f32.mxu0 0.0
    %1217 = vmatmul.mubr.f32.gmra.mxu0 %v1150
    %v1218 = vpop.f32.mrf.mxu0
    %v1219 = vadd.f32 0.0, %v1218
    %v1220 = vpop.f32.mrf.mxu0
    %1221 = vdwg.mxu0
    %1223 = vrot.lane.b32.xlu0 %v588, 120
    %v1224 = vpop.permute.xlu0 %1223
    %v1227 = vsel %vm638, %v1144, 0
    %1229 = vmatprep.subr.mxu0 0.0
    %1230 = vmatpush1.msra.mxu0 0.0
    %1231 = vmatprep.subr.mxu0 0.0
    %1232 = vmatpush1.msra.mxu0 0.0
    %1233 = vmatprep.subr.mxu0 0.0
    %1234 = vmatpush1.msra.mxu0 0.0
    %1235 = vmatprep.subr.mxu0 0.0
    %1236 = vmatpush1.msra.mxu0 0.0
    %1237 = vmatprep.subr.mxu0 0.0
    %1238 = vmatpush1.msra.mxu0 0.0
    %1239 = vmatprep.subr.mxu0 0.0
    %1240 = vmatpush1.msra.mxu0 0.0
    %1241 = vmatprep.subr.mxu0 0.0
    %1242 = vmatpush1.msra.mxu0 0.0
    %1243 = vmatprep.subr.mxu0 0.0
    %1244 = vmatpush1.msra.mxu0 0.0
    %1245 = vmatprep.subr.mxu0 0.0
    %1246 = vmatpush1.msra.mxu0 0.0
    %1247 = vmatprep.subr.mxu0 0.0
    %1248 = vmatpush1.msra.mxu0 0.0
    %1249 = vmatprep.subr.mxu0 0.0
    %1250 = vmatpush1.msra.mxu0 0.0
    %1251 = vmatprep.subr.mxu0 0.0
    %1252 = vmatpush1.msra.mxu0 0.0
    %1253 = vmatprep.subr.mxu0 0.0
    %1254 = vmatpush1.msra.mxu0 0.0
    %1255 = vmatprep.subr.mxu0 0.0
    %1256 = vmatpush1.msra.mxu0 0.0
    %1257 = vmatprep.subr.mxu0 0.0
    %1258 = vmatpush1.msra.mxu0 0.0
    %1259 = vmatprep.subr.mxu0 0.0
    %1260 = vmatpush1.msra.mxu0 %v1224
    %1261 = vmatprep.subr.mxu0 0.0
    %1262 = vmatpush2.msra.mxu0 0.0
    %1263 = vmatprep.subr.mxu0 0.0
    %1264 = vmatpush2.msra.mxu0 0.0
    %1265 = vmatprep.subr.mxu0 0.0
    %1266 = vmatpush2.msra.mxu0 0.0
    %1267 = vmatprep.subr.mxu0 0.0
    %1268 = vmatpush2.msra.mxu0 0.0
    %1269 = vmatprep.subr.mxu0 0.0
    %1270 = vmatpush2.msra.mxu0 0.0
    %1271 = vmatprep.subr.mxu0 0.0
    %1272 = vmatpush2.msra.mxu0 0.0
    %1273 = vmatprep.subr.mxu0 0.0
    %1274 = vmatpush2.msra.mxu0 0.0
    %1275 = vmatprep.subr.mxu0 0.0
    %1276 = vmatpush2.msra.mxu0 0.0
    %1277 = vmatprep.subr.mxu0 0.0
    %1278 = vmatpush2.msra.mxu0 0.0
    %1279 = vmatprep.subr.mxu0 0.0
    %1280 = vmatpush2.msra.mxu0 0.0
    %1281 = vmatprep.subr.mxu0 0.0
    %1282 = vmatpush2.msra.mxu0 0.0
    %1283 = vmatprep.subr.mxu0 0.0
    %1284 = vmatpush2.msra.mxu0 0.0
    %1285 = vmatprep.subr.mxu0 0.0
    %1286 = vmatpush2.msra.mxu0 0.0
    %1287 = vmatprep.subr.mxu0 0.0
    %1288 = vmatpush2.msra.mxu0 0.0
    %1289 = vmatprep.subr.mxu0 0.0
    %1290 = vmatpush2.msra.mxu0 0.0
    %1291 = vmatprep.subr.mxu0 0.0
    %1292 = vmatpush2.msra.mxu0 0.0
    %1293 = vmatprep.mubr.f32.mxu0 0.0
    %1294 = vmatmul.mubr.f32.gmra.mxu0 %v1227
    %v1295 = vpop.f32.mrf.mxu0
    %v1296 = vadd.f32 0.0, %v1295
    %v1297 = vpop.f32.mrf.mxu0
    %1298 = vdwg.mxu0
    %v1300 = vsel %vm638, %v1219, 0
    %v1303 = vsel %vm638, %v1296, 0
    %1305 = vmatprep.subr.mxu0 0.0
    %1306 = vmatpush1.msra.mxu0 0.0
    %1307 = vmatprep.subr.mxu0 0.0
    %1308 = vmatpush1.msra.mxu0 0.0
    %1309 = vmatprep.subr.mxu0 0.0
    %1310 = vmatpush1.msra.mxu0 0.0
    %1311 = vmatprep.subr.mxu0 0.0
    %1312 = vmatpush1.msra.mxu0 0.0
    %1313 = vmatprep.subr.mxu0 0.0
    %1314 = vmatpush1.msra.mxu0 0.0
    %1315 = vmatprep.subr.mxu0 0.0
    %1316 = vmatpush1.msra.mxu0 0.0
    %1317 = vmatprep.subr.mxu0 0.0
    %1318 = vmatpush1.msra.mxu0 0.0
    %1319 = vmatprep.subr.mxu0 0.0
    %1320 = vmatpush1.msra.mxu0 0.0
    %1321 = vmatprep.subr.mxu0 0.0
    %1322 = vmatpush1.msra.mxu0 0.0
    %1323 = vmatprep.subr.mxu0 0.0
    %1324 = vmatpush1.msra.mxu0 0.0
    %1325 = vmatprep.subr.mxu0 0.0
    %1326 = vmatpush1.msra.mxu0 0.0
    %1327 = vmatprep.subr.mxu0 0.0
    %1328 = vmatpush1.msra.mxu0 0.0
    %1329 = vmatprep.subr.mxu0 0.0
    %1330 = vmatpush1.msra.mxu0 0.0
    %1331 = vmatprep.subr.mxu0 0.0
    %1332 = vmatpush1.msra.mxu0 0.0
    %1333 = vmatprep.subr.mxu0 0.0
    %1334 = vmatpush1.msra.mxu0 0.0
    %1335 = vmatprep.subr.mxu0 0.0
    %1336 = vmatpush1.msra.mxu0 %v635
    %1337 = vmatprep.subr.mxu0 0.0
    %1338 = vmatpush2.msra.mxu0 0.0
    %1339 = vmatprep.subr.mxu0 0.0
    %1340 = vmatpush2.msra.mxu0 0.0
    %1341 = vmatprep.subr.mxu0 0.0
    %1342 = vmatpush2.msra.mxu0 0.0
    %1343 = vmatprep.subr.mxu0 0.0
    %1344 = vmatpush2.msra.mxu0 0.0
    %1345 = vmatprep.subr.mxu0 0.0
    %1346 = vmatpush2.msra.mxu0 0.0
    %1347 = vmatprep.subr.mxu0 0.0
    %1348 = vmatpush2.msra.mxu0 0.0
    %1349 = vmatprep.subr.mxu0 0.0
    %1350 = vmatpush2.msra.mxu0 0.0
    %1351 = vmatprep.subr.mxu0 0.0
    %1352 = vmatpush2.msra.mxu0 0.0
    %1353 = vmatprep.subr.mxu0 0.0
    %1354 = vmatpush2.msra.mxu0 0.0
    %1355 = vmatprep.subr.mxu0 0.0
    %1356 = vmatpush2.msra.mxu0 0.0
    %1357 = vmatprep.subr.mxu0 0.0
    %1358 = vmatpush2.msra.mxu0 0.0
    %1359 = vmatprep.subr.mxu0 0.0
    %1360 = vmatpush2.msra.mxu0 0.0
    %1361 = vmatprep.subr.mxu0 0.0
    %1362 = vmatpush2.msra.mxu0 0.0
    %1363 = vmatprep.subr.mxu0 0.0
    %1364 = vmatpush2.msra.mxu0 0.0
    %1365 = vmatprep.subr.mxu0 0.0
    %1366 = vmatpush2.msra.mxu0 0.0
    %1367 = vmatprep.subr.mxu0 0.0
    %1368 = vmatpush2.msra.mxu0 0.0
    %1369 = vmatprep.mubr.f32.mxu0 0.0
    %1370 = vmatmul.mubr.f32.gmra.mxu0 %v1300
    %v1371 = vpop.f32.mrf.mxu0
    %v1372 = vadd.f32 0.0, %v1371
    %v1373 = vpop.f32.mrf.mxu0
    %1374 = vmatprep.mubr.f32.mxu0 0.0
    %1375 = vmatmul.mubr.f32.gmra.mxu0 %v1303
    %v1376 = vpop.f32.mrf.mxu0
    %v1377 = vadd.f32 0.0, %v1376
    %v1378 = vpop.f32.mrf.mxu0
    %1379 = vdwg.mxu0
    %v1381 = vsel %vm638, %v887, 0
    %v1384 = vsel %vm638, %v960, 0
    %1386 = vmatprep.subr.mxu0 0.0
    %1387 = vmatpush1.msra.mxu0 0.0
    %1388 = vmatprep.subr.mxu0 0.0
    %1389 = vmatpush1.msra.mxu0 0.0
    %1390 = vmatprep.subr.mxu0 0.0
    %1391 = vmatpush1.msra.mxu0 0.0
    %1392 = vmatprep.subr.mxu0 0.0
    %1393 = vmatpush1.msra.mxu0 0.0
    %1394 = vmatprep.subr.mxu0 0.0
    %1395 = vmatpush1.msra.mxu0 0.0
    %1396 = vmatprep.subr.mxu0 0.0
    %1397 = vmatpush1.msra.mxu0 0.0
    %1398 = vmatprep.subr.mxu0 0.0
    %1399 = vmatpush1.msra.mxu0 0.0
    %1400 = vmatprep.subr.mxu0 0.0
    %1401 = vmatpush1.msra.mxu0 0.0
    %1402 = vmatprep.subr.mxu0 0.0
    %1403 = vmatpush1.msra.mxu0 0.0
    %1404 = vmatprep.subr.mxu0 0.0
    %1405 = vmatpush1.msra.mxu0 0.0
    %1406 = vmatprep.subr.mxu0 0.0
    %1407 = vmatpush1.msra.mxu0 0.0
    %1408 = vmatprep.subr.mxu0 0.0
    %1409 = vmatpush1.msra.mxu0 0.0
    %1410 = vmatprep.subr.mxu0 0.0
    %1411 = vmatpush1.msra.mxu0 0.0
    %1412 = vmatprep.subr.mxu0 0.0
    %1413 = vmatpush1.msra.mxu0 0.0
    %1414 = vmatprep.subr.mxu0 0.0
    %1415 = vmatpush1.msra.mxu0 0.0
    %1416 = vmatprep.subr.mxu0 0.0
    %1417 = vmatpush1.msra.mxu0 %v634
    %1418 = vmatprep.subr.mxu0 0.0
    %1419 = vmatpush2.msra.mxu0 0.0
    %1420 = vmatprep.subr.mxu0 0.0
    %1421 = vmatpush2.msra.mxu0 0.0
    %1422 = vmatprep.subr.mxu0 0.0
    %1423 = vmatpush2.msra.mxu0 0.0
    %1424 = vmatprep.subr.mxu0 0.0
    %1425 = vmatpush2.msra.mxu0 0.0
    %1426 = vmatprep.subr.mxu0 0.0
    %1427 = vmatpush2.msra.mxu0 0.0
    %1428 = vmatprep.subr.mxu0 0.0
    %1429 = vmatpush2.msra.mxu0 0.0
    %1430 = vmatprep.subr.mxu0 0.0
    %1431 = vmatpush2.msra.mxu0 0.0
    %1432 = vmatprep.subr.mxu0 0.0
    %1433 = vmatpush2.msra.mxu0 0.0
    %1434 = vmatprep.subr.mxu0 0.0
    %1435 = vmatpush2.msra.mxu0 0.0
    %1436 = vmatprep.subr.mxu0 0.0
    %1437 = vmatpush2.msra.mxu0 0.0
    %1438 = vmatprep.subr.mxu0 0.0
    %1439 = vmatpush2.msra.mxu0 0.0
    %1440 = vmatprep.subr.mxu0 0.0
    %1441 = vmatpush2.msra.mxu0 0.0
    %1442 = vmatprep.subr.mxu0 0.0
    %1443 = vmatpush2.msra.mxu0 0.0
    %1444 = vmatprep.subr.mxu0 0.0
    %1445 = vmatpush2.msra.mxu0 0.0
    %1446 = vmatprep.subr.mxu0 0.0
    %1447 = vmatpush2.msra.mxu0 0.0
    %1448 = vmatprep.subr.mxu0 0.0
    %1449 = vmatpush2.msra.mxu0 0.0
    %1450 = vmatprep.mubr.f32.mxu0 0.0
    %1451 = vmatmul.mubr.f32.gmra.mxu0 %v1381
    %v1452 = vpop.f32.mrf.mxu0
    %v1453 = vadd.f32 %v1372, %v1452
    %v1454 = vpop.f32.mrf.mxu0
    %1455 = vmatprep.mubr.f32.mxu0 0.0
    %1456 = vmatmul.mubr.f32.gmra.mxu0 %v1384
    %v1457 = vpop.f32.mrf.mxu0
    %v1458 = vadd.f32 %v1377, %v1457
    %v1459 = vpop.f32.mrf.mxu0
    %1460 = vdwg.mxu0
    %1461 = vrot.lane.b32.xlu0 %v425, 112
    %v1462 = vpop.permute.xlu0 %1461
    %1463 = vrot.lane.b32.xlu0 %v504, 112
    %v1464 = vpop.permute.xlu0 %1463
    %v1465 = vsel %vm638, %v1462, 0
    %v1467 = vsel %vm638, %v1464, 0
    %1469 = vmatprep.subr.mxu0 0.0
    %1470 = vmatpush1.xpose.msra.mxu0 0.0
    %1471 = vmatprep.subr.mxu0 0.0
    %1472 = vmatpush1.xpose.msra.mxu0 0.0
    %1473 = vmatprep.subr.mxu0 0.0
    %1474 = vmatpush1.xpose.msra.mxu0 0.0
    %1475 = vmatprep.subr.mxu0 0.0
    %1476 = vmatpush1.xpose.msra.mxu0 0.0
    %1477 = vmatprep.subr.mxu0 0.0
    %1478 = vmatpush1.xpose.msra.mxu0 0.0
    %1479 = vmatprep.subr.mxu0 0.0
    %1480 = vmatpush1.xpose.msra.mxu0 0.0
    %1481 = vmatprep.subr.mxu0 0.0
    %1482 = vmatpush1.xpose.msra.mxu0 0.0
    %1483 = vmatprep.subr.mxu0 0.0
    %1484 = vmatpush1.xpose.msra.mxu0 0.0
    %1485 = vmatprep.subr.mxu0 0.0
    %1486 = vmatpush1.xpose.msra.mxu0 0.0
    %1487 = vmatprep.subr.mxu0 0.0
    %1488 = vmatpush1.xpose.msra.mxu0 0.0
    %1489 = vmatprep.subr.mxu0 0.0
    %1490 = vmatpush1.xpose.msra.mxu0 0.0
    %1491 = vmatprep.subr.mxu0 0.0
    %1492 = vmatpush1.xpose.msra.mxu0 0.0
    %1493 = vmatprep.subr.mxu0 0.0
    %1494 = vmatpush1.xpose.msra.mxu0 0.0
    %1495 = vmatprep.subr.mxu0 0.0
    %1496 = vmatpush1.xpose.msra.mxu0 0.0
    %1497 = vmatprep.subr.mxu0 0.0
    %1498 = vmatpush1.xpose.msra.mxu0 0.0
    %1499 = vmatprep.subr.mxu0 0.0
    %1500 = vmatpush1.xpose.msra.mxu0 %v1467
    %1501 = vmatprep.subr.mxu0 0.0
    %1502 = vmatpush2.xpose.msra.mxu0 0.0
    %1503 = vmatprep.subr.mxu0 0.0
    %1504 = vmatpush2.xpose.msra.mxu0 0.0
    %1505 = vmatprep.subr.mxu0 0.0
    %1506 = vmatpush2.xpose.msra.mxu0 0.0
    %1507 = vmatprep.subr.mxu0 0.0
    %1508 = vmatpush2.xpose.msra.mxu0 0.0
    %1509 = vmatprep.subr.mxu0 0.0
    %1510 = vmatpush2.xpose.msra.mxu0 0.0
    %1511 = vmatprep.subr.mxu0 0.0
    %1512 = vmatpush2.xpose.msra.mxu0 0.0
    %1513 = vmatprep.subr.mxu0 0.0
    %1514 = vmatpush2.xpose.msra.mxu0 0.0
    %1515 = vmatprep.subr.mxu0 0.0
    %1516 = vmatpush2.xpose.msra.mxu0 0.0
    %1517 = vmatprep.subr.mxu0 0.0
    %1518 = vmatpush2.xpose.msra.mxu0 0.0
    %1519 = vmatprep.subr.mxu0 0.0
    %1520 = vmatpush2.xpose.msra.mxu0 0.0
    %1521 = vmatprep.subr.mxu0 0.0
    %1522 = vmatpush2.xpose.msra.mxu0 0.0
    %1523 = vmatprep.subr.mxu0 0.0
    %1524 = vmatpush2.xpose.msra.mxu0 0.0
    %1525 = vmatprep.subr.mxu0 0.0
    %1526 = vmatpush2.xpose.msra.mxu0 0.0
    %1527 = vmatprep.subr.mxu0 0.0
    %1528 = vmatpush2.xpose.msra.mxu0 0.0
    %1529 = vmatprep.subr.mxu0 0.0
    %1530 = vmatpush2.xpose.msra.mxu0 0.0
    %1531 = vmatprep.subr.mxu0 0.0
    %1532 = vmatpush2.xpose.msra.mxu0 0.0
    %1533 = vmatprep.mubr.f32.mxu0 0.0
    %1534 = vmatmul.mubr.f32.gmra.mxu0 %v1465
    %v1535 = vpop.f32.mrf.mxu0
    %v1536 = vadd.f32 0.0, %v1535
    %v1537 = vpop.f32.mrf.mxu0
    %1538 = vdwg.mxu0
    %1539 = vrot.lane.b32.xlu0 %v430, 112
    %v1540 = vpop.permute.xlu0 %1539
    %1541 = vrot.lane.b32.xlu0 %v509, 112
    %v1542 = vpop.permute.xlu0 %1541
    %v1543 = vsel %vm638, %v1540, 0
    %v1545 = vsel %vm638, %v1542, 0
    %1547 = vmatprep.subr.mxu0 0.0
    %1548 = vmatpush1.xpose.msra.mxu0 0.0
    %1549 = vmatprep.subr.mxu0 0.0
    %1550 = vmatpush1.xpose.msra.mxu0 0.0
    %1551 = vmatprep.subr.mxu0 0.0
    %1552 = vmatpush1.xpose.msra.mxu0 0.0
    %1553 = vmatprep.subr.mxu0 0.0
    %1554 = vmatpush1.xpose.msra.mxu0 0.0
    %1555 = vmatprep.subr.mxu0 0.0
    %1556 = vmatpush1.xpose.msra.mxu0 0.0
    %1557 = vmatprep.subr.mxu0 0.0
    %1558 = vmatpush1.xpose.msra.mxu0 0.0
    %1559 = vmatprep.subr.mxu0 0.0
    %1560 = vmatpush1.xpose.msra.mxu0 0.0
    %1561 = vmatprep.subr.mxu0 0.0
    %1562 = vmatpush1.xpose.msra.mxu0 0.0
    %1563 = vmatprep.subr.mxu0 0.0
    %1564 = vmatpush1.xpose.msra.mxu0 0.0
    %1565 = vmatprep.subr.mxu0 0.0
    %1566 = vmatpush1.xpose.msra.mxu0 0.0
    %1567 = vmatprep.subr.mxu0 0.0
    %1568 = vmatpush1.xpose.msra.mxu0 0.0
    %1569 = vmatprep.subr.mxu0 0.0
    %1570 = vmatpush1.xpose.msra.mxu0 0.0
    %1571 = vmatprep.subr.mxu0 0.0
    %1572 = vmatpush1.xpose.msra.mxu0 0.0
    %1573 = vmatprep.subr.mxu0 0.0
    %1574 = vmatpush1.xpose.msra.mxu0 0.0
    %1575 = vmatprep.subr.mxu0 0.0
    %1576 = vmatpush1.xpose.msra.mxu0 0.0
    %1577 = vmatprep.subr.mxu0 0.0
    %1578 = vmatpush1.xpose.msra.mxu0 %v1545
    %1579 = vmatprep.subr.mxu0 0.0
    %1580 = vmatpush2.xpose.msra.mxu0 0.0
    %1581 = vmatprep.subr.mxu0 0.0
    %1582 = vmatpush2.xpose.msra.mxu0 0.0
    %1583 = vmatprep.subr.mxu0 0.0
    %1584 = vmatpush2.xpose.msra.mxu0 0.0
    %1585 = vmatprep.subr.mxu0 0.0
    %1586 = vmatpush2.xpose.msra.mxu0 0.0
    %1587 = vmatprep.subr.mxu0 0.0
    %1588 = vmatpush2.xpose.msra.mxu0 0.0
    %1589 = vmatprep.subr.mxu0 0.0
    %1590 = vmatpush2.xpose.msra.mxu0 0.0
    %1591 = vmatprep.subr.mxu0 0.0
    %1592 = vmatpush2.xpose.msra.mxu0 0.0
    %1593 = vmatprep.subr.mxu0 0.0
    %1594 = vmatpush2.xpose.msra.mxu0 0.0
    %1595 = vmatprep.subr.mxu0 0.0
    %1596 = vmatpush2.xpose.msra.mxu0 0.0
    %1597 = vmatprep.subr.mxu0 0.0
    %1598 = vmatpush2.xpose.msra.mxu0 0.0
    %1599 = vmatprep.subr.mxu0 0.0
    %1600 = vmatpush2.xpose.msra.mxu0 0.0
    %1601 = vmatprep.subr.mxu0 0.0
    %1602 = vmatpush2.xpose.msra.mxu0 0.0
    %1603 = vmatprep.subr.mxu0 0.0
    %1604 = vmatpush2.xpose.msra.mxu0 0.0
    %1605 = vmatprep.subr.mxu0 0.0
    %1606 = vmatpush2.xpose.msra.mxu0 0.0
    %1607 = vmatprep.subr.mxu0 0.0
    %1608 = vmatpush2.xpose.msra.mxu0 0.0
    %1609 = vmatprep.subr.mxu0 0.0
    %1610 = vmatpush2.xpose.msra.mxu0 0.0
    %1611 = vmatprep.mubr.f32.mxu0 0.0
    %1612 = vmatmul.mubr.f32.gmra.mxu0 %v1543
    %v1613 = vpop.f32.mrf.mxu0
    %v1614 = vadd.f32 0.0, %v1613
    %v1615 = vpop.f32.mrf.mxu0
    %1616 = vdwg.mxu0
    %v1617 = vmul.f32 %v1536, 0.35355338
    %v1618 = vmul.f32 %v1614, 0.35355338
    %v1619 = vsel %vm632, %v1617, -1e+09
    %v1620 = vsel %vm633, %v1618, -1e+09
    %v1621 = vsel %vm638, %v1619, -inf
    %1622 = vmax.xlane.f32.xlu0 %v1621
    %v1623 = vpop.xlane.xlu0 %1622
    %v1624 = vsel %vm638, %v1620, -inf
    %1625 = vmax.xlane.f32.xlu0 %v1624
    %v1626 = vpop.xlane.xlu0 %1625
    %v1627 = vsub.f32 %v1619, %v1623
    %v1628 = vsub.f32 %v1620, %v1626
    %v1629 = vmul.f32 %v1627, 1.442695
    %v1630 = vpow.pop %v1629
    %v1631 = vmul.f32 %v1628, 1.442695
    %v1632 = vpow.pop %v1631
    %v1633 = vsel %vm638, %v1630, 0.0
    %1634 = vadd.xlane.f32.xlu0 %v1633
    %v1635 = vpop.xlane.xlu0 %1634
    %v1636 = vsel %vm638, %v1632, 0.0
    %1637 = vadd.xlane.f32.xlu0 %v1636
    %v1638 = vpop.xlane.xlu0 %1637
    %v1639 = vrcp.pop %v1635
    %v1640 = vrcp.pop %v1638
    %v1641 = vmul.f32 %v1630, %v1639
    %v1642 = vmul.f32 %v1632, %v1640
    %1643 = vrot.lane.b32.xlu0 %v583, 112
    %v1644 = vpop.permute.xlu0 %1643
    %v1647 = vsel %vm638, %v1641, 0
    %1649 = vmatprep.subr.mxu0 0.0
    %1650 = vmatpush1.msra.mxu0 0.0
    %1651 = vmatprep.subr.mxu0 0.0
    %1652 = vmatpush1.msra.mxu0 0.0
    %1653 = vmatprep.subr.mxu0 0.0
    %1654 = vmatpush1.msra.mxu0 0.0
    %1655 = vmatprep.subr.mxu0 0.0
    %1656 = vmatpush1.msra.mxu0 0.0
    %1657 = vmatprep.subr.mxu0 0.0
    %1658 = vmatpush1.msra.mxu0 0.0
    %1659 = vmatprep.subr.mxu0 0.0
    %1660 = vmatpush1.msra.mxu0 0.0
    %1661 = vmatprep.subr.mxu0 0.0
    %1662 = vmatpush1.msra.mxu0 0.0
    %1663 = vmatprep.subr.mxu0 0.0
    %1664 = vmatpush1.msra.mxu0 0.0
    %1665 = vmatprep.subr.mxu0 0.0
    %1666 = vmatpush1.msra.mxu0 0.0
    %1667 = vmatprep.subr.mxu0 0.0
    %1668 = vmatpush1.msra.mxu0 0.0
    %1669 = vmatprep.subr.mxu0 0.0
    %1670 = vmatpush1.msra.mxu0 0.0
    %1671 = vmatprep.subr.mxu0 0.0
    %1672 = vmatpush1.msra.mxu0 0.0
    %1673 = vmatprep.subr.mxu0 0.0
    %1674 = vmatpush1.msra.mxu0 0.0
    %1675 = vmatprep.subr.mxu0 0.0
    %1676 = vmatpush1.msra.mxu0 0.0
    %1677 = vmatprep.subr.mxu0 0.0
    %1678 = vmatpush1.msra.mxu0 0.0
    %1679 = vmatprep.subr.mxu0 0.0
    %1680 = vmatpush1.msra.mxu0 %v1644
    %1681 = vmatprep.subr.mxu0 0.0
    %1682 = vmatpush2.msra.mxu0 0.0
    %1683 = vmatprep.subr.mxu0 0.0
    %1684 = vmatpush2.msra.mxu0 0.0
    %1685 = vmatprep.subr.mxu0 0.0
    %1686 = vmatpush2.msra.mxu0 0.0
    %1687 = vmatprep.subr.mxu0 0.0
    %1688 = vmatpush2.msra.mxu0 0.0
    %1689 = vmatprep.subr.mxu0 0.0
    %1690 = vmatpush2.msra.mxu0 0.0
    %1691 = vmatprep.subr.mxu0 0.0
    %1692 = vmatpush2.msra.mxu0 0.0
    %1693 = vmatprep.subr.mxu0 0.0
    %1694 = vmatpush2.msra.mxu0 0.0
    %1695 = vmatprep.subr.mxu0 0.0
    %1696 = vmatpush2.msra.mxu0 0.0
    %1697 = vmatprep.subr.mxu0 0.0
    %1698 = vmatpush2.msra.mxu0 0.0
    %1699 = vmatprep.subr.mxu0 0.0
    %1700 = vmatpush2.msra.mxu0 0.0
    %1701 = vmatprep.subr.mxu0 0.0
    %1702 = vmatpush2.msra.mxu0 0.0
    %1703 = vmatprep.subr.mxu0 0.0
    %1704 = vmatpush2.msra.mxu0 0.0
    %1705 = vmatprep.subr.mxu0 0.0
    %1706 = vmatpush2.msra.mxu0 0.0
    %1707 = vmatprep.subr.mxu0 0.0
    %1708 = vmatpush2.msra.mxu0 0.0
    %1709 = vmatprep.subr.mxu0 0.0
    %1710 = vmatpush2.msra.mxu0 0.0
    %1711 = vmatprep.subr.mxu0 0.0
    %1712 = vmatpush2.msra.mxu0 0.0
    %1713 = vmatprep.mubr.f32.mxu0 0.0
    %1714 = vmatmul.mubr.f32.gmra.mxu0 %v1647
    %v1715 = vpop.f32.mrf.mxu0
    %v1716 = vadd.f32 0.0, %v1715
    %v1717 = vpop.f32.mrf.mxu0
    %1718 = vdwg.mxu0
    %1719 = vrot.lane.b32.xlu0 %v588, 112
    %v1720 = vpop.permute.xlu0 %1719
    %v1723 = vsel %vm638, %v1642, 0
    %1725 = vmatprep.subr.mxu0 0.0
    %1726 = vmatpush1.msra.mxu0 0.0
    %1727 = vmatprep.subr.mxu0 0.0
    %1728 = vmatpush1.msra.mxu0 0.0
    %1729 = vmatprep.subr.mxu0 0.0
    %1730 = vmatpush1.msra.mxu0 0.0
    %1731 = vmatprep.subr.mxu0 0.0
    %1732 = vmatpush1.msra.mxu0 0.0
    %1733 = vmatprep.subr.mxu0 0.0
    %1734 = vmatpush1.msra.mxu0 0.0
    %1735 = vmatprep.subr.mxu0 0.0
    %1736 = vmatpush1.msra.mxu0 0.0
    %1737 = vmatprep.subr.mxu0 0.0
    %1738 = vmatpush1.msra.mxu0 0.0
    %1739 = vmatprep.subr.mxu0 0.0
    %1740 = vmatpush1.msra.mxu0 0.0
    %1741 = vmatprep.subr.mxu0 0.0
    %1742 = vmatpush1.msra.mxu0 0.0
    %1743 = vmatprep.subr.mxu0 0.0
    %1744 = vmatpush1.msra.mxu0 0.0
    %1745 = vmatprep.subr.mxu0 0.0
    %1746 = vmatpush1.msra.mxu0 0.0
    %1747 = vmatprep.subr.mxu0 0.0
    %1748 = vmatpush1.msra.mxu0 0.0
    %1749 = vmatprep.subr.mxu0 0.0
    %1750 = vmatpush1.msra.mxu0 0.0
    %1751 = vmatprep.subr.mxu0 0.0
    %1752 = vmatpush1.msra.mxu0 0.0
    %1753 = vmatprep.subr.mxu0 0.0
    %1754 = vmatpush1.msra.mxu0 0.0
    %1755 = vmatprep.subr.mxu0 0.0
    %1756 = vmatpush1.msra.mxu0 %v1720
    %1757 = vmatprep.subr.mxu0 0.0
    %1758 = vmatpush2.msra.mxu0 0.0
    %1759 = vmatprep.subr.mxu0 0.0
    %1760 = vmatpush2.msra.mxu0 0.0
    %1761 = vmatprep.subr.mxu0 0.0
    %1762 = vmatpush2.msra.mxu0 0.0
    %1763 = vmatprep.subr.mxu0 0.0
    %1764 = vmatpush2.msra.mxu0 0.0
    %1765 = vmatprep.subr.mxu0 0.0
    %1766 = vmatpush2.msra.mxu0 0.0
    %1767 = vmatprep.subr.mxu0 0.0
    %1768 = vmatpush2.msra.mxu0 0.0
    %1769 = vmatprep.subr.mxu0 0.0
    %1770 = vmatpush2.msra.mxu0 0.0
    %1771 = vmatprep.subr.mxu0 0.0
    %1772 = vmatpush2.msra.mxu0 0.0
    %1773 = vmatprep.subr.mxu0 0.0
    %1774 = vmatpush2.msra.mxu0 0.0
    %1775 = vmatprep.subr.mxu0 0.0
    %1776 = vmatpush2.msra.mxu0 0.0
    %1777 = vmatprep.subr.mxu0 0.0
    %1778 = vmatpush2.msra.mxu0 0.0
    %1779 = vmatprep.subr.mxu0 0.0
    %1780 = vmatpush2.msra.mxu0 0.0
    %1781 = vmatprep.subr.mxu0 0.0
    %1782 = vmatpush2.msra.mxu0 0.0
    %1783 = vmatprep.subr.mxu0 0.0
    %1784 = vmatpush2.msra.mxu0 0.0
    %1785 = vmatprep.subr.mxu0 0.0
    %1786 = vmatpush2.msra.mxu0 0.0
    %1787 = vmatprep.subr.mxu0 0.0
    %1788 = vmatpush2.msra.mxu0 0.0
    %1789 = vmatprep.mubr.f32.mxu0 0.0
    %1790 = vmatmul.mubr.f32.gmra.mxu0 %v1723
    %v1791 = vpop.f32.mrf.mxu0
    %v1792 = vadd.f32 0.0, %v1791
    %v1793 = vpop.f32.mrf.mxu0
    %1794 = vdwg.mxu0
    %v1796 = vsel %vm638, %v1716, 0
    %v1799 = vsel %vm638, %v1792, 0
    %1801 = vmatprep.subr.mxu0 0.0
    %1802 = vmatpush1.msra.mxu0 0.0
    %1803 = vmatprep.subr.mxu0 0.0
    %1804 = vmatpush1.msra.mxu0 0.0
    %1805 = vmatprep.subr.mxu0 0.0
    %1806 = vmatpush1.msra.mxu0 0.0
    %1807 = vmatprep.subr.mxu0 0.0
    %1808 = vmatpush1.msra.mxu0 0.0
    %1809 = vmatprep.subr.mxu0 0.0
    %1810 = vmatpush1.msra.mxu0 0.0
    %1811 = vmatprep.subr.mxu0 0.0
    %1812 = vmatpush1.msra.mxu0 0.0
    %1813 = vmatprep.subr.mxu0 0.0
    %1814 = vmatpush1.msra.mxu0 0.0
    %1815 = vmatprep.subr.mxu0 0.0
    %1816 = vmatpush1.msra.mxu0 0.0
    %1817 = vmatprep.subr.mxu0 0.0
    %1818 = vmatpush1.msra.mxu0 0.0
    %1819 = vmatprep.subr.mxu0 0.0
    %1820 = vmatpush1.msra.mxu0 0.0
    %1821 = vmatprep.subr.mxu0 0.0
    %1822 = vmatpush1.msra.mxu0 0.0
    %1823 = vmatprep.subr.mxu0 0.0
    %1824 = vmatpush1.msra.mxu0 0.0
    %1825 = vmatprep.subr.mxu0 0.0
    %1826 = vmatpush1.msra.mxu0 0.0
    %1827 = vmatprep.subr.mxu0 0.0
    %1828 = vmatpush1.msra.mxu0 0.0
    %1829 = vmatprep.subr.mxu0 0.0
    %1830 = vmatpush1.msra.mxu0 0.0
    %1831 = vmatprep.subr.mxu0 0.0
    %1832 = vmatpush1.msra.mxu0 %v636
    %1833 = vmatprep.subr.mxu0 0.0
    %1834 = vmatpush2.msra.mxu0 0.0
    %1835 = vmatprep.subr.mxu0 0.0
    %1836 = vmatpush2.msra.mxu0 0.0
    %1837 = vmatprep.subr.mxu0 0.0
    %1838 = vmatpush2.msra.mxu0 0.0
    %1839 = vmatprep.subr.mxu0 0.0
    %1840 = vmatpush2.msra.mxu0 0.0
    %1841 = vmatprep.subr.mxu0 0.0
    %1842 = vmatpush2.msra.mxu0 0.0
    %1843 = vmatprep.subr.mxu0 0.0
    %1844 = vmatpush2.msra.mxu0 0.0
    %1845 = vmatprep.subr.mxu0 0.0
    %1846 = vmatpush2.msra.mxu0 0.0
    %1847 = vmatprep.subr.mxu0 0.0
    %1848 = vmatpush2.msra.mxu0 0.0
    %1849 = vmatprep.subr.mxu0 0.0
    %1850 = vmatpush2.msra.mxu0 0.0
    %1851 = vmatprep.subr.mxu0 0.0
    %1852 = vmatpush2.msra.mxu0 0.0
    %1853 = vmatprep.subr.mxu0 0.0
    %1854 = vmatpush2.msra.mxu0 0.0
    %1855 = vmatprep.subr.mxu0 0.0
    %1856 = vmatpush2.msra.mxu0 0.0
    %1857 = vmatprep.subr.mxu0 0.0
    %1858 = vmatpush2.msra.mxu0 0.0
    %1859 = vmatprep.subr.mxu0 0.0
    %1860 = vmatpush2.msra.mxu0 0.0
    %1861 = vmatprep.subr.mxu0 0.0
    %1862 = vmatpush2.msra.mxu0 0.0
    %1863 = vmatprep.subr.mxu0 0.0
    %1864 = vmatpush2.msra.mxu0 0.0
    %1865 = vmatprep.mubr.f32.mxu0 0.0
    %1866 = vmatmul.mubr.f32.gmra.mxu0 %v1796
    %v1867 = vpop.f32.mrf.mxu0
    %v1868 = vadd.f32 0.0, %v1867
    %v1869 = vpop.f32.mrf.mxu0
    %1870 = vmatprep.mubr.f32.mxu0 0.0
    %1871 = vmatmul.mubr.f32.gmra.mxu0 %v1799
    %v1872 = vpop.f32.mrf.mxu0
    %v1873 = vadd.f32 0.0, %v1872
    %v1874 = vpop.f32.mrf.mxu0
    %1875 = vdwg.mxu0
    %v1876 = vadd.f32 %v1453, %v1868
    %v1877 = vadd.f32 %v1458, %v1873
    %1878 = vrot.lane.b32.xlu0 %v425, 104
    %v1879 = vpop.permute.xlu0 %1878
    %1880 = vrot.lane.b32.xlu0 %v504, 104
    %v1881 = vpop.permute.xlu0 %1880
    %v1882 = vsel %vm638, %v1879, 0
    %v1884 = vsel %vm638, %v1881, 0
    %1886 = vmatprep.subr.mxu0 0.0
    %1887 = vmatpush1.xpose.msra.mxu0 0.0
    %1888 = vmatprep.subr.mxu0 0.0
    %1889 = vmatpush1.xpose.msra.mxu0 0.0
    %1890 = vmatprep.subr.mxu0 0.0
    %1891 = vmatpush1.xpose.msra.mxu0 0.0
    %1892 = vmatprep.subr.mxu0 0.0
    %1893 = vmatpush1.xpose.msra.mxu0 0.0
    %1894 = vmatprep.subr.mxu0 0.0
    %1895 = vmatpush1.xpose.msra.mxu0 0.0
    %1896 = vmatprep.subr.mxu0 0.0
    %1897 = vmatpush1.xpose.msra.mxu0 0.0
    %1898 = vmatprep.subr.mxu0 0.0
    %1899 = vmatpush1.xpose.msra.mxu0 0.0
    %1900 = vmatprep.subr.mxu0 0.0
    %1901 = vmatpush1.xpose.msra.mxu0 0.0
    %1902 = vmatprep.subr.mxu0 0.0
    %1903 = vmatpush1.xpose.msra.mxu0 0.0
    %1904 = vmatprep.subr.mxu0 0.0
    %1905 = vmatpush1.xpose.msra.mxu0 0.0
    %1906 = vmatprep.subr.mxu0 0.0
    %1907 = vmatpush1.xpose.msra.mxu0 0.0
    %1908 = vmatprep.subr.mxu0 0.0
    %1909 = vmatpush1.xpose.msra.mxu0 0.0
    %1910 = vmatprep.subr.mxu0 0.0
    %1911 = vmatpush1.xpose.msra.mxu0 0.0
    %1912 = vmatprep.subr.mxu0 0.0
    %1913 = vmatpush1.xpose.msra.mxu0 0.0
    %1914 = vmatprep.subr.mxu0 0.0
    %1915 = vmatpush1.xpose.msra.mxu0 0.0
    %1916 = vmatprep.subr.mxu0 0.0
    %1917 = vmatpush1.xpose.msra.mxu0 %v1884
    %1918 = vmatprep.subr.mxu0 0.0
    %1919 = vmatpush2.xpose.msra.mxu0 0.0
    %1920 = vmatprep.subr.mxu0 0.0
    %1921 = vmatpush2.xpose.msra.mxu0 0.0
    %1922 = vmatprep.subr.mxu0 0.0
    %1923 = vmatpush2.xpose.msra.mxu0 0.0
    %1924 = vmatprep.subr.mxu0 0.0
    %1925 = vmatpush2.xpose.msra.mxu0 0.0
    %1926 = vmatprep.subr.mxu0 0.0
    %1927 = vmatpush2.xpose.msra.mxu0 0.0
    %1928 = vmatprep.subr.mxu0 0.0
    %1929 = vmatpush2.xpose.msra.mxu0 0.0
    %1930 = vmatprep.subr.mxu0 0.0
    %1931 = vmatpush2.xpose.msra.mxu0 0.0
    %1932 = vmatprep.subr.mxu0 0.0
    %1933 = vmatpush2.xpose.msra.mxu0 0.0
    %1934 = vmatprep.subr.mxu0 0.0
    %1935 = vmatpush2.xpose.msra.mxu0 0.0
    %1936 = vmatprep.subr.mxu0 0.0
    %1937 = vmatpush2.xpose.msra.mxu0 0.0
    %1938 = vmatprep.subr.mxu0 0.0
    %1939 = vmatpush2.xpose.msra.mxu0 0.0
    %1940 = vmatprep.subr.mxu0 0.0
    %1941 = vmatpush2.xpose.msra.mxu0 0.0
    %1942 = vmatprep.subr.mxu0 0.0
    %1943 = vmatpush2.xpose.msra.mxu0 0.0
    %1944 = vmatprep.subr.mxu0 0.0
    %1945 = vmatpush2.xpose.msra.mxu0 0.0
    %1946 = vmatprep.subr.mxu0 0.0
    %1947 = vmatpush2.xpose.msra.mxu0 0.0
    %1948 = vmatprep.subr.mxu0 0.0
    %1949 = vmatpush2.xpose.msra.mxu0 0.0
    %1950 = vmatprep.mubr.f32.mxu0 0.0
    %1951 = vmatmul.mubr.f32.gmra.mxu0 %v1882
    %v1952 = vpop.f32.mrf.mxu0
    %v1953 = vadd.f32 0.0, %v1952
    %v1954 = vpop.f32.mrf.mxu0
    %1955 = vdwg.mxu0
    %1956 = vrot.lane.b32.xlu0 %v430, 104
    %v1957 = vpop.permute.xlu0 %1956
    %1958 = vrot.lane.b32.xlu0 %v509, 104
    %v1959 = vpop.permute.xlu0 %1958
    %v1960 = vsel %vm638, %v1957, 0
    %v1962 = vsel %vm638, %v1959, 0
    %1964 = vmatprep.subr.mxu0 0.0
    %1965 = vmatpush1.xpose.msra.mxu0 0.0
    %1966 = vmatprep.subr.mxu0 0.0
    %1967 = vmatpush1.xpose.msra.mxu0 0.0
    %1968 = vmatprep.subr.mxu0 0.0
    %1969 = vmatpush1.xpose.msra.mxu0 0.0
    %1970 = vmatprep.subr.mxu0 0.0
    %1971 = vmatpush1.xpose.msra.mxu0 0.0
    %1972 = vmatprep.subr.mxu0 0.0
    %1973 = vmatpush1.xpose.msra.mxu0 0.0
    %1974 = vmatprep.subr.mxu0 0.0
    %1975 = vmatpush1.xpose.msra.mxu0 0.0
    %1976 = vmatprep.subr.mxu0 0.0
    %1977 = vmatpush1.xpose.msra.mxu0 0.0
    %1978 = vmatprep.subr.mxu0 0.0
    %1979 = vmatpush1.xpose.msra.mxu0 0.0
    %1980 = vmatprep.subr.mxu0 0.0
    %1981 = vmatpush1.xpose.msra.mxu0 0.0
    %1982 = vmatprep.subr.mxu0 0.0
    %1983 = vmatpush1.xpose.msra.mxu0 0.0
    %1984 = vmatprep.subr.mxu0 0.0
    %1985 = vmatpush1.xpose.msra.mxu0 0.0
    %1986 = vmatprep.subr.mxu0 0.0
    %1987 = vmatpush1.xpose.msra.mxu0 0.0
    %1988 = vmatprep.subr.mxu0 0.0
    %1989 = vmatpush1.xpose.msra.mxu0 0.0
    %1990 = vmatprep.subr.mxu0 0.0
    %1991 = vmatpush1.xpose.msra.mxu0 0.0
    %1992 = vmatprep.subr.mxu0 0.0
    %1993 = vmatpush1.xpose.msra.mxu0 0.0
    %1994 = vmatprep.subr.mxu0 0.0
    %1995 = vmatpush1.xpose.msra.mxu0 %v1962
    %1996 = vmatprep.subr.mxu0 0.0
    %1997 = vmatpush2.xpose.msra.mxu0 0.0
    %1998 = vmatprep.subr.mxu0 0.0
    %1999 = vmatpush2.xpose.msra.mxu0 0.0
    %2000 = vmatprep.subr.mxu0 0.0
    %2001 = vmatpush2.xpose.msra.mxu0 0.0
    %2002 = vmatprep.subr.mxu0 0.0
    %2003 = vmatpush2.xpose.msra.mxu0 0.0
    %2004 = vmatprep.subr.mxu0 0.0
    %2005 = vmatpush2.xpose.msra.mxu0 0.0
    %2006 = vmatprep.subr.mxu0 0.0
    %2007 = vmatpush2.xpose.msra.mxu0 0.0
    %2008 = vmatprep.subr.mxu0 0.0
    %2009 = vmatpush2.xpose.msra.mxu0 0.0
    %2010 = vmatprep.subr.mxu0 0.0
    %2011 = vmatpush2.xpose.msra.mxu0 0.0
    %2012 = vmatprep.subr.mxu0 0.0
    %2013 = vmatpush2.xpose.msra.mxu0 0.0
    %2014 = vmatprep.subr.mxu0 0.0
    %2015 = vmatpush2.xpose.msra.mxu0 0.0
    %2016 = vmatprep.subr.mxu0 0.0
    %2017 = vmatpush2.xpose.msra.mxu0 0.0
    %2018 = vmatprep.subr.mxu0 0.0
    %2019 = vmatpush2.xpose.msra.mxu0 0.0
    %2020 = vmatprep.subr.mxu0 0.0
    %2021 = vmatpush2.xpose.msra.mxu0 0.0
    %2022 = vmatprep.subr.mxu0 0.0
    %2023 = vmatpush2.xpose.msra.mxu0 0.0
    %2024 = vmatprep.subr.mxu0 0.0
    %2025 = vmatpush2.xpose.msra.mxu0 0.0
    %2026 = vmatprep.subr.mxu0 0.0
    %2027 = vmatpush2.xpose.msra.mxu0 0.0
    %2028 = vmatprep.mubr.f32.mxu0 0.0
    %2029 = vmatmul.mubr.f32.gmra.mxu0 %v1960
    %v2030 = vpop.f32.mrf.mxu0
    %v2031 = vadd.f32 0.0, %v2030
    %v2032 = vpop.f32.mrf.mxu0
    %2033 = vdwg.mxu0
    %v2034 = vmul.f32 %v1953, 0.35355338
    %v2035 = vmul.f32 %v2031, 0.35355338
    %v2036 = vsel %vm632, %v2034, -1e+09
    %v2037 = vsel %vm633, %v2035, -1e+09
    %v2038 = vsel %vm638, %v2036, -inf
    %2039 = vmax.xlane.f32.xlu0 %v2038
    %v2040 = vpop.xlane.xlu0 %2039
    %v2041 = vsel %vm638, %v2037, -inf
    %2042 = vmax.xlane.f32.xlu0 %v2041
    %v2043 = vpop.xlane.xlu0 %2042
    %v2044 = vsub.f32 %v2036, %v2040
    %v2045 = vsub.f32 %v2037, %v2043
    %v2046 = vmul.f32 %v2044, 1.442695
    %v2047 = vpow.pop %v2046
    %v2048 = vmul.f32 %v2045, 1.442695
    %v2049 = vpow.pop %v2048
    %v2050 = vsel %vm638, %v2047, 0.0
    %2051 = vadd.xlane.f32.xlu0 %v2050
    %v2052 = vpop.xlane.xlu0 %2051
    %v2053 = vsel %vm638, %v2049, 0.0
    %2054 = vadd.xlane.f32.xlu0 %v2053
    %v2055 = vpop.xlane.xlu0 %2054
    %v2056 = vrcp.pop %v2052
    %v2057 = vrcp.pop %v2055
    %v2058 = vmul.f32 %v2047, %v2056
    %v2059 = vmul.f32 %v2049, %v2057
    %2060 = vrot.lane.b32.xlu0 %v583, 104
    %v2061 = vpop.permute.xlu0 %2060
    %v2064 = vsel %vm638, %v2058, 0
    %2066 = vmatprep.subr.mxu0 0.0
    %2067 = vmatpush1.msra.mxu0 0.0
    %2068 = vmatprep.subr.mxu0 0.0
    %2069 = vmatpush1.msra.mxu0 0.0
    %2070 = vmatprep.subr.mxu0 0.0
    %2071 = vmatpush1.msra.mxu0 0.0
    %2072 = vmatprep.subr.mxu0 0.0
    %2073 = vmatpush1.msra.mxu0 0.0
    %2074 = vmatprep.subr.mxu0 0.0
    %2075 = vmatpush1.msra.mxu0 0.0
    %2076 = vmatprep.subr.mxu0 0.0
    %2077 = vmatpush1.msra.mxu0 0.0
    %2078 = vmatprep.subr.mxu0 0.0
    %2079 = vmatpush1.msra.mxu0 0.0
    %2080 = vmatprep.subr.mxu0 0.0
    %2081 = vmatpush1.msra.mxu0 0.0
    %2082 = vmatprep.subr.mxu0 0.0
    %2083 = vmatpush1.msra.mxu0 0.0
    %2084 = vmatprep.subr.mxu0 0.0
    %2085 = vmatpush1.msra.mxu0 0.0
    %2086 = vmatprep.subr.mxu0 0.0
    %2087 = vmatpush1.msra.mxu0 0.0
    %2088 = vmatprep.subr.mxu0 0.0
    %2089 = vmatpush1.msra.mxu0 0.0
    %2090 = vmatprep.subr.mxu0 0.0
    %2091 = vmatpush1.msra.mxu0 0.0
    %2092 = vmatprep.subr.mxu0 0.0
    %2093 = vmatpush1.msra.mxu0 0.0
    %2094 = vmatprep.subr.mxu0 0.0
    %2095 = vmatpush1.msra.mxu0 0.0
    %2096 = vmatprep.subr.mxu0 0.0
    %2097 = vmatpush1.msra.mxu0 %v2061
    %2098 = vmatprep.subr.mxu0 0.0
    %2099 = vmatpush2.msra.mxu0 0.0
    %2100 = vmatprep.subr.mxu0 0.0
    %2101 = vmatpush2.msra.mxu0 0.0
    %2102 = vmatprep.subr.mxu0 0.0
    %2103 = vmatpush2.msra.mxu0 0.0
    %2104 = vmatprep.subr.mxu0 0.0
    %2105 = vmatpush2.msra.mxu0 0.0
    %2106 = vmatprep.subr.mxu0 0.0
    %2107 = vmatpush2.msra.mxu0 0.0
    %2108 = vmatprep.subr.mxu0 0.0
    %2109 = vmatpush2.msra.mxu0 0.0
    %2110 = vmatprep.subr.mxu0 0.0
    %2111 = vmatpush2.msra.mxu0 0.0
    %2112 = vmatprep.subr.mxu0 0.0
    %2113 = vmatpush2.msra.mxu0 0.0
    %2114 = vmatprep.subr.mxu0 0.0
    %2115 = vmatpush2.msra.mxu0 0.0
    %2116 = vmatprep.subr.mxu0 0.0
    %2117 = vmatpush2.msra.mxu0 0.0
    %2118 = vmatprep.subr.mxu0 0.0
    %2119 = vmatpush2.msra.mxu0 0.0
    %2120 = vmatprep.subr.mxu0 0.0
    %2121 = vmatpush2.msra.mxu0 0.0
    %2122 = vmatprep.subr.mxu0 0.0
    %2123 = vmatpush2.msra.mxu0 0.0
    %2124 = vmatprep.subr.mxu0 0.0
    %2125 = vmatpush2.msra.mxu0 0.0
    %2126 = vmatprep.subr.mxu0 0.0
    %2127 = vmatpush2.msra.mxu0 0.0
    %2128 = vmatprep.subr.mxu0 0.0
    %2129 = vmatpush2.msra.mxu0 0.0
    %2130 = vmatprep.mubr.f32.mxu0 0.0
    %2131 = vmatmul.mubr.f32.gmra.mxu0 %v2064
    %v2132 = vpop.f32.mrf.mxu0
    %v2133 = vadd.f32 0.0, %v2132
    %v2134 = vpop.f32.mrf.mxu0
    %2135 = vdwg.mxu0
    %2136 = vrot.lane.b32.xlu0 %v588, 104
    %v2137 = vpop.permute.xlu0 %2136
    %v2140 = vsel %vm638, %v2059, 0
    %2142 = vmatprep.subr.mxu0 0.0
    %2143 = vmatpush1.msra.mxu0 0.0
    %2144 = vmatprep.subr.mxu0 0.0
    %2145 = vmatpush1.msra.mxu0 0.0
    %2146 = vmatprep.subr.mxu0 0.0
    %2147 = vmatpush1.msra.mxu0 0.0
    %2148 = vmatprep.subr.mxu0 0.0
    %2149 = vmatpush1.msra.mxu0 0.0
    %2150 = vmatprep.subr.mxu0 0.0
    %2151 = vmatpush1.msra.mxu0 0.0
    %2152 = vmatprep.subr.mxu0 0.0
    %2153 = vmatpush1.msra.mxu0 0.0
    %2154 = vmatprep.subr.mxu0 0.0
    %2155 = vmatpush1.msra.mxu0 0.0
    %2156 = vmatprep.subr.mxu0 0.0
    %2157 = vmatpush1.msra.mxu0 0.0
    %2158 = vmatprep.subr.mxu0 0.0
    %2159 = vmatpush1.msra.mxu0 0.0
    %2160 = vmatprep.subr.mxu0 0.0
    %2161 = vmatpush1.msra.mxu0 0.0
    %2162 = vmatprep.subr.mxu0 0.0
    %2163 = vmatpush1.msra.mxu0 0.0
    %2164 = vmatprep.subr.mxu0 0.0
    %2165 = vmatpush1.msra.mxu0 0.0
    %2166 = vmatprep.subr.mxu0 0.0
    %2167 = vmatpush1.msra.mxu0 0.0
    %2168 = vmatprep.subr.mxu0 0.0
    %2169 = vmatpush1.msra.mxu0 0.0
    %2170 = vmatprep.subr.mxu0 0.0
    %2171 = vmatpush1.msra.mxu0 0.0
    %2172 = vmatprep.subr.mxu0 0.0
    %2173 = vmatpush1.msra.mxu0 %v2137
    %2174 = vmatprep.subr.mxu0 0.0
    %2175 = vmatpush2.msra.mxu0 0.0
    %2176 = vmatprep.subr.mxu0 0.0
    %2177 = vmatpush2.msra.mxu0 0.0
    %2178 = vmatprep.subr.mxu0 0.0
    %2179 = vmatpush2.msra.mxu0 0.0
    %2180 = vmatprep.subr.mxu0 0.0
    %2181 = vmatpush2.msra.mxu0 0.0
    %2182 = vmatprep.subr.mxu0 0.0
    %2183 = vmatpush2.msra.mxu0 0.0
    %2184 = vmatprep.subr.mxu0 0.0
    %2185 = vmatpush2.msra.mxu0 0.0
    %2186 = vmatprep.subr.mxu0 0.0
    %2187 = vmatpush2.msra.mxu0 0.0
    %2188 = vmatprep.subr.mxu0 0.0
    %2189 = vmatpush2.msra.mxu0 0.0
    %2190 = vmatprep.subr.mxu0 0.0
    %2191 = vmatpush2.msra.mxu0 0.0
    %2192 = vmatprep.subr.mxu0 0.0
    %2193 = vmatpush2.msra.mxu0 0.0
    %2194 = vmatprep.subr.mxu0 0.0
    %2195 = vmatpush2.msra.mxu0 0.0
    %2196 = vmatprep.subr.mxu0 0.0
    %2197 = vmatpush2.msra.mxu0 0.0
    %2198 = vmatprep.subr.mxu0 0.0
    %2199 = vmatpush2.msra.mxu0 0.0
    %2200 = vmatprep.subr.mxu0 0.0
    %2201 = vmatpush2.msra.mxu0 0.0
    %2202 = vmatprep.subr.mxu0 0.0
    %2203 = vmatpush2.msra.mxu0 0.0
    %2204 = vmatprep.subr.mxu0 0.0
    %2205 = vmatpush2.msra.mxu0 0.0
    %2206 = vmatprep.mubr.f32.mxu0 0.0
    %2207 = vmatmul.mubr.f32.gmra.mxu0 %v2140
    %v2208 = vpop.f32.mrf.mxu0
    %v2209 = vadd.f32 0.0, %v2208
    %v2210 = vpop.f32.mrf.mxu0
    %2211 = vdwg.mxu0
    %v2213 = vsel %vm638, %v2133, 0
    %v2216 = vsel %vm638, %v2209, 0
    %2218 = vmatprep.subr.mxu0 0.0
    %2219 = vmatpush1.msra.mxu0 0.0
    %2220 = vmatprep.subr.mxu0 0.0
    %2221 = vmatpush1.msra.mxu0 0.0
    %2222 = vmatprep.subr.mxu0 0.0
    %2223 = vmatpush1.msra.mxu0 0.0
    %2224 = vmatprep.subr.mxu0 0.0
    %2225 = vmatpush1.msra.mxu0 0.0
    %2226 = vmatprep.subr.mxu0 0.0
    %2227 = vmatpush1.msra.mxu0 0.0
    %2228 = vmatprep.subr.mxu0 0.0
    %2229 = vmatpush1.msra.mxu0 0.0
    %2230 = vmatprep.subr.mxu0 0.0
    %2231 = vmatpush1.msra.mxu0 0.0
    %2232 = vmatprep.subr.mxu0 0.0
    %2233 = vmatpush1.msra.mxu0 0.0
    %2234 = vmatprep.subr.mxu0 0.0
    %2235 = vmatpush1.msra.mxu0 0.0
    %2236 = vmatprep.subr.mxu0 0.0
    %2237 = vmatpush1.msra.mxu0 0.0
    %2238 = vmatprep.subr.mxu0 0.0
    %2239 = vmatpush1.msra.mxu0 0.0
    %2240 = vmatprep.subr.mxu0 0.0
    %2241 = vmatpush1.msra.mxu0 0.0
    %2242 = vmatprep.subr.mxu0 0.0
    %2243 = vmatpush1.msra.mxu0 0.0
    %2244 = vmatprep.subr.mxu0 0.0
    %2245 = vmatpush1.msra.mxu0 0.0
    %2246 = vmatprep.subr.mxu0 0.0
    %2247 = vmatpush1.msra.mxu0 0.0
    %2248 = vmatprep.subr.mxu0 0.0
    %2249 = vmatpush1.msra.mxu0 %v637
    %2250 = vmatprep.subr.mxu0 0.0
    %2251 = vmatpush2.msra.mxu0 0.0
    %2252 = vmatprep.subr.mxu0 0.0
    %2253 = vmatpush2.msra.mxu0 0.0
    %2254 = vmatprep.subr.mxu0 0.0
    %2255 = vmatpush2.msra.mxu0 0.0
    %2256 = vmatprep.subr.mxu0 0.0
    %2257 = vmatpush2.msra.mxu0 0.0
    %2258 = vmatprep.subr.mxu0 0.0
    %2259 = vmatpush2.msra.mxu0 0.0
    %2260 = vmatprep.subr.mxu0 0.0
    %2261 = vmatpush2.msra.mxu0 0.0
    %2262 = vmatprep.subr.mxu0 0.0
    %2263 = vmatpush2.msra.mxu0 0.0
    %2264 = vmatprep.subr.mxu0 0.0
    %2265 = vmatpush2.msra.mxu0 0.0
    %2266 = vmatprep.subr.mxu0 0.0
    %2267 = vmatpush2.msra.mxu0 0.0
    %2268 = vmatprep.subr.mxu0 0.0
    %2269 = vmatpush2.msra.mxu0 0.0
    %2270 = vmatprep.subr.mxu0 0.0
    %2271 = vmatpush2.msra.mxu0 0.0
    %2272 = vmatprep.subr.mxu0 0.0
    %2273 = vmatpush2.msra.mxu0 0.0
    %2274 = vmatprep.subr.mxu0 0.0
    %2275 = vmatpush2.msra.mxu0 0.0
    %2276 = vmatprep.subr.mxu0 0.0
    %2277 = vmatpush2.msra.mxu0 0.0
    %2278 = vmatprep.subr.mxu0 0.0
    %2279 = vmatpush2.msra.mxu0 0.0
    %2280 = vmatprep.subr.mxu0 0.0
    %2281 = vmatpush2.msra.mxu0 0.0
    %2282 = vmatprep.mubr.f32.mxu0 0.0
    %2283 = vmatmul.mubr.f32.gmra.mxu0 %v2213
    %v2284 = vpop.f32.mrf.mxu0
    %v2285 = vadd.f32 0.0, %v2284
    %v2286 = vpop.f32.mrf.mxu0
    %2287 = vmatprep.mubr.f32.mxu0 0.0
    %2288 = vmatmul.mubr.f32.gmra.mxu0 %v2216
    %v2289 = vpop.f32.mrf.mxu0
    %v2290 = vadd.f32 0.0, %v2289
    %v2291 = vpop.f32.mrf.mxu0
    %2292 = vdwg.mxu0
    %v2293 = vadd.f32 %v1876, %v2285
    %v2294 = vadd.f32 %v1877, %v2290
    %v2295 = vadd.f32 %v315, %v2293
    %v2296 = vadd.f32 %v316, %v2294
    %v2297 = vld [vmem:[#allocation12] sm:$0x1]
    %v2298 = vmul.f32 %v2295, %v2295
    %v2299 = vmul.f32 %v2296, %v2296
    %v2300 = vsel %vm324, %v2298, 0.0
    %2301 = vadd.xlane.f32.xlu0 %v2300
    %v2302 = vpop.xlane.xlu0 %2301
    %v2303 = vsel %vm324, %v2299, 0.0
    %2304 = vadd.xlane.f32.xlu0 %v2303
    %v2305 = vpop.xlane.xlu0 %2304
    %v2306 = vmul.f32 %v2302, %v331
    %v2307 = vmul.f32 %v2305, %v331
    %v2308 = vadd.f32 %v2306, 1e-06
    %v2309 = vadd.f32 %v2307, 1e-06
    %v2310 = vrsqrt.pop %v2308
    %v2311 = vrsqrt.pop %v2309
    %v2312 = vmul.f32 %v2295, %v2310
    %v2313 = vmul.f32 %v2296, %v2311
    %v2315 = vlaneseq
    %v2316 = vshrl.u32 %v2315, 7
    %v2317 = vsub.s32 0, %v2316
    %v2318 = vrot.slane %v2297, %v2317
    %v2320 = vmul.f32 %v2312, %v2318
    %v2321 = vmul.f32 %v2313, %v2318
    %v2322 = vld [vmem:[#allocation13] sm:$0xff]
    %v2323 = vld [vmem:[#allocation13 + $0x8] sm:$0xff]
    %v2324 = vld [vmem:[#allocation13 + $0x10] sm:$0xff]
    %v2325 = vld [vmem:[#allocation13 + $0x18] sm:$0xff]
    %v2327 = vsel %vm324, %v2320, 0
    %v2330 = vsel %vm324, %v2321, 0
    %2332 = vmatprep.subr.mxu0 0.0
    %2333 = vmatpush1.msra.mxu0 0.0
    %2334 = vmatprep.subr.mxu0 0.0
    %2335 = vmatpush1.msra.mxu0 0.0
    %2336 = vmatprep.subr.mxu0 0.0
    %2337 = vmatpush1.msra.mxu0 0.0
    %2338 = vmatprep.subr.mxu0 0.0
    %2339 = vmatpush1.msra.mxu0 0.0
    %2340 = vmatprep.subr.mxu0 0.0
    %2341 = vmatpush1.msra.mxu0 0.0
    %2342 = vmatprep.subr.mxu0 0.0
    %2343 = vmatpush1.msra.mxu0 0.0
    %2344 = vmatprep.subr.mxu0 0.0
    %2345 = vmatpush1.msra.mxu0 0.0
    %2346 = vmatprep.subr.mxu0 0.0
    %2347 = vmatpush1.msra.mxu0 0.0
    %2348 = vmatprep.subr.mxu0 0.0
    %2349 = vmatpush1.msra.mxu0 0.0
    %2350 = vmatprep.subr.mxu0 0.0
    %2351 = vmatpush1.msra.mxu0 0.0
    %2352 = vmatprep.subr.mxu0 0.0
    %2353 = vmatpush1.msra.mxu0 0.0
    %2354 = vmatprep.subr.mxu0 0.0
    %2355 = vmatpush1.msra.mxu0 0.0
    %2356 = vmatprep.subr.mxu0 0.0
    %2357 = vmatpush1.msra.mxu0 %v2325
    %2358 = vmatprep.subr.mxu0 0.0
    %2359 = vmatpush1.msra.mxu0 %v2324
    %2360 = vmatprep.subr.mxu0 0.0
    %2361 = vmatpush1.msra.mxu0 %v2323
    %2362 = vmatprep.subr.mxu0 0.0
    %2363 = vmatpush1.msra.mxu0 %v2322
    %2364 = vmatprep.subr.mxu0 0.0
    %2365 = vmatpush2.msra.mxu0 0.0
    %2366 = vmatprep.subr.mxu0 0.0
    %2367 = vmatpush2.msra.mxu0 0.0
    %2368 = vmatprep.subr.mxu0 0.0
    %2369 = vmatpush2.msra.mxu0 0.0
    %2370 = vmatprep.subr.mxu0 0.0
    %2371 = vmatpush2.msra.mxu0 0.0
    %2372 = vmatprep.subr.mxu0 0.0
    %2373 = vmatpush2.msra.mxu0 0.0
    %2374 = vmatprep.subr.mxu0 0.0
    %2375 = vmatpush2.msra.mxu0 0.0
    %2376 = vmatprep.subr.mxu0 0.0
    %2377 = vmatpush2.msra.mxu0 0.0
    %2378 = vmatprep.subr.mxu0 0.0
    %2379 = vmatpush2.msra.mxu0 0.0
    %2380 = vmatprep.subr.mxu0 0.0
    %2381 = vmatpush2.msra.mxu0 0.0
    %2382 = vmatprep.subr.mxu0 0.0
    %2383 = vmatpush2.msra.mxu0 0.0
    %2384 = vmatprep.subr.mxu0 0.0
    %2385 = vmatpush2.msra.mxu0 0.0
    %2386 = vmatprep.subr.mxu0 0.0
    %2387 = vmatpush2.msra.mxu0 0.0
    %2388 = vmatprep.subr.mxu0 0.0
    %2389 = vmatpush2.msra.mxu0 0.0
    %2390 = vmatprep.subr.mxu0 0.0
    %2391 = vmatpush2.msra.mxu0 0.0
    %2392 = vmatprep.subr.mxu0 0.0
    %2393 = vmatpush2.msra.mxu0 0.0
    %2394 = vmatprep.subr.mxu0 0.0
    %2395 = vmatpush2.msra.mxu0 0.0
    %2396 = vmatprep.mubr.f32.mxu0 0.0
    %2397 = vmatmul.mubr.f32.gmra.mxu0 %v2327
    %v2398 = vpop.f32.mrf.mxu0
    %v2399 = vadd.f32 0.0, %v2398
    %v2400 = vpop.f32.mrf.mxu0
    %2401 = vmatprep.mubr.f32.mxu0 0.0
    %2402 = vmatmul.mubr.f32.gmra.mxu0 %v2330
    %v2403 = vpop.f32.mrf.mxu0
    %v2404 = vadd.f32 0.0, %v2403
    %v2405 = vpop.f32.mrf.mxu0
    %2406 = vdwg.mxu0
    %v2407 = vld [vmem:[#allocation15] sm:$0xff]
    %v2408 = vld [vmem:[#allocation15 + $0x8] sm:$0xff]
    %v2409 = vld [vmem:[#allocation15 + $0x10] sm:$0xff]
    %v2410 = vld [vmem:[#allocation15 + $0x18] sm:$0xff]
    %2411 = vmatprep.subr.mxu0 0.0
    %2412 = vmatpush1.msra.mxu0 0.0
    %2413 = vmatprep.subr.mxu0 0.0
    %2414 = vmatpush1.msra.mxu0 0.0
    %2415 = vmatprep.subr.mxu0 0.0
    %2416 = vmatpush1.msra.mxu0 0.0
    %2417 = vmatprep.subr.mxu0 0.0
    %2418 = vmatpush1.msra.mxu0 0.0
    %2419 = vmatprep.subr.mxu0 0.0
    %2420 = vmatpush1.msra.mxu0 0.0
    %2421 = vmatprep.subr.mxu0 0.0
    %2422 = vmatpush1.msra.mxu0 0.0
    %2423 = vmatprep.subr.mxu0 0.0
    %2424 = vmatpush1.msra.mxu0 0.0
    %2425 = vmatprep.subr.mxu0 0.0
    %2426 = vmatpush1.msra.mxu0 0.0
    %2427 = vmatprep.subr.mxu0 0.0
    %2428 = vmatpush1.msra.mxu0 0.0
    %2429 = vmatprep.subr.mxu0 0.0
    %2430 = vmatpush1.msra.mxu0 0.0
    %2431 = vmatprep.subr.mxu0 0.0
    %2432 = vmatpush1.msra.mxu0 0.0
    %2433 = vmatprep.subr.mxu0 0.0
    %2434 = vmatpush1.msra.mxu0 0.0
    %2435 = vmatprep.subr.mxu0 0.0
    %2436 = vmatpush1.msra.mxu0 %v2410
    %2437 = vmatprep.subr.mxu0 0.0
    %2438 = vmatpush1.msra.mxu0 %v2409
    %2439 = vmatprep.subr.mxu0 0.0
    %2440 = vmatpush1.msra.mxu0 %v2408
    %2441 = vmatprep.subr.mxu0 0.0
    %2442 = vmatpush1.msra.mxu0 %v2407
    %2443 = vmatprep.subr.mxu0 0.0
    %2444 = vmatpush2.msra.mxu0 0.0
    %2445 = vmatprep.subr.mxu0 0.0
    %2446 = vmatpush2.msra.mxu0 0.0
    %2447 = vmatprep.subr.mxu0 0.0
    %2448 = vmatpush2.msra.mxu0 0.0
    %2449 = vmatprep.subr.mxu0 0.0
    %2450 = vmatpush2.msra.mxu0 0.0
    %2451 = vmatprep.subr.mxu0 0.0
    %2452 = vmatpush2.msra.mxu0 0.0
    %2453 = vmatprep.subr.mxu0 0.0
    %2454 = vmatpush2.msra.mxu0 0.0
    %2455 = vmatprep.subr.mxu0 0.0
    %2456 = vmatpush2.msra.mxu0 0.0
    %2457 = vmatprep.subr.mxu0 0.0
    %2458 = vmatpush2.msra.mxu0 0.0
    %2459 = vmatprep.subr.mxu0 0.0
    %2460 = vmatpush2.msra.mxu0 0.0
    %2461 = vmatprep.subr.mxu0 0.0
    %2462 = vmatpush2.msra.mxu0 0.0
    %2463 = vmatprep.subr.mxu0 0.0
    %2464 = vmatpush2.msra.mxu0 0.0
    %2465 = vmatprep.subr.mxu0 0.0
    %2466 = vmatpush2.msra.mxu0 0.0
    %2467 = vmatprep.subr.mxu0 0.0
    %2468 = vmatpush2.msra.mxu0 0.0
    %2469 = vmatprep.subr.mxu0 0.0
    %2470 = vmatpush2.msra.mxu0 0.0
    %2471 = vmatprep.subr.mxu0 0.0
    %2472 = vmatpush2.msra.mxu0 0.0
    %2473 = vmatprep.subr.mxu0 0.0
    %2474 = vmatpush2.msra.mxu0 0.0
    %2475 = vmatprep.mubr.f32.mxu0 0.0
    %2476 = vmatmul.mubr.f32.gmra.mxu0 %v2327
    %v2477 = vpop.f32.mrf.mxu0
    %v2478 = vadd.f32 0.0, %v2477
    %v2479 = vpop.f32.mrf.mxu0
    %2480 = vmatprep.mubr.f32.mxu0 0.0
    %2481 = vmatmul.mubr.f32.gmra.mxu0 %v2330
    %v2482 = vpop.f32.mrf.mxu0
    %v2483 = vadd.f32 0.0, %v2482
    %v2484 = vpop.f32.mrf.mxu0
    %2485 = vdwg.mxu0
    %v2486 = vxor.u32 %v2399, 2147483648
    %v2487 = vxor.u32 %v2404, 2147483648
    %v2488 = vmul.f32 %v2486, 1.442695
    %v2489 = vpow.pop %v2488
    %v2490 = vmul.f32 %v2487, 1.442695
    %v2491 = vpow.pop %v2490
    %v2492 = vadd.f32 %v2489, 1.0
    %v2493 = vadd.f32 %v2491, 1.0
    %v2494 = vrcp.pop %v2492
    %v2495 = vmul.f32 1.0, %v2494
    %v2496 = vrcp.pop %v2493
    %v2497 = vmul.f32 1.0, %v2496
    %v2498 = vmul.f32 %v2399, %v2495
    %v2499 = vmul.f32 %v2404, %v2497
    %v2500 = vmul.f32 %v2498, %v2478
    %v2501 = vmul.f32 %v2499, %v2483
    %v2502 = vld [vmem:[%s14] sm:$0xff]
    %v2503 = vld [vmem:[%s14 + $0x8] sm:$0xff]
    %v2504 = vld [vmem:[%s14 + $0x10] sm:$0xff]
    %v2505 = vld [vmem:[%s14 + $0x18] sm:$0xff]
    %v2506 = vld [vmem:[%s14 + $0x20] sm:$0xff]
    %v2507 = vld [vmem:[%s14 + $0x28] sm:$0xff]
    %v2508 = vld [vmem:[%s14 + $0x30] sm:$0xff]
    %v2509 = vld [vmem:[%s14 + $0x38] sm:$0xff]
    %vm2510 = vcmask 523264
    %v2512 = vsel %vm2510, %v2500, 0
    %v2515 = vsel %vm2510, %v2501, 0
    %2517 = vmatprep.subr.mxu0 0.0
    %2518 = vmatpush1.msra.mxu0 0.0
    %2519 = vmatprep.subr.mxu0 0.0
    %2520 = vmatpush1.msra.mxu0 0.0
    %2521 = vmatprep.subr.mxu0 0.0
    %2522 = vmatpush1.msra.mxu0 0.0
    %2523 = vmatprep.subr.mxu0 0.0
    %2524 = vmatpush1.msra.mxu0 0.0
    %2525 = vmatprep.subr.mxu0 0.0
    %2526 = vmatpush1.msra.mxu0 0.0
    %2527 = vmatprep.subr.mxu0 0.0
    %2528 = vmatpush1.msra.mxu0 0.0
    %2529 = vmatprep.subr.mxu0 0.0
    %2530 = vmatpush1.msra.mxu0 0.0
    %2531 = vmatprep.subr.mxu0 0.0
    %2532 = vmatpush1.msra.mxu0 0.0
    %2533 = vmatprep.subr.mxu0 0.0
    %2534 = vmatpush1.msra.mxu0 %v2509
    %2535 = vmatprep.subr.mxu0 0.0
    %2536 = vmatpush1.msra.mxu0 %v2508
    %2537 = vmatprep.subr.mxu0 0.0
    %2538 = vmatpush1.msra.mxu0 %v2507
    %2539 = vmatprep.subr.mxu0 0.0
    %2540 = vmatpush1.msra.mxu0 %v2506
    %2541 = vmatprep.subr.mxu0 0.0
    %2542 = vmatpush1.msra.mxu0 %v2505
    %2543 = vmatprep.subr.mxu0 0.0
    %2544 = vmatpush1.msra.mxu0 %v2504
    %2545 = vmatprep.subr.mxu0 0.0
    %2546 = vmatpush1.msra.mxu0 %v2503
    %2547 = vmatprep.subr.mxu0 0.0
    %2548 = vmatpush1.msra.mxu0 %v2502
    %2549 = vmatprep.subr.mxu0 0.0
    %2550 = vmatpush2.msra.mxu0 0.0
    %2551 = vmatprep.subr.mxu0 0.0
    %2552 = vmatpush2.msra.mxu0 0.0
    %2553 = vmatprep.subr.mxu0 0.0
    %2554 = vmatpush2.msra.mxu0 0.0
    %2555 = vmatprep.subr.mxu0 0.0
    %2556 = vmatpush2.msra.mxu0 0.0
    %2557 = vmatprep.subr.mxu0 0.0
    %2558 = vmatpush2.msra.mxu0 0.0
    %2559 = vmatprep.subr.mxu0 0.0
    %2560 = vmatpush2.msra.mxu0 0.0
    %2561 = vmatprep.subr.mxu0 0.0
    %2562 = vmatpush2.msra.mxu0 0.0
    %2563 = vmatprep.subr.mxu0 0.0
    %2564 = vmatpush2.msra.mxu0 0.0
    %2565 = vmatprep.subr.mxu0 0.0
    %2566 = vmatpush2.msra.mxu0 0.0
    %2567 = vmatprep.subr.mxu0 0.0
    %2568 = vmatpush2.msra.mxu0 0.0
    %2569 = vmatprep.subr.mxu0 0.0
    %2570 = vmatpush2.msra.mxu0 0.0
    %2571 = vmatprep.subr.mxu0 0.0
    %2572 = vmatpush2.msra.mxu0 0.0
    %2573 = vmatprep.subr.mxu0 0.0
    %2574 = vmatpush2.msra.mxu0 0.0
    %2575 = vmatprep.subr.mxu0 0.0
    %2576 = vmatpush2.msra.mxu0 0.0
    %2577 = vmatprep.subr.mxu0 0.0
    %2578 = vmatpush2.msra.mxu0 0.0
    %2579 = vmatprep.subr.mxu0 0.0
    %2580 = vmatpush2.msra.mxu0 0.0
    %2581 = vmatprep.mubr.f32.mxu0 0.0
    %2582 = vmatmul.mubr.f32.gmra.mxu0 %v2512
    %v2583 = vpop.f32.mrf.mxu0
    %v2584 = vadd.f32 0.0, %v2583
    %v2585 = vpop.f32.mrf.mxu0
    %2586 = vmatprep.mubr.f32.mxu0 0.0
    %2587 = vmatmul.mubr.f32.gmra.mxu0 %v2515
    %v2588 = vpop.f32.mrf.mxu0
    %v2589 = vadd.f32 0.0, %v2588
    %v2590 = vpop.f32.mrf.mxu0
    %2591 = vdwg.mxu0
    %v2592 = vadd.f32 %v2295, %v2584
    %v2593 = vadd.f32 %v2296, %v2589
    %v2594 = vld [vmem:[#allocation16] sm:$0x1]
    %v2595 = vmul.f32 %v2592, %v2592
    %v2596 = vmul.f32 %v2593, %v2593
    %v2597 = vsel %vm324, %v2595, 0.0
    %2598 = vadd.xlane.f32.xlu0 %v2597
    %v2599 = vpop.xlane.xlu0 %2598
    %v2600 = vsel %vm324, %v2596, 0.0
    %2601 = vadd.xlane.f32.xlu0 %v2600
    %v2602 = vpop.xlane.xlu0 %2601
    %v2603 = vmul.f32 %v2599, %v331
    %v2604 = vmul.f32 %v2602, %v331
    %v2605 = vadd.f32 %v2603, 1e-06
    %v2606 = vadd.f32 %v2604, 1e-06
    %v2607 = vrsqrt.pop %v2605
    %v2608 = vrsqrt.pop %v2606
    %v2609 = vmul.f32 %v2592, %v2607
    %v2610 = vmul.f32 %v2593, %v2608
    %v2612 = vlaneseq
    %v2613 = vshrl.u32 %v2612, 7
    %v2614 = vsub.s32 0, %v2613
    %v2615 = vrot.slane %v2594, %v2614
    %v2617 = vmul.f32 %v2609, %v2615
    %v2618 = vmul.f32 %v2610, %v2615
    %v2619 = vld [vmem:[#allocation18] sm:$0xff]
    %v2620 = vld [vmem:[#allocation18 + $0x8] sm:$0xff]
    %v2621 = vld [vmem:[#allocation18 + $0x10] sm:$0xff]
    %v2622 = vld [vmem:[#allocation18 + $0x18] sm:$0xff]
    %v2624 = vsel %vm324, %v2617, 0
    %v2627 = vsel %vm324, %v2618, 0
    %2629 = vmatprep.subr.mxu0 0.0
    %2630 = vmatpush1.msra.mxu0 0.0
    %2631 = vmatprep.subr.mxu0 0.0
    %2632 = vmatpush1.msra.mxu0 0.0
    %2633 = vmatprep.subr.mxu0 0.0
    %2634 = vmatpush1.msra.mxu0 0.0
    %2635 = vmatprep.subr.mxu0 0.0
    %2636 = vmatpush1.msra.mxu0 0.0
    %2637 = vmatprep.subr.mxu0 0.0
    %2638 = vmatpush1.msra.mxu0 0.0
    %2639 = vmatprep.subr.mxu0 0.0
    %2640 = vmatpush1.msra.mxu0 0.0
    %2641 = vmatprep.subr.mxu0 0.0
    %2642 = vmatpush1.msra.mxu0 0.0
    %2643 = vmatprep.subr.mxu0 0.0
    %2644 = vmatpush1.msra.mxu0 0.0
    %2645 = vmatprep.subr.mxu0 0.0
    %2646 = vmatpush1.msra.mxu0 0.0
    %2647 = vmatprep.subr.mxu0 0.0
    %2648 = vmatpush1.msra.mxu0 0.0
    %2649 = vmatprep.subr.mxu0 0.0
    %2650 = vmatpush1.msra.mxu0 0.0
    %2651 = vmatprep.subr.mxu0 0.0
    %2652 = vmatpush1.msra.mxu0 0.0
    %2653 = vmatprep.subr.mxu0 0.0
    %2654 = vmatpush1.msra.mxu0 %v2622
    %2655 = vmatprep.subr.mxu0 0.0
    %2656 = vmatpush1.msra.mxu0 %v2621
    %2657 = vmatprep.subr.mxu0 0.0
    %2658 = vmatpush1.msra.mxu0 %v2620
    %2659 = vmatprep.subr.mxu0 0.0
    %2660 = vmatpush1.msra.mxu0 %v2619
    %2661 = vmatprep.subr.mxu0 0.0
    %2662 = vmatpush2.msra.mxu0 0.0
    %2663 = vmatprep.subr.mxu0 0.0
    %2664 = vmatpush2.msra.mxu0 0.0
    %2665 = vmatprep.subr.mxu0 0.0
    %2666 = vmatpush2.msra.mxu0 0.0
    %2667 = vmatprep.subr.mxu0 0.0
    %2668 = vmatpush2.msra.mxu0 0.0
    %2669 = vmatprep.subr.mxu0 0.0
    %2670 = vmatpush2.msra.mxu0 0.0
    %2671 = vmatprep.subr.mxu0 0.0
    %2672 = vmatpush2.msra.mxu0 0.0
    %2673 = vmatprep.subr.mxu0 0.0
    %2674 = vmatpush2.msra.mxu0 0.0
    %2675 = vmatprep.subr.mxu0 0.0
    %2676 = vmatpush2.msra.mxu0 0.0
    %2677 = vmatprep.subr.mxu0 0.0
    %2678 = vmatpush2.msra.mxu0 0.0
    %2679 = vmatprep.subr.mxu0 0.0
    %2680 = vmatpush2.msra.mxu0 0.0
    %2681 = vmatprep.subr.mxu0 0.0
    %2682 = vmatpush2.msra.mxu0 0.0
    %2683 = vmatprep.subr.mxu0 0.0
    %2684 = vmatpush2.msra.mxu0 0.0
    %2685 = vmatprep.subr.mxu0 0.0
    %2686 = vmatpush2.msra.mxu0 0.0
    %2687 = vmatprep.subr.mxu0 0.0
    %2688 = vmatpush2.msra.mxu0 0.0
    %2689 = vmatprep.subr.mxu0 0.0
    %2690 = vmatpush2.msra.mxu0 0.0
    %2691 = vmatprep.subr.mxu0 0.0
    %2692 = vmatpush2.msra.mxu0 0.0
    %2693 = vmatprep.mubr.f32.mxu0 0.0
    %2694 = vmatmul.mubr.f32.gmra.mxu0 %v2624
    %v2695 = vpop.f32.mrf.mxu0
    %v2696 = vadd.f32 0.0, %v2695
    %v2697 = vpop.f32.mrf.mxu0
    %2698 = vmatprep.mubr.f32.mxu0 0.0
    %2699 = vmatmul.mubr.f32.gmra.mxu0 %v2627
    %v2700 = vpop.f32.mrf.mxu0
    %v2701 = vadd.f32 0.0, %v2700
    %v2702 = vpop.f32.mrf.mxu0
    %2703 = vdwg.mxu0
    %v2704 = vsel %vm2510, %v2696, -inf
    %2705 = vmax.xlane.f32.xlu0 %v2704
    %v2706 = vpop.xlane.xlu0 %2705
    %v2707 = vsel %vm2510, %v2701, -inf
    %2708 = vmax.xlane.f32.xlu0 %v2707
    %v2709 = vpop.xlane.xlu0 %2708
    %v2710 = vsub.f32 %v2696, %v2706
    %v2711 = vsub.f32 %v2701, %v2709
    %v2712 = vmul.f32 %v2710, 1.442695
    %v2713 = vpow.pop %v2712
    %v2714 = vmul.f32 %v2711, 1.442695
    %v2715 = vpow.pop %v2714
    %v2716 = vsel %vm2510, %v2713, 0.0
    %2717 = vadd.xlane.f32.xlu0 %v2716
    %v2718 = vpop.xlane.xlu0 %2717
    %v2719 = vsel %vm2510, %v2715, 0.0
    %2720 = vadd.xlane.f32.xlu0 %v2719
    %v2721 = vpop.xlane.xlu0 %2720
    %v2722 = vlog2.pop %v2718
    %v2723 = vmul.f32 %v2722, 0.6931472
    %v2724 = vlog2.pop %v2721
    %v2725 = vmul.f32 %v2724, 0.6931472
    %v2726 = vadd.f32 %v2706, %v2723
    %v2727 = vadd.f32 %v2709, %v2725
    %v2728 = vlaneseq
    %v2729 = vshrl.u32 %v2728, 7
    %v2730 = vsub.s32 0, %v2729
    %v2731 = vrot.slane %v320, %v2730
    %2733 = vbcast.lane.b32.xlu0 %v2731, 256
    %v2734 = vpop.permute.xlu0 %2733
    %v2735 = vlaneseq
    %v2736 = vshrl.u32 %v2735, 7
    %v2737 = vsub.s32 1, %v2736
    %v2738 = vrot.slane %v320, %v2737
    %2740 = vbcast.lane.b32.xlu0 %v2738, 256
    %v2741 = vpop.permute.xlu0 %2740
    %vm2742 = vcmp.eq.s32.totalorder %v318, %v2734
    %vm2743 = vcmp.eq.s32.totalorder %v318, %v2741
    %v2744 = vsel %vm2742, 1, 0
    %v2745 = vsel %vm2743, 1, 0
    %v2746 = vcvt.s32.f32 %v2744
    %v2747 = vcvt.s32.f32 %v2745
    %v2749 = vsel %vm2510, %v2696, 0
    %v2752 = vsel %vm2510, %v2746, 0
    %2754 = vmatprep.subr.mxu0 0.0
    %2755 = vmatpush1.xpose.msra.mxu0 0.0
    %2756 = vmatprep.subr.mxu0 0.0
    %2757 = vmatpush1.xpose.msra.mxu0 0.0
    %2758 = vmatprep.subr.mxu0 0.0
    %2759 = vmatpush1.xpose.msra.mxu0 0.0
    %2760 = vmatprep.subr.mxu0 0.0
    %2761 = vmatpush1.xpose.msra.mxu0 0.0
    %2762 = vmatprep.subr.mxu0 0.0
    %2763 = vmatpush1.xpose.msra.mxu0 0.0
    %2764 = vmatprep.subr.mxu0 0.0
    %2765 = vmatpush1.xpose.msra.mxu0 0.0
    %2766 = vmatprep.subr.mxu0 0.0
    %2767 = vmatpush1.xpose.msra.mxu0 0.0
    %2768 = vmatprep.subr.mxu0 0.0
    %2769 = vmatpush1.xpose.msra.mxu0 0.0
    %2770 = vmatprep.subr.mxu0 0.0
    %2771 = vmatpush1.xpose.msra.mxu0 0.0
    %2772 = vmatprep.subr.mxu0 0.0
    %2773 = vmatpush1.xpose.msra.mxu0 0.0
    %2774 = vmatprep.subr.mxu0 0.0
    %2775 = vmatpush1.xpose.msra.mxu0 0.0
    %2776 = vmatprep.subr.mxu0 0.0
    %2777 = vmatpush1.xpose.msra.mxu0 0.0
    %2778 = vmatprep.subr.mxu0 0.0
    %2779 = vmatpush1.xpose.msra.mxu0 0.0
    %2780 = vmatprep.subr.mxu0 0.0
    %2781 = vmatpush1.xpose.msra.mxu0 0.0
    %2782 = vmatprep.subr.mxu0 0.0
    %2783 = vmatpush1.xpose.msra.mxu0 0.0
    %2784 = vmatprep.subr.mxu0 0.0
    %2785 = vmatpush1.xpose.msra.mxu0 %v2752
    %2786 = vmatprep.subr.mxu0 0.0
    %2787 = vmatpush2.xpose.msra.mxu0 0.0
    %2788 = vmatprep.subr.mxu0 0.0
    %2789 = vmatpush2.xpose.msra.mxu0 0.0
    %2790 = vmatprep.subr.mxu0 0.0
    %2791 = vmatpush2.xpose.msra.mxu0 0.0
    %2792 = vmatprep.subr.mxu0 0.0
    %2793 = vmatpush2.xpose.msra.mxu0 0.0
    %2794 = vmatprep.subr.mxu0 0.0
    %2795 = vmatpush2.xpose.msra.mxu0 0.0
    %2796 = vmatprep.subr.mxu0 0.0
    %2797 = vmatpush2.xpose.msra.mxu0 0.0
    %2798 = vmatprep.subr.mxu0 0.0
    %2799 = vmatpush2.xpose.msra.mxu0 0.0
    %2800 = vmatprep.subr.mxu0 0.0
    %2801 = vmatpush2.xpose.msra.mxu0 0.0
    %2802 = vmatprep.subr.mxu0 0.0
    %2803 = vmatpush2.xpose.msra.mxu0 0.0
    %2804 = vmatprep.subr.mxu0 0.0
    %2805 = vmatpush2.xpose.msra.mxu0 0.0
    %2806 = vmatprep.subr.mxu0 0.0
    %2807 = vmatpush2.xpose.msra.mxu0 0.0
    %2808 = vmatprep.subr.mxu0 0.0
    %2809 = vmatpush2.xpose.msra.mxu0 0.0
    %2810 = vmatprep.subr.mxu0 0.0
    %2811 = vmatpush2.xpose.msra.mxu0 0.0
    %2812 = vmatprep.subr.mxu0 0.0
    %2813 = vmatpush2.xpose.msra.mxu0 0.0
    %2814 = vmatprep.subr.mxu0 0.0
    %2815 = vmatpush2.xpose.msra.mxu0 0.0
    %2816 = vmatprep.subr.mxu0 0.0
    %2817 = vmatpush2.xpose.msra.mxu0 0.0
    %2818 = vmatprep.mubr.f32.mxu0 0.0
    %2819 = vmatmul.mubr.f32.gmra.mxu0 %v2749
    %v2820 = vpop.f32.mrf.mxu0
    %v2821 = vadd.f32 0.0, %v2820
    %v2822 = vpop.f32.mrf.mxu0
    %2823 = vdwg.mxu0
    %v2825 = vsel %vm2510, %v2701, 0
    %v2828 = vsel %vm2510, %v2747, 0
    %2830 = vmatprep.subr.mxu0 0.0
    %2831 = vmatpush1.xpose.msra.mxu0 0.0
    %2832 = vmatprep.subr.mxu0 0.0
    %2833 = vmatpush1.xpose.msra.mxu0 0.0
    %2834 = vmatprep.subr.mxu0 0.0
    %2835 = vmatpush1.xpose.msra.mxu0 0.0
    %2836 = vmatprep.subr.mxu0 0.0
    %2837 = vmatpush1.xpose.msra.mxu0 0.0
    %2838 = vmatprep.subr.mxu0 0.0
    %2839 = vmatpush1.xpose.msra.mxu0 0.0
    %2840 = vmatprep.subr.mxu0 0.0
    %2841 = vmatpush1.xpose.msra.mxu0 0.0
    %2842 = vmatprep.subr.mxu0 0.0
    %2843 = vmatpush1.xpose.msra.mxu0 0.0
    %2844 = vmatprep.subr.mxu0 0.0
    %2845 = vmatpush1.xpose.msra.mxu0 0.0
    %2846 = vmatprep.subr.mxu0 0.0
    %2847 = vmatpush1.xpose.msra.mxu0 0.0
    %2848 = vmatprep.subr.mxu0 0.0
    %2849 = vmatpush1.xpose.msra.mxu0 0.0
    %2850 = vmatprep.subr.mxu0 0.0
    %2851 = vmatpush1.xpose.msra.mxu0 0.0
    %2852 = vmatprep.subr.mxu0 0.0
    %2853 = vmatpush1.xpose.msra.mxu0 0.0
    %2854 = vmatprep.subr.mxu0 0.0
    %2855 = vmatpush1.xpose.msra.mxu0 0.0
    %2856 = vmatprep.subr.mxu0 0.0
    %2857 = vmatpush1.xpose.msra.mxu0 0.0
    %2858 = vmatprep.subr.mxu0 0.0
    %2859 = vmatpush1.xpose.msra.mxu0 0.0
    %2860 = vmatprep.subr.mxu0 0.0
    %2861 = vmatpush1.xpose.msra.mxu0 %v2828
    %2862 = vmatprep.subr.mxu0 0.0
    %2863 = vmatpush2.xpose.msra.mxu0 0.0
    %2864 = vmatprep.subr.mxu0 0.0
    %2865 = vmatpush2.xpose.msra.mxu0 0.0
    %2866 = vmatprep.subr.mxu0 0.0
    %2867 = vmatpush2.xpose.msra.mxu0 0.0
    %2868 = vmatprep.subr.mxu0 0.0
    %2869 = vmatpush2.xpose.msra.mxu0 0.0
    %2870 = vmatprep.subr.mxu0 0.0
    %2871 = vmatpush2.xpose.msra.mxu0 0.0
    %2872 = vmatprep.subr.mxu0 0.0
    %2873 = vmatpush2.xpose.msra.mxu0 0.0
    %2874 = vmatprep.subr.mxu0 0.0
    %2875 = vmatpush2.xpose.msra.mxu0 0.0
    %2876 = vmatprep.subr.mxu0 0.0
    %2877 = vmatpush2.xpose.msra.mxu0 0.0
    %2878 = vmatprep.subr.mxu0 0.0
    %2879 = vmatpush2.xpose.msra.mxu0 0.0
    %2880 = vmatprep.subr.mxu0 0.0
    %2881 = vmatpush2.xpose.msra.mxu0 0.0
    %2882 = vmatprep.subr.mxu0 0.0
    %2883 = vmatpush2.xpose.msra.mxu0 0.0
    %2884 = vmatprep.subr.mxu0 0.0
    %2885 = vmatpush2.xpose.msra.mxu0 0.0
    %2886 = vmatprep.subr.mxu0 0.0
    %2887 = vmatpush2.xpose.msra.mxu0 0.0
    %2888 = vmatprep.subr.mxu0 0.0
    %2889 = vmatpush2.xpose.msra.mxu0 0.0
    %2890 = vmatprep.subr.mxu0 0.0
    %2891 = vmatpush2.xpose.msra.mxu0 0.0
    %2892 = vmatprep.subr.mxu0 0.0
    %2893 = vmatpush2.xpose.msra.mxu0 0.0
    %2894 = vmatprep.mubr.f32.mxu0 0.0
    %2895 = vmatmul.mubr.f32.gmra.mxu0 %v2825
    %v2896 = vpop.f32.mrf.mxu0
    %v2897 = vadd.f32 0.0, %v2896
    %v2898 = vpop.f32.mrf.mxu0
    %2899 = vdwg.mxu0
    %vm2900 = vcmp.ne.s32.totalorder %v320, 4294967196
    %v2901 = vsel %vm2900, 1, 0
    %v2903 = vunpack.c.l.s4 1966171168
    %v2904 = vunpack.c.0.s8 %v2903
    %v2905 = vlaneseq
    %v2906 = vshrl.u32 %v2905, 7
    %v2907 = vsub.s32 %v2904, %v2906
    %v2908 = vrot.slane %v2901, %v2907
    %v2909 = vcombine.high %v2908, %v2908
    %v2911 = vunpack.c.l.s4 1966171168
    %v2912 = vunpack.c.0.s8 %v2911
    %v2913 = vlaneseq
    %v2914 = vshrl.u32 %v2913, 7
    %v2915 = vsub.s32 %v2912, %v2914
    %v2916 = vrot.slane %v2908, %v2915
    %v2918 = vunpack.c.l.s4 1966171168
    %v2919 = vunpack.c.0.s8 %v2918
    %v2920 = vlaneseq
    %v2921 = vshrl.u32 %v2920, 7
    %v2922 = vsub.s32 %v2919, %v2921
    %v2923 = vrot.slane %v2909, %v2922
    %vm2924 = vcmp.ne.s32.totalorder %v2916, 0
    %vm2925 = vcmp.ne.s32.totalorder %v2923, 0
    %v2926 = vadd.s32 %v278, 1
    %vm2927 = vcmp.eq.s32.totalorder %v318, %v2926
    %v2928 = vsel %vm2927, 1, 0
    %vm2929 = vcmp.eq.s32.totalorder %v2928, 1
    %v2930 = vsel %vm2924, 1, 0
    %v2931 = vsel %vm2925, 1, 0
    %v2932 = vlaneseq
    %v2933 = vshrl.u32 %v2932, 7
    %v2934 = vsub.s32 0, %v2933
    %v2935 = vrot.slane %v2930, %v2934
    %v2936 = vlaneseq
    %v2937 = vshrl.u32 %v2936, 7
    %v2938 = vsub.s32 0, %v2937
    %v2939 = vrot.slane %v2931, %v2938
    %vm2940 = vcmp.eq.s32.totalorder %v2935, 1
    %vm2941 = vcmp.eq.s32.totalorder %v2939, 1
    %vm2942 = vmand %vm2929, %vm2940
    %vm2943 = vmand %vm2929, %vm2941
    %v2944 = vsel %vm2942, 1, 0
    %v2945 = vsel %vm2943, 1, 0
    %v2946 = vcvt.s32.f32 %v2944
    %v2947 = vcvt.s32.f32 %v2945
    %v2948 = vsub.f32 %v2726, %v2821
    %v2949 = vsub.f32 %v2727, %v2897
    %v2950 = vmul.f32 %v2948, %v2946
    %v2951 = vmul.f32 %v2949, %v2947
    %v2952 = vsel %vm638, %v2950, 0.0
    %v2953 = vsel %vm638, %v2951, 0.0
    %v2954 = vadd.f32 %v2952, %v2953
    %2955 = vadd.xlane.f32.xlu0 %v2954
    %v2956 = vpop.xlane.xlu0 %2955
    %v2957 = vrot.slane %v2956, 4
    %v2958 = vadd.f32 %v2956, %v2957
    %v2959 = vrot.slane %v2958, 2
    %v2960 = vadd.f32 %v2958, %v2959
    %v2961 = vrot.slane %v2960, 1
    %v2962 = vadd.f32 %v2960, %v2961
    %s2963 = vtos %v2962
    %v2964 = vsel %vm638, %v2946, 0.0
    %v2965 = vsel %vm638, %v2947, 0.0
    %v2966 = vadd.f32 %v2964, %v2965
    %2967 = vadd.xlane.f32.xlu0 %v2966
    %v2968 = vpop.xlane.xlu0 %2967
    %v2969 = vrot.slane %v2968, 4
    %v2970 = vadd.f32 %v2968, %v2969
    %v2971 = vrot.slane %v2970, 2
    %v2972 = vadd.f32 %v2970, %v2971
    %v2973 = vrot.slane %v2972, 1
    %v2974 = vadd.f32 %v2972, %v2973
    %s2975 = vtos %v2974
    %vm2976 = vcmp.ge.f32.partialorder %v2696, %v2706
    %vm2977 = vcmp.ge.f32.partialorder %v2701, %v2709
    %v2978 = vsel %vm2976, %v318, 64
    %v2979 = vsel %vm2977, %v318, 64
    %v2980 = vsel %vm2510, %v2978, 2147483647
    %v2981 = vand.u32 %v2980, 65535
    %v2982 = vshra.s32 %v2980, 16
    %v2983 = vcvt.s32.f32 %v2981
    %v2984 = vcvt.s32.f32 %v2982
    %2985 = vmin.xlane.f32.xlu0 %v2984
    %v2986 = vpop.xlane.xlu0 %2985
    %vm2987 = vcmp.eq.f32.partialorder %v2984, %v2986
    %v2988 = vsel %vm2987, %v2983, inf
    %2989 = vmin.xlane.f32.xlu0 %v2988
    %v2990 = vpop.xlane.xlu0 %2989
    %v2991 = vcvt.f32.s32 %v2990
    %v2992 = vcvt.f32.s32 %v2986
    %v2993 = vshll.u32 %v2992, 16
    %v2994 = vadd.s32 %v2993, %v2991
    %v2995 = vsel %vm2510, %v2979, 2147483647
    %v2996 = vand.u32 %v2995, 65535
    %v2997 = vshra.s32 %v2995, 16
    %v2998 = vcvt.s32.f32 %v2996
    %v2999 = vcvt.s32.f32 %v2997
    %3000 = vmin.xlane.f32.xlu0 %v2999
    %v3001 = vpop.xlane.xlu0 %3000
    %vm3002 = vcmp.eq.f32.partialorder %v2999, %v3001
    %v3003 = vsel %vm3002, %v2998, inf
    %3004 = vmin.xlane.f32.xlu0 %v3003
    %v3005 = vpop.xlane.xlu0 %3004
    %v3006 = vcvt.f32.s32 %v3005
    %v3007 = vcvt.f32.s32 %v3001
    %v3008 = vshll.u32 %v3007, 16
    %v3009 = vadd.s32 %v3008, %v3006
    %vm3010 = vcmp.ge.s32.totalorder %v278, 1
    %v3011 = vsel %vm3010, 1, 0
    %vm3012 = vcmp.eq.s32.totalorder %v3011, 1
    %vm3013 = vmand %vm2942, %vm3012
    %vm3014 = vmand %vm2943, %vm3012
    %v3016 = vunpack.c.l.s4 1966171168
    %v3017 = vunpack.c.0.s8 %v3016
    %v3018 = vlaneseq
    %v3019 = vshrl.u32 %v3018, 7
    %v3020 = vsub.s32 %v3017, %v3019
    %v3021 = vrot.slane %v320, %v3020
    %v3022 = vcombine.high %v3021, %v3021
    %v3024 = vunpack.c.l.s4 1966171168
    %v3025 = vunpack.c.0.s8 %v3024
    %v3026 = vlaneseq
    %v3027 = vshrl.u32 %v3026, 7
    %v3028 = vsub.s32 %v3025, %v3027
    %v3029 = vrot.slane %v3021, %v3028
    %v3031 = vunpack.c.l.s4 1966171168
    %v3032 = vunpack.c.0.s8 %v3031
    %v3033 = vlaneseq
    %v3034 = vshrl.u32 %v3033, 7
    %v3035 = vsub.s32 %v3032, %v3034
    %v3036 = vrot.slane %v3022, %v3035
    %v3037 = vlaneseq
    %v3038 = vshrl.u32 %v3037, 7
    %v3039 = vsub.s32 0, %v3038
    %v3040 = vrot.slane %v3029, %v3039
    %v3041 = vlaneseq
    %v3042 = vshrl.u32 %v3041, 7
    %v3043 = vsub.s32 0, %v3042
    %v3044 = vrot.slane %v3036, %v3043
    %vm3045 = vcmp.eq.s32.totalorder %v2994, %v3040
    %vm3046 = vcmp.eq.s32.totalorder %v3009, %v3044
    %vm3047 = vmand %vm3045, %vm3013
    %vm3048 = vmand %vm3046, %vm3014
    %v3049 = vsel %vm3047, 1, 0
    %v3050 = vsel %vm3048, 1, 0
    %v3051 = vcvt.s32.f32 %v3049
    %v3052 = vcvt.s32.f32 %v3050
    %v3053 = vsel %vm638, %v3051, 0.0
    %v3054 = vsel %vm638, %v3052, 0.0
    %v3055 = vadd.f32 %v3053, %v3054
    %3056 = vadd.xlane.f32.xlu0 %v3055
    %v3057 = vpop.xlane.xlu0 %3056
    %v3058 = vrot.slane %v3057, 4
    %v3059 = vadd.f32 %v3057, %v3058
    %v3060 = vrot.slane %v3059, 2
    %v3061 = vadd.f32 %v3059, %v3060
    %v3062 = vrot.slane %v3061, 1
    %v3063 = vadd.f32 %v3061, %v3062
    %s3064 = vtos %v3063
    %v3065 = vsel %vm3013, 1, 0
    %v3066 = vsel %vm3014, 1, 0
    %v3067 = vcvt.s32.f32 %v3065
    %v3068 = vcvt.s32.f32 %v3066
    %v3069 = vsel %vm638, %v3067, 0.0
    %v3070 = vsel %vm638, %v3068, 0.0
    %v3071 = vadd.f32 %v3069, %v3070
    %3072 = vadd.xlane.f32.xlu0 %v3071
    %v3073 = vpop.xlane.xlu0 %3072
    %v3074 = vrot.slane %v3073, 4
    %v3075 = vadd.f32 %v3073, %v3074
    %v3076 = vrot.slane %v3075, 2
    %v3077 = vadd.f32 %v3075, %v3076
    %v3078 = vrot.slane %v3077, 1
    %v3079 = vadd.f32 %v3077, %v3078
    %s3080 = vtos %v3079
    %vm3081 = vcmp.eq.s32.totalorder %v318, 0
    %v3082 = vstv %s2963
    %v3083 = vsel %vm3081, %v3082, 0.0
    %vm3084 = vcmp.eq.s32.totalorder %v318, 1
    %v3085 = vstv %s2975
    %v3086 = vsel %vm3084, %v3085, 0.0
    %v3087 = vadd.f32 %v3083, %v3086
    %vm3088 = vcmp.eq.s32.totalorder %v318, 2
    %v3089 = vstv %s3064
    %v3090 = vsel %vm3088, %v3089, 0.0
    %v3091 = vadd.f32 %v3087, %v3090
    %vm3092 = vcmp.eq.s32.totalorder %v318, 3
    %v3093 = vstv %s3080
    %v3094 = vsel %vm3092, %v3093, 0.0
    %v3095 = vadd.f32 %v3091, %v3094
    %3096 = vst [vmem:[%s17] sm:$0x1] %v3095
    // Predicated region
    $region114: #{modaverse_forward.1} parent=1 // pred_check
      _
    $region115: #{modaverse_forward.1} parent=1 // pred_check_branch
      %3098 = sbr.rel (0) target = $region117
    $region116: #{modaverse_forward.1} parent=1 // pred_region
      _
    $region117: #{modaverse_forward.1} parent=1 // pred_fallthru
      _
    // Predicated region
    $region118: #{modaverse_forward.1} parent=1 // pred_check
      _
    $region119: #{modaverse_forward.1} parent=1 // pred_check_branch
      %3100 = sbr.rel (0) target = $region121
    $region120: #{modaverse_forward.1} parent=1 // pred_region
      _
    $region121: #{modaverse_forward.1} parent=1 // pred_fallthru
      _
    %3101 = vsyncpa [#allocation3], 1
    %3102 = vsyncpa [#allocation5], 1
    %3103 = vsyncpa [#allocation8], 1
    %3104 = vsyncpa [#allocation11], 1
    %3105 = vsyncpa [#allocation14], 1
    %3106 = vsyncpa [#allocation17], 1

</llo_original>
